<compile_context>
chip_gen: v7x
topology: tpu7x:2x2x1
jax: 0.10.0
libtpu: 0.0.40
codegen_flags: <defaults>
</compile_context>

<pallas_src>
import functools

import jax
import jax.numpy as jnp
from jax.experimental import pallas as pl
from jax.experimental.pallas import tpu as pltpu


def _cdiv(a, b):
    return -(-a // b)


def _conv_bn_relu_kernel(x_ref, w_ref, s_ref, b_ref, o_ref, lhs_ref, *,
                         KH, KW, TH, OW, Cin, stride, apply_relu):
    # x_ref:   (1, TH_in, Wp, Cin)  bf16 — padded input rows for this tile.
    # w_ref:   (KH*KW*Cin, tn)      bf16 — conv weight, taps stacked on the K axis.
    # s_ref:   (1, tn)              f32  — BN scale  (gamma / sqrt(var + eps)).
    # b_ref:   (1, tn)              f32  — BN bias   (beta - mean * scale).
    # o_ref:   (1, TH*OW, tn)       bf16 — lane-dense output tile.
    # lhs_ref: (TH*OW, KH*KW*Cin)   bf16 — VMEM scratch holding the unfolded windows.
    for kh in range(KH):                 # KH*KW small bf16 slice-copies assemble the
        for kw in range(KW):             # unfolded lhs once, then ONE MXU matmul.
            if stride == 1:
                xw = x_ref[0, pl.ds(kh, TH), pl.ds(kw, OW), :]
            else:
                # TODO(synk): stride>1 decimates a loaded window on the VPU; for
                # stride-2 stems pre-decimate the phases in the wrapper instead.
                xw = x_ref[0, pl.ds(kh, (TH - 1) * stride + 1),
                           pl.ds(kw, (OW - 1) * stride + 1), :]
                xw = xw[::stride, ::stride, :]
            tap = kh * KW + kw
            lhs_ref[:, tap * Cin:(tap + 1) * Cin] = xw.reshape(TH * OW, Cin)
    acc = jnp.dot(lhs_ref[...], w_ref[...], preferred_element_type=jnp.float32)
    y = acc * s_ref[...] + b_ref[...]    # f32 BN epilogue (scale kept out of bf16 w)
    if apply_relu:
        y = jnp.maximum(y, 0.0)
    o_ref[0] = y.astype(o_ref.dtype)


def basic_conv(x, weight, gamma, beta, running_mean, running_var, *,
               stride=1, padding=0, relu=True, eps=1e-5,
               tn=None, target_pixels=1024):
    """Forward pass of BasicConv.  x: (N, Cin, H, W) f32, weight: (Cout, Cin, KH, KW).

    Internally NHWC / bf16; returns NCHW f32 to match the PyTorch module.  When
    chaining BasicConv layers, keep activations NHWC bf16 between calls instead.
    """
    N, Cin, H, W = x.shape
    Cout, _, KH, KW = weight.shape
    OH = (H + 2 * padding - KH) // stride + 1
    OW = (W + 2 * padding - KW) // stride + 1
    K = KH * KW * Cin
    Wp = W + 2 * padding

    if tn is None:
        tn = 256 if Cout >= 256 else 128      # v6e/v7x MXU width; use tn=128 on v5e
    Coutp = _cdiv(Cout, tn) * tn

    # ---- BatchNorm (eval-mode running stats) as per-channel scale / bias.
    # TODO(synk): training-mode batch statistics are not reproduced here.
    scale = gamma / jnp.sqrt(running_var + eps)
    bias = beta - running_mean * scale
    scale_p = jnp.pad(scale, (0, Coutp - Cout)).reshape(1, Coutp).astype(jnp.float32)
    bias_p = jnp.pad(bias, (0, Coutp - Cout)).reshape(1, Coutp).astype(jnp.float32)

    # ---- weight: (Cout, Cin, KH, KW) -> (KH*KW*Cin, Coutp) bf16, taps on the K axis.
    w = weight.transpose(2, 3, 1, 0).reshape(K, Cout)
    w = jnp.pad(w, ((0, 0), (0, Coutp - Cout))).astype(jnp.bfloat16)

    # ---- row tiling: ~target_pixels output pixels per step, shrunk until the
    #      per-step VMEM footprint fits a conservative budget (safe under v5e's
    #      16 MiB default scoped VMEM; v6e has 32 MiB, v7x 32 MiB of 64 MiB).
    def vmem_bytes(th):
        th_in = (th - 1) * stride + KH
        pix = th * OW
        cin_pad = _cdiv(Cin, 128) * 128
        x_tile = th_in * _cdiv(Wp, 8) * 8 * cin_pad * 2          # bf16, lane-padded
        lhs = pix * _cdiv(K, 128) * 128 * 2                       # scratch (single)
        out_t = pix * tn * 2                                      # bf16 out tile
        w_t = _cdiv(K, 8) * 8 * tn * 2                            # bf16 weight tile
        return 2 * x_tile + lhs + 2 * out_t + 2 * w_t + 4 * tn * 4

    TH = max(1, min(OH, max(1, target_pixels // OW)))
    while TH > 1 and vmem_bytes(TH) > (10 << 20):
        TH = max(1, TH // 2)

    n_th = _cdiv(OH, TH)
    OHp = n_th * TH
    TH_in = (TH - 1) * stride + KH
    Hin_needed = (OHp - 1) * stride + KH

    # ---- NCHW -> padded NHWC bf16 (one cheap pass; no im2col materialization).
    xp = jnp.transpose(x, (0, 2, 3, 1)).astype(jnp.bfloat16)
    pad_h_hi = padding + max(0, Hin_needed - (H + 2 * padding))
    xp = jnp.pad(xp, ((0, 0), (padding, pad_h_hi), (padding, padding), (0, 0)))

    if n_th == 1:
        x_halo = xp[:, :TH_in]            # common case: input used in place, no copy
    else:
        # TODO(synk): overlapping row windows still materialize one gathered copy
        # in HBM here; express them with element-indexed offsets / manual DMA.
        rows = (jnp.arange(n_th) * (TH * stride))[:, None] + jnp.arange(TH_in)[None, :]
        x_halo = xp[:, rows].reshape(N * n_th, TH_in, Wp, Cin)

    M = N * n_th
    PIX = TH * OW
    out = pl.pallas_call(
        functools.partial(_conv_bn_relu_kernel, KH=KH, KW=KW, TH=TH, OW=OW,
                          Cin=Cin, stride=stride, apply_relu=relu),
        out_shape=jax.ShapeDtypeStruct((M, PIX, Coutp), jnp.bfloat16),
        grid_spec=pltpu.PrefetchScalarGridSpec(
            num_scalar_prefetch=0,
            # M innermost: weight / scale / bias block indices are constant along
            # it, so they stay VMEM-resident instead of re-streaming from HBM.
            grid=(Coutp // tn, M),
            in_specs=[
                pl.BlockSpec((1, TH_in, Wp, Cin), lambda j, m: (m, 0, 0, 0)),
                pl.BlockSpec((K, tn), lambda j, m: (0, j)),
                pl.BlockSpec((1, tn), lambda j, m: (0, j)),
                pl.BlockSpec((1, tn), lambda j, m: (0, j)),
            ],
            out_specs=pl.BlockSpec((1, PIX, tn), lambda j, m: (m, 0, j)),
            scratch_shapes=[pltpu.VMEM((PIX, K), jnp.bfloat16)],
        ),
        compiler_params=pltpu.CompilerParams(
            dimension_semantics=("parallel", "parallel")),
    )(x_halo, w, scale_p, bias_p)

    # (M, PIX, Coutp) -> NHWC -> slice padding -> NCHW f32 (only to match PyTorch API).
    out = out.reshape(N, OHp, OW, Coutp)[:, :OH, :, :Cout]
    return out.transpose(0, 3, 1, 2).astype(jnp.float32)


if __name__ == "__main__":
    key = jax.random.PRNGKey(0)
    k1, k2, k3, k4, k5, k6 = jax.random.split(key, 6)

    # Shapes consistent with BasicConv(in_channels=4, out_channels=8, kernel_size=3,
    #                                  stride=1, padding=1, relu=True)
    N, Cin, H, W = 2, 4, 16, 16
    Cout, KH, KW = 8, 3, 3
    stride, padding = 1, 1

    x = jax.random.normal(k1, (N, Cin, H, W), jnp.float32)
    weight = jax.random.normal(k2, (Cout, Cin, KH, KW), jnp.float32) * 0.1
    gamma = 1.0 + 0.1 * jax.random.normal(k3, (Cout,), jnp.float32)
    beta = 0.1 * jax.random.normal(k4, (Cout,), jnp.float32)
    running_mean = 0.1 * jax.random.normal(k5, (Cout,), jnp.float32)
    running_var = jax.random.uniform(k6, (Cout,), jnp.float32, minval=0.5, maxval=1.5)

    out = basic_conv(x, weight, gamma, beta, running_mean, running_var,
                     stride=stride, padding=padding, relu=True)
    out = jax.block_until_ready(out)

    # Reference: plain JAX/XLA conv (f32) + BN(eval) + ReLU.  Tolerance accounts for
    # bf16 streaming operands AND the bf16 kernel output (f32 MXU accumulation).
    ref = jax.lax.conv_general_dilated(
        x, weight, (stride, stride), [(padding, padding), (padding, padding)],
        dimension_numbers=("NCHW", "OIHW", "NCHW"))
    scale = gamma / jnp.sqrt(running_var + 1e-5)
    bias = beta - running_mean * scale
    ref = ref * scale[None, :, None, None] + bias[None, :, None, None]
    ref = jnp.maximum(ref, 0.0)
    assert out.shape == ref.shape == (N, Cout, H, W)
    err = float(jnp.max(jnp.abs(out - ref)))
    assert jnp.allclose(out, ref, atol=5e-2, rtol=5e-2), err

    print("KERNEL_OK")
</pallas_src>

<mosaic_0001>
module attributes {stable_mosaic.version = 11 : i64} {
  func.func @_conv_bn_relu_kernel(%arg0: i32, %arg1: i32, %arg2: memref<1x18x18x4xbf16, #tpu.memory_space<vmem>>, %arg3: memref<36x128xbf16, #tpu.memory_space<vmem>>, %arg4: memref<1x128xf32, #tpu.memory_space<vmem>>, %arg5: memref<1x128xf32, #tpu.memory_space<vmem>>, %arg6: memref<1x256x128xbf16, #tpu.memory_space<vmem>>, %arg7: memref<256x36xbf16, #tpu.memory_space<vmem>>) attributes {dimension_semantics = [#tpu.dimension_semantics<parallel>, #tpu.dimension_semantics<parallel>], iteration_bounds = array<i64: 1, 2>, scalar_prefetch = 0 : i64, scratch_operands = 1 : i64, tpu.core_type = #tpu.core_type<tc>, window_params = [{transform_indices = @transform_0, window_bounds = array<i64: 1, 18, 18, 4>}, {transform_indices = @transform_1, window_bounds = array<i64: 36, 128>}, {transform_indices = @transform_2, window_bounds = array<i64: 1, 128>}, {transform_indices = @transform_3, window_bounds = array<i64: 1, 128>}, {transform_indices = @transform_4, window_bounds = array<i64: 1, 256, 128>}]} {
    %c0 = arith.constant 0 : index
    %c0_0 = arith.constant 0 : index
    %c0_1 = arith.constant 0 : index
    %c0_2 = arith.constant 0 : index
    %0 = vector.load %arg2[%c0, %c0_0, %c0_1, %c0_2] : memref<1x18x18x4xbf16, #tpu.memory_space<vmem>>, vector<1x16x16x4xbf16>
    %1 = vector.shape_cast %0 : vector<1x16x16x4xbf16> to vector<16x16x4xbf16>
    %2 = vector.shape_cast %1 : vector<16x16x4xbf16> to vector<256x4xbf16>
    %c0_3 = arith.constant 0 : index
    %c0_4 = arith.constant 0 : index
    %3 = vector.load %arg7[%c0_3, %c0_4] : memref<256x36xbf16, #tpu.memory_space<vmem>>, vector<256x4xbf16>
    tpu.vector_store %arg7[%c0_3, %c0_4], %2 {strides = array<i32>} : memref<256x36xbf16, #tpu.memory_space<vmem>>, vector<256x4xbf16>,
    %c0_5 = arith.constant 0 : index
    %c0_6 = arith.constant 0 : index
    %c1 = arith.constant 1 : index
    %c0_7 = arith.constant 0 : index
    %4 = vector.load %arg2[%c0_5, %c0_6, %c1, %c0_7] : memref<1x18x18x4xbf16, #tpu.memory_space<vmem>>, vector<1x16x16x4xbf16>
    %5 = vector.shape_cast %4 : vector<1x16x16x4xbf16> to vector<16x16x4xbf16>
    %6 = vector.shape_cast %5 : vector<16x16x4xbf16> to vector<256x4xbf16>
    %c0_8 = arith.constant 0 : index
    %c4 = arith.constant 4 : index
    %7 = vector.load %arg7[%c0_8, %c4] : memref<256x36xbf16, #tpu.memory_space<vmem>>, vector<256x4xbf16>
    tpu.vector_store %arg7[%c0_8, %c4], %6 {strides = array<i32>} : memref<256x36xbf16, #tpu.memory_space<vmem>>, vector<256x4xbf16>,
    %c0_9 = arith.constant 0 : index
    %c0_10 = arith.constant 0 : index
    %c2 = arith.constant 2 : index
    %c0_11 = arith.constant 0 : index
    %8 = vector.load %arg2[%c0_9, %c0_10, %c2, %c0_11] : memref<1x18x18x4xbf16, #tpu.memory_space<vmem>>, vector<1x16x16x4xbf16>
    %9 = vector.shape_cast %8 : vector<1x16x16x4xbf16> to vector<16x16x4xbf16>
    %10 = vector.shape_cast %9 : vector<16x16x4xbf16> to vector<256x4xbf16>
    %c0_12 = arith.constant 0 : index
    %c8 = arith.constant 8 : index
    %11 = vector.load %arg7[%c0_12, %c8] : memref<256x36xbf16, #tpu.memory_space<vmem>>, vector<256x4xbf16>
    tpu.vector_store %arg7[%c0_12, %c8], %10 {strides = array<i32>} : memref<256x36xbf16, #tpu.memory_space<vmem>>, vector<256x4xbf16>,
    %c0_13 = arith.constant 0 : index
    %c1_14 = arith.constant 1 : index
    %c0_15 = arith.constant 0 : index
    %c0_16 = arith.constant 0 : index
    %12 = vector.load %arg2[%c0_13, %c1_14, %c0_15, %c0_16] : memref<1x18x18x4xbf16, #tpu.memory_space<vmem>>, vector<1x16x16x4xbf16>
    %13 = vector.shape_cast %12 : vector<1x16x16x4xbf16> to vector<16x16x4xbf16>
    %14 = vector.shape_cast %13 : vector<16x16x4xbf16> to vector<256x4xbf16>
    %c0_17 = arith.constant 0 : index
    %c12 = arith.constant 12 : index
    %15 = vector.load %arg7[%c0_17, %c12] : memref<256x36xbf16, #tpu.memory_space<vmem>>, vector<256x4xbf16>
    tpu.vector_store %arg7[%c0_17, %c12], %14 {strides = array<i32>} : memref<256x36xbf16, #tpu.memory_space<vmem>>, vector<256x4xbf16>,
    %c0_18 = arith.constant 0 : index
    %c1_19 = arith.constant 1 : index
    %c1_20 = arith.constant 1 : index
    %c0_21 = arith.constant 0 : index
    %16 = vector.load %arg2[%c0_18, %c1_19, %c1_20, %c0_21] : memref<1x18x18x4xbf16, #tpu.memory_space<vmem>>, vector<1x16x16x4xbf16>
    %17 = vector.shape_cast %16 : vector<1x16x16x4xbf16> to vector<16x16x4xbf16>
    %18 = vector.shape_cast %17 : vector<16x16x4xbf16> to vector<256x4xbf16>
    %c0_22 = arith.constant 0 : index
    %c16 = arith.constant 16 : index
    %19 = vector.load %arg7[%c0_22, %c16] : memref<256x36xbf16, #tpu.memory_space<vmem>>, vector<256x4xbf16>
    tpu.vector_store %arg7[%c0_22, %c16], %18 {strides = array<i32>} : memref<256x36xbf16, #tpu.memory_space<vmem>>, vector<256x4xbf16>,
    %c0_23 = arith.constant 0 : index
    %c1_24 = arith.constant 1 : index
    %c2_25 = arith.constant 2 : index
    %c0_26 = arith.constant 0 : index
    %20 = vector.load %arg2[%c0_23, %c1_24, %c2_25, %c0_26] : memref<1x18x18x4xbf16, #tpu.memory_space<vmem>>, vector<1x16x16x4xbf16>
    %21 = vector.shape_cast %20 : vector<1x16x16x4xbf16> to vector<16x16x4xbf16>
    %22 = vector.shape_cast %21 : vector<16x16x4xbf16> to vector<256x4xbf16>
    %c0_27 = arith.constant 0 : index
    %c20 = arith.constant 20 : index
    %23 = vector.load %arg7[%c0_27, %c20] : memref<256x36xbf16, #tpu.memory_space<vmem>>, vector<256x4xbf16>
    tpu.vector_store %arg7[%c0_27, %c20], %22 {strides = array<i32>} : memref<256x36xbf16, #tpu.memory_space<vmem>>, vector<256x4xbf16>,
    %c0_28 = arith.constant 0 : index
    %c2_29 = arith.constant 2 : index
    %c0_30 = arith.constant 0 : index
    %c0_31 = arith.constant 0 : index
    %24 = vector.load %arg2[%c0_28, %c2_29, %c0_30, %c0_31] : memref<1x18x18x4xbf16, #tpu.memory_space<vmem>>, vector<1x16x16x4xbf16>
    %25 = vector.shape_cast %24 : vector<1x16x16x4xbf16> to vector<16x16x4xbf16>
    %26 = vector.shape_cast %25 : vector<16x16x4xbf16> to vector<256x4xbf16>
    %c0_32 = arith.constant 0 : index
    %c24 = arith.constant 24 : index
    %27 = vector.load %arg7[%c0_32, %c24] : memref<256x36xbf16, #tpu.memory_space<vmem>>, vector<256x4xbf16>
    tpu.vector_store %arg7[%c0_32, %c24], %26 {strides = array<i32>} : memref<256x36xbf16, #tpu.memory_space<vmem>>, vector<256x4xbf16>,
    %c0_33 = arith.constant 0 : index
    %c2_34 = arith.constant 2 : index
    %c1_35 = arith.constant 1 : index
    %c0_36 = arith.constant 0 : index
    %28 = vector.load %arg2[%c0_33, %c2_34, %c1_35, %c0_36] : memref<1x18x18x4xbf16, #tpu.memory_space<vmem>>, vector<1x16x16x4xbf16>
    %29 = vector.shape_cast %28 : vector<1x16x16x4xbf16> to vector<16x16x4xbf16>
    %30 = vector.shape_cast %29 : vector<16x16x4xbf16> to vector<256x4xbf16>
    %c0_37 = arith.constant 0 : index
    %c28 = arith.constant 28 : index
    %31 = vector.load %arg7[%c0_37, %c28] : memref<256x36xbf16, #tpu.memory_space<vmem>>, vector<256x4xbf16>
    tpu.vector_store %arg7[%c0_37, %c28], %30 {strides = array<i32>} : memref<256x36xbf16, #tpu.memory_space<vmem>>, vector<256x4xbf16>,
    %c0_38 = arith.constant 0 : index
    %c2_39 = arith.constant 2 : index
    %c2_40 = arith.constant 2 : index
    %c0_41 = arith.constant 0 : index
    %32 = vector.load %arg2[%c0_38, %c2_39, %c2_40, %c0_41] : memref<1x18x18x4xbf16, #tpu.memory_space<vmem>>, vector<1x16x16x4xbf16>
    %33 = vector.shape_cast %32 : vector<1x16x16x4xbf16> to vector<16x16x4xbf16>
    %34 = vector.shape_cast %33 : vector<16x16x4xbf16> to vector<256x4xbf16>
    %c0_42 = arith.constant 0 : index
    %c32 = arith.constant 32 : index
    %35 = vector.load %arg7[%c0_42, %c32] : memref<256x36xbf16, #tpu.memory_space<vmem>>, vector<256x4xbf16>
    tpu.vector_store %arg7[%c0_42, %c32], %34 {strides = array<i32>} : memref<256x36xbf16, #tpu.memory_space<vmem>>, vector<256x4xbf16>,
    %c0_43 = arith.constant 0 : index
    %c0_44 = arith.constant 0 : index
    %36 = vector.load %arg7[%c0_43, %c0_44] : memref<256x36xbf16, #tpu.memory_space<vmem>>, vector<256x36xbf16>
    %c0_45 = arith.constant 0 : index
    %c0_46 = arith.constant 0 : index
    %37 = vector.load %arg3[%c0_45, %c0_46] : memref<36x128xbf16, #tpu.memory_space<vmem>>, vector<36x128xbf16>
    %cst = arith.constant dense<0.000000e+00> : vector<256x128xf32>
    %38 = tpu.matmul %36, %37, %cst {dimension_numbers = #tpu.dot_dimension_numbers<[1], [0], [0], [1], [0, 0, 1, 1], [], []>} : vector<256x36xbf16>, vector<36x128xbf16>, vector<256x128xf32> -> vector<256x128xf32>
    %c0_47 = arith.constant 0 : index
    %c0_48 = arith.constant 0 : index
    %39 = vector.load %arg4[%c0_47, %c0_48] : memref<1x128xf32, #tpu.memory_space<vmem>>, vector<1x128xf32>
    %40 = vector.broadcast %39 : vector<1x128xf32> to vector<256x128xf32>
    %41 = arith.mulf %38, %40 : vector<256x128xf32>
    %c0_49 = arith.constant 0 : index
    %c0_50 = arith.constant 0 : index
    %42 = vector.load %arg5[%c0_49, %c0_50] : memref<1x128xf32, #tpu.memory_space<vmem>>, vector<1x128xf32>
    %43 = vector.broadcast %42 : vector<1x128xf32> to vector<256x128xf32>
    %44 = arith.addf %41, %43 : vector<256x128xf32>
    %cst_51 = arith.constant 0.000000e+00 : f32
    %45 = vector.broadcast %cst_51 : f32 to vector<256x128xf32>
    %46 = arith.maximumf %44, %45 : vector<256x128xf32>
    %47 = arith.truncf %46 : vector<256x128xf32> to vector<256x128xbf16>
    %c0_52 = arith.constant 0 : index
    %c0_53 = arith.constant 0 : index
    %c0_54 = arith.constant 0 : index
    %48 = vector.load %arg6[%c0_52, %c0_53, %c0_54] : memref<1x256x128xbf16, #tpu.memory_space<vmem>>, vector<1x256x128xbf16>
    %49 = vector.shape_cast %48 : vector<1x256x128xbf16> to vector<256x128xbf16>
    %50 = vector.shape_cast %47 : vector<256x128xbf16> to vector<1x256x128xbf16>
    tpu.vector_store %arg6[%c0_52, %c0_53, %c0_54], %50 {strides = array<i32>} : memref<1x256x128xbf16, #tpu.memory_space<vmem>>, vector<1x256x128xbf16>,
    return
  }
  func.func @transform_0(%arg0: i32, %arg1: i32) -> (i32, i32, i32, i32) {
    %c0_i32 = arith.constant 0 : i32
    %c0_i32_0 = arith.constant 0 : i32
    %c0_i32_1 = arith.constant 0 : i32
    %c0_i32_2 = arith.constant 0 : i32
    return %arg1, %c0_i32, %c0_i32_0, %c0_i32_1 : i32, i32, i32, i32
  }
  func.func @transform_1(%arg0: i32, %arg1: i32) -> (i32, i32) {
    %c0_i32 = arith.constant 0 : i32
    %c0_i32_0 = arith.constant 0 : i32
    return %c0_i32, %arg0 : i32, i32
  }
  func.func @transform_2(%arg0: i32, %arg1: i32) -> (i32, i32) {
    %c0_i32 = arith.constant 0 : i32
    %c0_i32_0 = arith.constant 0 : i32
    return %c0_i32, %arg0 : i32, i32
  }
  func.func @transform_3(%arg0: i32, %arg1: i32) -> (i32, i32) {
    %c0_i32 = arith.constant 0 : i32
    %c0_i32_0 = arith.constant 0 : i32
    return %c0_i32, %arg0 : i32, i32
  }
  func.func @transform_4(%arg0: i32, %arg1: i32) -> (i32, i32, i32) {
    %c0_i32 = arith.constant 0 : i32
    %c0_i32_0 = arith.constant 0 : i32
    return %arg1, %c0_i32, %arg0 : i32, i32, i32
  }
}

</mosaic_0001>

<llo_original>
// kernel: tpu_custom_call.1
$region0: #{tpu_custom_call.1}
  #allocation0 [shape = 'u32[]', space=smem, size = 0x4, offset = 0x4, fixed_abs, tag = 'smem constant byte address 0x4 - core index']
  #allocation1 [shape = 'u32[144,128]{1,0:T(1,128)}', space=vmem, size = 0x12000, scoped, tag = 'internal scratch']
  #allocation2 [shape = 'bf16[256,36]{1,0:T(16,128)(2,1)}', space=vmem, size = 0x10000, scoped, tag = 'scratch operand']
  %s0 = inlined_call_operand.vmem [shape: bf16[2,18,18,4], index: 0, kind: input, shape index: {}]
  %s1 = inlined_call_operand.vmem [shape: bf16[36,128], index: 1, kind: input, shape index: {}]
  %s2 = inlined_call_operand.vmem [shape: f32[1,128], index: 2, kind: input, shape index: {}]
  %s3 = inlined_call_operand.vmem [shape: f32[1,128], index: 3, kind: input, shape index: {}]
  %s4 = inlined_call_operand.hbm [shape: bf16[2,256,128], index: 4, kind: output, shape index: {}]
  %s5 = sld [smem:[#allocation0]]
  $region49: #{tpu_custom_call.1} parent=0
    _
  %s7 = ssub.s32 1, %s5
  %s8 = scalar_select 0, %s7, %s5
  $region1: #{tpu_custom_call.1} parent=0
    #allocation3 [shape = 'u8[131072]{0}', space=vmem, size = 0x20000, scoped, tag = 'output window, operand 0']
    #allocation4 [shape = 's32[2]{0}', space=sflag, size = 0x8, scoped, tag = 'scoped memory for tpu_custom_call.1']
    %9 = vsyncpa [#allocation4], 0
    %s10 = scalar_lea.sflag [#allocation4], 1
    %11 = vsyncpa %s10, 0
    loop: start=0, step=1, limit=4
    $region2: #{tpu_custom_call.1} parent=1 // loop_pre_header
      _
    $region3: #{tpu_custom_call.1} parent=1 // loop_header
      %s13 = sphi 0, %s17
      %p14 = scmp.ge.s32.totalorder %s13, 4
      %s20 = sphi 0, %s32
      %s21 = sphi 0, %s28
      %s22 = sphi 0, %s20
      %s23 = sphi 0, %s21
      %s24 = sphi 0, %s22
      %s25 = sphi 0, %s23
      %s35 = sphi 0, %s37
      %s38 = sphi 0, %s35
      %s39 = sphi 0, %s38
      %s55 = sphi 0, %s39
      %s61 = sphi 0, %s63
      %s64 = sphi 0, %s61
      %s65 = sphi 0, %s64
      %s81 = sphi 0, %s65
      %s87 = sphi 0, %s89
      %s90 = sphi 0, %s87
      %s91 = sphi 0, %s90
      %s107 = sphi 0, %s91
      %s113 = sphi 0, %s115
      %s116 = sphi 0, %s113
      %s117 = sphi 0, %s116
      %s133 = sphi 0, %s117
      %s141 = sphi 0, %s143
      %s144 = sphi 0, %s141
      %s145 = sphi 0, %s144
      %s161 = sphi 0, %s145
    $region4: #{tpu_custom_call.1} parent=1 // loop_header_branch
      %16 = sbr.rel (%p14) target = $region8
    $region5: #{tpu_custom_call.1} parent=1 // loop_body
      %s18 = ssub.s32 %s13, 1
      %s19 = ssub.s32 %s13, 2
      %s26 = sadd.s32 1, %s21
      %p27 = scmp.ge.s32.totalorder %s26, 2
      %s28 = scalar_select %p27, 0, %s26
      %s29 = sadd.s32 1, %s20
      %s30 = scalar_select %p27, %s29, %s20
      %p31 = scmp.ge.s32.totalorder %s30, 1
      %s32 = scalar_select %p31, 0, %s30
      %s33 = ssub.s32 %s21, %s28
      %p34 = scmp.eq.s32.totalorder %s33, 0
      %s36 = sadd.s32 %s35, 1
      %s37 = scalar_select %p34, %s35, %s36
      %p40 = pneg %p34
      %p41 = scmp.eq.s32.totalorder %s13, 1
      %p42 = por %p40, %p41
      %p43 = scmp.ne.s32.totalorder %s35, %s38
      %p44 = scmp.eq.s32.totalorder %s13, 0
      %p45 = por %p43, %p44
      %p46 = scmp.ne.s32.totalorder %s35, %s38
      %p47 = scmp.eq.s32.totalorder %s18, 1
      %p48 = por %p46, %p47
      %p49 = scmp.ne.s32.totalorder %s38, %s39
      %p50 = scmp.eq.s32.totalorder %s18, 0
      %p51 = por %p49, %p50
      %p52 = scmp.ne.s32.totalorder %s38, %s39
      %p53 = scmp.eq.s32.totalorder %s19, 1
      %p54 = por %p52, %p53
      %p56 = scmp.ne.s32.totalorder %s39, %s55
      %p57 = scmp.eq.s32.totalorder %s19, 0
      %p58 = por %p56, %p57
      %s59 = ssub.s32 %s20, %s32
      %p60 = scmp.eq.s32.totalorder %s59, 0
      %s62 = sadd.s32 %s61, 1
      %s63 = scalar_select %p60, %s61, %s62
      %p66 = pneg %p60
      %p67 = scmp.eq.s32.totalorder %s13, 1
      %p68 = por %p66, %p67
      %p69 = scmp.ne.s32.totalorder %s61, %s64
      %p70 = scmp.eq.s32.totalorder %s13, 0
      %p71 = por %p69, %p70
      %p72 = scmp.ne.s32.totalorder %s61, %s64
      %p73 = scmp.eq.s32.totalorder %s18, 1
      %p74 = por %p72, %p73
      %p75 = scmp.ne.s32.totalorder %s64, %s65
      %p76 = scmp.eq.s32.totalorder %s18, 0
      %p77 = por %p75, %p76
      %p78 = scmp.ne.s32.totalorder %s64, %s65
      %p79 = scmp.eq.s32.totalorder %s19, 1
      %p80 = por %p78, %p79
      %p82 = scmp.ne.s32.totalorder %s65, %s81
      %p83 = scmp.eq.s32.totalorder %s19, 0
      %p84 = por %p82, %p83
      %s85 = ssub.s32 %s20, %s32
      %p86 = scmp.eq.s32.totalorder %s85, 0
      %s88 = sadd.s32 %s87, 1
      %s89 = scalar_select %p86, %s87, %s88
      %p92 = pneg %p86
      %p93 = scmp.eq.s32.totalorder %s13, 1
      %p94 = por %p92, %p93
      %p95 = scmp.ne.s32.totalorder %s87, %s90
      %p96 = scmp.eq.s32.totalorder %s13, 0
      %p97 = por %p95, %p96
      %p98 = scmp.ne.s32.totalorder %s87, %s90
      %p99 = scmp.eq.s32.totalorder %s18, 1
      %p100 = por %p98, %p99
      %p101 = scmp.ne.s32.totalorder %s90, %s91
      %p102 = scmp.eq.s32.totalorder %s18, 0
      %p103 = por %p101, %p102
      %p104 = scmp.ne.s32.totalorder %s90, %s91
      %p105 = scmp.eq.s32.totalorder %s19, 1
      %p106 = por %p104, %p105
      %p108 = scmp.ne.s32.totalorder %s91, %s107
      %p109 = scmp.eq.s32.totalorder %s19, 0
      %p110 = por %p108, %p109
      %s111 = ssub.s32 %s20, %s32
      %p112 = scmp.eq.s32.totalorder %s111, 0
      %s114 = sadd.s32 %s113, 1
      %s115 = scalar_select %p112, %s113, %s114
      %p118 = pneg %p112
      %p119 = scmp.eq.s32.totalorder %s13, 1
      %p120 = por %p118, %p119
      %p121 = scmp.ne.s32.totalorder %s113, %s116
      %p122 = scmp.eq.s32.totalorder %s13, 0
      %p123 = por %p121, %p122
      %p124 = scmp.ne.s32.totalorder %s113, %s116
      %p125 = scmp.eq.s32.totalorder %s18, 1
      %p126 = por %p124, %p125
      %p127 = scmp.ne.s32.totalorder %s116, %s117
      %p128 = scmp.eq.s32.totalorder %s18, 0
      %p129 = por %p127, %p128
      %p130 = scmp.ne.s32.totalorder %s116, %s117
      %p131 = scmp.eq.s32.totalorder %s19, 1
      %p132 = por %p130, %p131
      %p134 = scmp.ne.s32.totalorder %s117, %s133
      %p135 = scmp.eq.s32.totalorder %s19, 0
      %p136 = por %p134, %p135
      %s137 = ssub.s32 %s21, %s28
      %s138 = ssub.s32 %s20, %s32
      %s139 = sor.u32 %s137, %s138
      %p140 = scmp.eq.s32.totalorder %s139, 0
      %s142 = sadd.s32 %s141, 1
      %s143 = scalar_select %p140, %s141, %s142
      %p146 = pneg %p140
      %p147 = scmp.eq.s32.totalorder %s13, 1
      %p148 = por %p146, %p147
      %p149 = scmp.ne.s32.totalorder %s141, %s144
      %p150 = scmp.eq.s32.totalorder %s13, 0
      %p151 = por %p149, %p150
      %p152 = scmp.ne.s32.totalorder %s141, %s144
      %p153 = scmp.eq.s32.totalorder %s18, 1
      %p154 = por %p152, %p153
      %p155 = scmp.ne.s32.totalorder %s144, %s145
      %p156 = scmp.eq.s32.totalorder %s18, 0
      %p157 = por %p155, %p156
      %p158 = scmp.ne.s32.totalorder %s144, %s145
      %p159 = scmp.eq.s32.totalorder %s19, 1
      %p160 = por %p158, %p159
      %p162 = scmp.ne.s32.totalorder %s145, %s161
      %p163 = scmp.eq.s32.totalorder %s19, 0
      %p164 = por %p162, %p163
      %p165 = scmp.le.s32.totalorder 1, %s13
      %p166 = scmp.lt.s32.totalorder %s13, 3
      %p167 = pnand %p165, %p166
      %p168 = pneg %p167
      // Predicated region
      $region9: #{tpu_custom_call.1} parent=5 // pred_check
        _
      $region10: #{tpu_custom_call.1} parent=5 // pred_check_branch
        %170 = sbr.rel (%p167) target = $region12
      $region11: #{tpu_custom_call.1} parent=5 // pred_region
        %s171 = ssub.s32 %s13, 1
        // Predicated region
        $region13: #{tpu_custom_call.1} parent=11 // pred_check
          %p172 = pneg %p77
        $region14: #{tpu_custom_call.1} parent=11 // pred_check_branch
          %174 = sbr.rel (%p172) target = $region16
        $region15: #{tpu_custom_call.1} parent=11 // pred_region
          %p175 = scmp.lt.s32.totalorder %s22, 0
          %s176 = scalar_select %p175, %s22, 0
          %s177 = smul.addr %s176, 4
          %s178 = scalar_lea.vmem %s1, %s177
        $region16: #{tpu_custom_call.1} parent=11 // pred_fallthru
          _
        // Predicated region
        $region17: #{tpu_custom_call.1} parent=11 // pred_check
          %p179 = pneg %p103
        $region18: #{tpu_custom_call.1} parent=11 // pred_check_branch
          %181 = sbr.rel (%p179) target = $region20
        $region19: #{tpu_custom_call.1} parent=11 // pred_region
          %p182 = scmp.lt.s32.totalorder %s22, 0
          %s183 = scalar_select %p182, %s22, 0
          %s184 = scalar_lea.vmem %s2, %s183
        $region20: #{tpu_custom_call.1} parent=11 // pred_fallthru
          _
        // Predicated region
        $region21: #{tpu_custom_call.1} parent=11 // pred_check
          %p185 = pneg %p129
        $region22: #{tpu_custom_call.1} parent=11 // pred_check_branch
          %187 = sbr.rel (%p185) target = $region24
        $region23: #{tpu_custom_call.1} parent=11 // pred_region
          %p188 = scmp.lt.s32.totalorder %s22, 0
          %s189 = scalar_select %p188, %s22, 0
          %s190 = scalar_lea.vmem %s3, %s189
        $region24: #{tpu_custom_call.1} parent=11 // pred_fallthru
          _
      $region12: #{tpu_custom_call.1} parent=5 // pred_fallthru
        _
      %p191 = scmp.lt.s32.totalorder %s13, 2
      // Predicated region
      $region25: #{tpu_custom_call.1} parent=5 // pred_check
        %p192 = pneg %p191
      $region26: #{tpu_custom_call.1} parent=5 // pred_check_branch
        %194 = sbr.rel (%p192) target = $region28
      $region27: #{tpu_custom_call.1} parent=5 // pred_region
        // Predicated region
        $region29: #{tpu_custom_call.1} parent=27 // pred_check
          %p195 = pneg %p45
        $region30: #{tpu_custom_call.1} parent=27 // pred_check_branch
          %197 = sbr.rel (%p195) target = $region32
        $region31: #{tpu_custom_call.1} parent=27 // pred_region
          %p198 = scmp.lt.s32.totalorder %s21, 1
          %s199 = scalar_select %p198, %s21, 1
          %s200 = smul.addr %s199, 54
          %s201 = smul.addr %s200, 4
          %s202 = scalar_lea.vmem %s0, %s201
        $region32: #{tpu_custom_call.1} parent=27 // pred_fallthru
          _
      $region28: #{tpu_custom_call.1} parent=5 // pred_fallthru
        _
      %p203 = scmp.le.s32.totalorder 1, %s13
      %p204 = scmp.lt.s32.totalorder %s13, 3
      %p205 = pnand %p203, %p204
      %p206 = pneg %p205
      // Predicated region
      $region33: #{tpu_custom_call.1} parent=5 // pred_check
        _
      $region34: #{tpu_custom_call.1} parent=5 // pred_check_branch
        %208 = sbr.rel (%p205) target = $region36
      $region35: #{tpu_custom_call.1} parent=5 // pred_region
        %s209 = ssub.s32 %s13, 1
        %p210 = scmp.lt.s32.totalorder %s23, 1
        %s211 = scalar_select %p210, %s23, 1
        %s212 = smul.addr %s211, 54
        %s213 = smul.addr %s212, 4
        %s214 = scalar_lea.vmem %s0, %s213
        %p215 = pneg %p51
        %p216 = pneg %p48
        %p217 = scmp.lt.s32.totalorder %s22, 0
        %s218 = scalar_select %p217, %s22, 0
        %s219 = smul.addr %s218, 4
        %s220 = scalar_lea.vmem %s1, %s219
        %p221 = pneg %p77
        %p222 = pneg %p74
        %p223 = scmp.lt.s32.totalorder %s22, 0
        %s224 = scalar_select %p223, %s22, 0
        %s225 = scalar_lea.vmem %s2, %s224
        %p226 = pneg %p103
        %p227 = pneg %p100
        %p228 = scmp.lt.s32.totalorder %s22, 0
        %s229 = scalar_select %p228, %s22, 0
        %s230 = scalar_lea.vmem %s3, %s229
        %p231 = pneg %p129
        %p232 = pneg %p126
        %p233 = pneg %p157
        %p234 = pneg %p154
        %s235 = sand.u32 %s144, 1
        %s236 = scalar_lea.sflag [#allocation4], %s235
        %s237 = sand.u32 %s144, 1
        %s238 = smul.addr %s237, 128
        %s239 = scalar_lea.vmem [#allocation3], %s238
        %p240 = scmp.lt.s32.totalorder %s23, 1
        %s241 = scalar_select %p240, %s23, 1
        %s242 = smul.addr %s241, 54
        %s243 = smul.addr %s242, 4
        %s244 = scalar_lea.vmem %s0, %s243
        %p245 = scmp.lt.s32.totalorder %s22, 0
        %s246 = scalar_select %p245, %s22, 0
        %s247 = smul.addr %s246, 4
        %s248 = scalar_lea.vmem %s1, %s247
        %p249 = scmp.lt.s32.totalorder %s22, 0
        %s250 = scalar_select %p249, %s22, 0
        %s251 = scalar_lea.vmem %s2, %s250
        %p252 = scmp.lt.s32.totalorder %s22, 0
        %s253 = scalar_select %p252, %s22, 0
        %s254 = scalar_lea.vmem %s3, %s253
        %v256 = vld [vmem:[%s244] sm:$0xf]
        %v257 = vld [vmem:[%s244 + $0x4] sm:$0xf]
        %v258 = vld [vmem:[%s244 + $0xc] sm:$0xf]
        %v259 = vld [vmem:[%s244 + $0x10] sm:$0xf]
        %v260 = vld [vmem:[%s244 + $0x18] sm:$0xf]
        %v261 = vld [vmem:[%s244 + $0x1c] sm:$0xf]
        %v262 = vld [vmem:[%s244 + $0x24] sm:$0xf]
        %v263 = vld [vmem:[%s244 + $0x28] sm:$0xf]
        %v264 = vld [vmem:[%s244 + $0x30] sm:$0xf]
        %v265 = vld [vmem:[%s244 + $0x34] sm:$0xf]
        %v266 = vld [vmem:[%s244 + $0x3c] sm:$0xf]
        %v267 = vld [vmem:[%s244 + $0x40] sm:$0xf]
        %v268 = vld [vmem:[%s244 + $0x48] sm:$0xf]
        %v269 = vld [vmem:[%s244 + $0x4c] sm:$0xf]
        %v270 = vld [vmem:[%s244 + $0x54] sm:$0xf]
        %v271 = vld [vmem:[%s244 + $0x58] sm:$0xf]
        %v272 = vld [vmem:[%s244 + $0x60] sm:$0xf]
        %v273 = vld [vmem:[%s244 + $0x64] sm:$0xf]
        %v274 = vld [vmem:[%s244 + $0x6c] sm:$0xf]
        %v275 = vld [vmem:[%s244 + $0x70] sm:$0xf]
        %v276 = vld [vmem:[%s244 + $0x78] sm:$0xf]
        %v277 = vld [vmem:[%s244 + $0x7c] sm:$0xf]
        %v278 = vld [vmem:[%s244 + $0x84] sm:$0xf]
        %v279 = vld [vmem:[%s244 + $0x88] sm:$0xf]
        %v280 = vld [vmem:[%s244 + $0x90] sm:$0xf]
        %v281 = vld [vmem:[%s244 + $0x94] sm:$0xf]
        %v282 = vld [vmem:[%s244 + $0x9c] sm:$0xf]
        %v283 = vld [vmem:[%s244 + $0xa0] sm:$0xf]
        %v284 = vld [vmem:[%s244 + $0xa8] sm:$0xf]
        %v285 = vld [vmem:[%s244 + $0xac] sm:$0xf]
        %v286 = vld [vmem:[%s244 + $0xb4] sm:$0xf]
        %v287 = vld [vmem:[%s244 + $0xb8] sm:$0xf]
        %v320 = vunpack.c.l.b16 %v256
        %v321 = vunpack.c.l.b16 %v257
        %v322 = vunpack.c.l.b16 %v258
        %v323 = vunpack.c.l.b16 %v259
        %v324 = vunpack.c.l.b16 %v260
        %v325 = vunpack.c.l.b16 %v261
        %v326 = vunpack.c.l.b16 %v262
        %v327 = vunpack.c.l.b16 %v263
        %v328 = vunpack.c.l.b16 %v264
        %v329 = vunpack.c.l.b16 %v265
        %v330 = vunpack.c.l.b16 %v266
        %v331 = vunpack.c.l.b16 %v267
        %v332 = vunpack.c.l.b16 %v268
        %v333 = vunpack.c.l.b16 %v269
        %v334 = vunpack.c.l.b16 %v270
        %v335 = vunpack.c.l.b16 %v271
        %v336 = vunpack.c.l.b16 %v272
        %v337 = vunpack.c.l.b16 %v273
        %v338 = vunpack.c.l.b16 %v274
        %v339 = vunpack.c.l.b16 %v275
        %v340 = vunpack.c.l.b16 %v276
        %v341 = vunpack.c.l.b16 %v277
        %v342 = vunpack.c.l.b16 %v278
        %v343 = vunpack.c.l.b16 %v279
        %v344 = vunpack.c.l.b16 %v280
        %v345 = vunpack.c.l.b16 %v281
        %v346 = vunpack.c.l.b16 %v282
        %v347 = vunpack.c.l.b16 %v283
        %v348 = vunpack.c.l.b16 %v284
        %v349 = vunpack.c.l.b16 %v285
        %v350 = vunpack.c.l.b16 %v286
        %v351 = vunpack.c.l.b16 %v287
        %v352 = vpack.c.b16 %v321, %v320
        %v353 = vpack.c.b16 %v323, %v322
        %v354 = vpack.c.b16 %v325, %v324
        %v355 = vpack.c.b16 %v327, %v326
        %v356 = vpack.c.b16 %v329, %v328
        %v357 = vpack.c.b16 %v331, %v330
        %v358 = vpack.c.b16 %v333, %v332
        %v359 = vpack.c.b16 %v335, %v334
        %v360 = vpack.c.b16 %v337, %v336
        %v361 = vpack.c.b16 %v339, %v338
        %v362 = vpack.c.b16 %v341, %v340
        %v363 = vpack.c.b16 %v343, %v342
        %v364 = vpack.c.b16 %v345, %v344
        %v365 = vpack.c.b16 %v347, %v346
        %v366 = vpack.c.b16 %v349, %v348
        %v367 = vpack.c.b16 %v351, %v350
        %vm384 = vcmask 31744
        %385 = vst.msk [vmem:[#allocation2] sm:$0xff] %vm384, %v352
        %386 = vst.msk [vmem:[#allocation2 + $0x8] sm:$0xff] %vm384, %v353
        %387 = vst.msk [vmem:[#allocation2 + $0x10] sm:$0xff] %vm384, %v354
        %388 = vst.msk [vmem:[#allocation2 + $0x18] sm:$0xff] %vm384, %v355
        %389 = vst.msk [vmem:[#allocation2 + $0x20] sm:$0xff] %vm384, %v356
        %390 = vst.msk [vmem:[#allocation2 + $0x28] sm:$0xff] %vm384, %v357
        %391 = vst.msk [vmem:[#allocation2 + $0x30] sm:$0xff] %vm384, %v358
        %392 = vst.msk [vmem:[#allocation2 + $0x38] sm:$0xff] %vm384, %v359
        %393 = vst.msk [vmem:[#allocation2 + $0x40] sm:$0xff] %vm384, %v360
        %394 = vst.msk [vmem:[#allocation2 + $0x48] sm:$0xff] %vm384, %v361
        %395 = vst.msk [vmem:[#allocation2 + $0x50] sm:$0xff] %vm384, %v362
        %396 = vst.msk [vmem:[#allocation2 + $0x58] sm:$0xff] %vm384, %v363
        %397 = vst.msk [vmem:[#allocation2 + $0x60] sm:$0xff] %vm384, %v364
        %398 = vst.msk [vmem:[#allocation2 + $0x68] sm:$0xff] %vm384, %v365
        %399 = vst.msk [vmem:[#allocation2 + $0x70] sm:$0xff] %vm384, %v366
        %400 = vst.msk [vmem:[#allocation2 + $0x78] sm:$0xff] %vm384, %v367
        %v401 = vld [vmem:[%s244] sm:$0xf]
        %v402 = vld [vmem:[%s244 + $0x4] sm:$0xf]
        %v403 = vld [vmem:[%s244 + $0x8] sm:$0x1]
        %v404 = vld [vmem:[%s244 + $0xc] sm:$0xf]
        %v405 = vld [vmem:[%s244 + $0x10] sm:$0xf]
        %v406 = vld [vmem:[%s244 + $0x14] sm:$0x1]
        %v407 = vld [vmem:[%s244 + $0x18] sm:$0xf]
        %v408 = vld [vmem:[%s244 + $0x1c] sm:$0xf]
        %v409 = vld [vmem:[%s244 + $0x20] sm:$0x1]
        %v410 = vld [vmem:[%s244 + $0x24] sm:$0xf]
        %v411 = vld [vmem:[%s244 + $0x28] sm:$0xf]
        %v412 = vld [vmem:[%s244 + $0x2c] sm:$0x1]
        %v413 = vld [vmem:[%s244 + $0x30] sm:$0xf]
        %v414 = vld [vmem:[%s244 + $0x34] sm:$0xf]
        %v415 = vld [vmem:[%s244 + $0x38] sm:$0x1]
        %v416 = vld [vmem:[%s244 + $0x3c] sm:$0xf]
        %v417 = vld [vmem:[%s244 + $0x40] sm:$0xf]
        %v418 = vld [vmem:[%s244 + $0x44] sm:$0x1]
        %v419 = vld [vmem:[%s244 + $0x48] sm:$0xf]
        %v420 = vld [vmem:[%s244 + $0x4c] sm:$0xf]
        %v421 = vld [vmem:[%s244 + $0x50] sm:$0x1]
        %v422 = vld [vmem:[%s244 + $0x54] sm:$0xf]
        %v423 = vld [vmem:[%s244 + $0x58] sm:$0xf]
        %v424 = vld [vmem:[%s244 + $0x5c] sm:$0x1]
        %v425 = vld [vmem:[%s244 + $0x60] sm:$0xf]
        %v426 = vld [vmem:[%s244 + $0x64] sm:$0xf]
        %v427 = vld [vmem:[%s244 + $0x68] sm:$0x1]
        %v428 = vld [vmem:[%s244 + $0x6c] sm:$0xf]
        %v429 = vld [vmem:[%s244 + $0x70] sm:$0xf]
        %v430 = vld [vmem:[%s244 + $0x74] sm:$0x1]
        %v431 = vld [vmem:[%s244 + $0x78] sm:$0xf]
        %v432 = vld [vmem:[%s244 + $0x7c] sm:$0xf]
        %v433 = vld [vmem:[%s244 + $0x80] sm:$0x1]
        %v434 = vld [vmem:[%s244 + $0x84] sm:$0xf]
        %v435 = vld [vmem:[%s244 + $0x88] sm:$0xf]
        %v436 = vld [vmem:[%s244 + $0x8c] sm:$0x1]
        %v437 = vld [vmem:[%s244 + $0x90] sm:$0xf]
        %v438 = vld [vmem:[%s244 + $0x94] sm:$0xf]
        %v439 = vld [vmem:[%s244 + $0x98] sm:$0x1]
        %v440 = vld [vmem:[%s244 + $0x9c] sm:$0xf]
        %v441 = vld [vmem:[%s244 + $0xa0] sm:$0xf]
        %v442 = vld [vmem:[%s244 + $0xa4] sm:$0x1]
        %v443 = vld [vmem:[%s244 + $0xa8] sm:$0xf]
        %v444 = vld [vmem:[%s244 + $0xac] sm:$0xf]
        %v445 = vld [vmem:[%s244 + $0xb0] sm:$0x1]
        %v446 = vld [vmem:[%s244 + $0xb4] sm:$0xf]
        %v447 = vld [vmem:[%s244 + $0xb8] sm:$0xf]
        %v448 = vld [vmem:[%s244 + $0xbc] sm:$0x1]
        %vm449 = vsmask.f32 3328
        %vm450 = vsmask.f32 7440
        %vm451 = vmor %vm449, %vm450
        %v453 = vshrl.u32 %v401, 16
        %v455 = vrot.slane %v453, 4
        %v456 = vshll.u32 %v401, 16
        %v458 = vrot.slane %v456, 5
        %v459 = vor.u32 %v455, %v458
        %v460 = vrot.slane %v459, 4
        %v462 = vshll.u32 %v402, 16
        %v464 = vrot.slane %v462, 5
        %v465 = vsel %vm451, %v460, %v464
        %v466 = vshrl.u32 %v402, 16
        %v468 = vrot.slane %v466, 4
        %v469 = vor.u32 %v468, %v464
        %v470 = vrot.slane %v469, 4
        %v472 = vshll.u32 %v403, 16
        %v474 = vrot.slane %v472, 5
        %v475 = vsel %vm451, %v470, %v474
        %v477 = vshrl.u32 %v404, 16
        %v479 = vrot.slane %v477, 4
        %v480 = vshll.u32 %v404, 16
        %v482 = vrot.slane %v480, 5
        %v483 = vor.u32 %v479, %v482
        %v484 = vrot.slane %v483, 4
        %v486 = vshll.u32 %v405, 16
        %v488 = vrot.slane %v486, 5
        %v489 = vsel %vm451, %v484, %v488
        %v490 = vshrl.u32 %v405, 16
        %v492 = vrot.slane %v490, 4
        %v493 = vor.u32 %v492, %v488
        %v494 = vrot.slane %v493, 4
        %v496 = vshll.u32 %v406, 16
        %v498 = vrot.slane %v496, 5
        %v499 = vsel %vm451, %v494, %v498
        %v501 = vshrl.u32 %v407, 16
        %v503 = vrot.slane %v501, 4
        %v504 = vshll.u32 %v407, 16
        %v506 = vrot.slane %v504, 5
        %v507 = vor.u32 %v503, %v506
        %v508 = vrot.slane %v507, 4
        %v510 = vshll.u32 %v408, 16
        %v512 = vrot.slane %v510, 5
        %v513 = vsel %vm451, %v508, %v512
        %v514 = vshrl.u32 %v408, 16
        %v516 = vrot.slane %v514, 4
        %v517 = vor.u32 %v516, %v512
        %v518 = vrot.slane %v517, 4
        %v520 = vshll.u32 %v409, 16
        %v522 = vrot.slane %v520, 5
        %v523 = vsel %vm451, %v518, %v522
        %v525 = vshrl.u32 %v410, 16
        %v527 = vrot.slane %v525, 4
        %v528 = vshll.u32 %v410, 16
        %v530 = vrot.slane %v528, 5
        %v531 = vor.u32 %v527, %v530
        %v532 = vrot.slane %v531, 4
        %v534 = vshll.u32 %v411, 16
        %v536 = vrot.slane %v534, 5
        %v537 = vsel %vm451, %v532, %v536
        %v538 = vshrl.u32 %v411, 16
        %v540 = vrot.slane %v538, 4
        %v541 = vor.u32 %v540, %v536
        %v542 = vrot.slane %v541, 4
        %v544 = vshll.u32 %v412, 16
        %v546 = vrot.slane %v544, 5
        %v547 = vsel %vm451, %v542, %v546
        %v549 = vshrl.u32 %v413, 16
        %v551 = vrot.slane %v549, 4
        %v552 = vshll.u32 %v413, 16
        %v554 = vrot.slane %v552, 5
        %v555 = vor.u32 %v551, %v554
        %v556 = vrot.slane %v555, 4
        %v558 = vshll.u32 %v414, 16
        %v560 = vrot.slane %v558, 5
        %v561 = vsel %vm451, %v556, %v560
        %v562 = vshrl.u32 %v414, 16
        %v564 = vrot.slane %v562, 4
        %v565 = vor.u32 %v564, %v560
        %v566 = vrot.slane %v565, 4
        %v568 = vshll.u32 %v415, 16
        %v570 = vrot.slane %v568, 5
        %v571 = vsel %vm451, %v566, %v570
        %v573 = vshrl.u32 %v416, 16
        %v575 = vrot.slane %v573, 4
        %v576 = vshll.u32 %v416, 16
        %v578 = vrot.slane %v576, 5
        %v579 = vor.u32 %v575, %v578
        %v580 = vrot.slane %v579, 4
        %v582 = vshll.u32 %v417, 16
        %v584 = vrot.slane %v582, 5
        %v585 = vsel %vm451, %v580, %v584
        %v586 = vshrl.u32 %v417, 16
        %v588 = vrot.slane %v586, 4
        %v589 = vor.u32 %v588, %v584
        %v590 = vrot.slane %v589, 4
        %v592 = vshll.u32 %v418, 16
        %v594 = vrot.slane %v592, 5
        %v595 = vsel %vm451, %v590, %v594
        %v597 = vshrl.u32 %v419, 16
        %v599 = vrot.slane %v597, 4
        %v600 = vshll.u32 %v419, 16
        %v602 = vrot.slane %v600, 5
        %v603 = vor.u32 %v599, %v602
        %v604 = vrot.slane %v603, 4
        %v606 = vshll.u32 %v420, 16
        %v608 = vrot.slane %v606, 5
        %v609 = vsel %vm451, %v604, %v608
        %v610 = vshrl.u32 %v420, 16
        %v612 = vrot.slane %v610, 4
        %v613 = vor.u32 %v612, %v608
        %v614 = vrot.slane %v613, 4
        %v616 = vshll.u32 %v421, 16
        %v618 = vrot.slane %v616, 5
        %v619 = vsel %vm451, %v614, %v618
        %v621 = vshrl.u32 %v422, 16
        %v623 = vrot.slane %v621, 4
        %v624 = vshll.u32 %v422, 16
        %v626 = vrot.slane %v624, 5
        %v627 = vor.u32 %v623, %v626
        %v628 = vrot.slane %v627, 4
        %v630 = vshll.u32 %v423, 16
        %v632 = vrot.slane %v630, 5
        %v633 = vsel %vm451, %v628, %v632
        %v634 = vshrl.u32 %v423, 16
        %v636 = vrot.slane %v634, 4
        %v637 = vor.u32 %v636, %v632
        %v638 = vrot.slane %v637, 4
        %v640 = vshll.u32 %v424, 16
        %v642 = vrot.slane %v640, 5
        %v643 = vsel %vm451, %v638, %v642
        %v645 = vshrl.u32 %v425, 16
        %v647 = vrot.slane %v645, 4
        %v648 = vshll.u32 %v425, 16
        %v650 = vrot.slane %v648, 5
        %v651 = vor.u32 %v647, %v650
        %v652 = vrot.slane %v651, 4
        %v654 = vshll.u32 %v426, 16
        %v656 = vrot.slane %v654, 5
        %v657 = vsel %vm451, %v652, %v656
        %v658 = vshrl.u32 %v426, 16
        %v660 = vrot.slane %v658, 4
        %v661 = vor.u32 %v660, %v656
        %v662 = vrot.slane %v661, 4
        %v664 = vshll.u32 %v427, 16
        %v666 = vrot.slane %v664, 5
        %v667 = vsel %vm451, %v662, %v666
        %v669 = vshrl.u32 %v428, 16
        %v671 = vrot.slane %v669, 4
        %v672 = vshll.u32 %v428, 16
        %v674 = vrot.slane %v672, 5
        %v675 = vor.u32 %v671, %v674
        %v676 = vrot.slane %v675, 4
        %v678 = vshll.u32 %v429, 16
        %v680 = vrot.slane %v678, 5
        %v681 = vsel %vm451, %v676, %v680
        %v682 = vshrl.u32 %v429, 16
        %v684 = vrot.slane %v682, 4
        %v685 = vor.u32 %v684, %v680
        %v686 = vrot.slane %v685, 4
        %v688 = vshll.u32 %v430, 16
        %v690 = vrot.slane %v688, 5
        %v691 = vsel %vm451, %v686, %v690
        %v693 = vshrl.u32 %v431, 16
        %v695 = vrot.slane %v693, 4
        %v696 = vshll.u32 %v431, 16
        %v698 = vrot.slane %v696, 5
        %v699 = vor.u32 %v695, %v698
        %v700 = vrot.slane %v699, 4
        %v702 = vshll.u32 %v432, 16
        %v704 = vrot.slane %v702, 5
        %v705 = vsel %vm451, %v700, %v704
        %v706 = vshrl.u32 %v432, 16
        %v708 = vrot.slane %v706, 4
        %v709 = vor.u32 %v708, %v704
        %v710 = vrot.slane %v709, 4
        %v712 = vshll.u32 %v433, 16
        %v714 = vrot.slane %v712, 5
        %v715 = vsel %vm451, %v710, %v714
        %v717 = vshrl.u32 %v434, 16
        %v719 = vrot.slane %v717, 4
        %v720 = vshll.u32 %v434, 16
        %v722 = vrot.slane %v720, 5
        %v723 = vor.u32 %v719, %v722
        %v724 = vrot.slane %v723, 4
        %v726 = vshll.u32 %v435, 16
        %v728 = vrot.slane %v726, 5
        %v729 = vsel %vm451, %v724, %v728
        %v730 = vshrl.u32 %v435, 16
        %v732 = vrot.slane %v730, 4
        %v733 = vor.u32 %v732, %v728
        %v734 = vrot.slane %v733, 4
        %v736 = vshll.u32 %v436, 16
        %v738 = vrot.slane %v736, 5
        %v739 = vsel %vm451, %v734, %v738
        %v741 = vshrl.u32 %v437, 16
        %v743 = vrot.slane %v741, 4
        %v744 = vshll.u32 %v437, 16
        %v746 = vrot.slane %v744, 5
        %v747 = vor.u32 %v743, %v746
        %v748 = vrot.slane %v747, 4
        %v750 = vshll.u32 %v438, 16
        %v752 = vrot.slane %v750, 5
        %v753 = vsel %vm451, %v748, %v752
        %v754 = vshrl.u32 %v438, 16
        %v756 = vrot.slane %v754, 4
        %v757 = vor.u32 %v756, %v752
        %v758 = vrot.slane %v757, 4
        %v760 = vshll.u32 %v439, 16
        %v762 = vrot.slane %v760, 5
        %v763 = vsel %vm451, %v758, %v762
        %v765 = vshrl.u32 %v440, 16
        %v767 = vrot.slane %v765, 4
        %v768 = vshll.u32 %v440, 16
        %v770 = vrot.slane %v768, 5
        %v771 = vor.u32 %v767, %v770
        %v772 = vrot.slane %v771, 4
        %v774 = vshll.u32 %v441, 16
        %v776 = vrot.slane %v774, 5
        %v777 = vsel %vm451, %v772, %v776
        %v778 = vshrl.u32 %v441, 16
        %v780 = vrot.slane %v778, 4
        %v781 = vor.u32 %v780, %v776
        %v782 = vrot.slane %v781, 4
        %v784 = vshll.u32 %v442, 16
        %v786 = vrot.slane %v784, 5
        %v787 = vsel %vm451, %v782, %v786
        %v789 = vshrl.u32 %v443, 16
        %v791 = vrot.slane %v789, 4
        %v792 = vshll.u32 %v443, 16
        %v794 = vrot.slane %v792, 5
        %v795 = vor.u32 %v791, %v794
        %v796 = vrot.slane %v795, 4
        %v798 = vshll.u32 %v444, 16
        %v800 = vrot.slane %v798, 5
        %v801 = vsel %vm451, %v796, %v800
        %v802 = vshrl.u32 %v444, 16
        %v804 = vrot.slane %v802, 4
        %v805 = vor.u32 %v804, %v800
        %v806 = vrot.slane %v805, 4
        %v808 = vshll.u32 %v445, 16
        %v810 = vrot.slane %v808, 5
        %v811 = vsel %vm451, %v806, %v810
        %v813 = vshrl.u32 %v446, 16
        %v815 = vrot.slane %v813, 4
        %v816 = vshll.u32 %v446, 16
        %v818 = vrot.slane %v816, 5
        %v819 = vor.u32 %v815, %v818
        %v820 = vrot.slane %v819, 4
        %v822 = vshll.u32 %v447, 16
        %v824 = vrot.slane %v822, 5
        %v825 = vsel %vm451, %v820, %v824
        %v826 = vshrl.u32 %v447, 16
        %v828 = vrot.slane %v826, 4
        %v829 = vor.u32 %v828, %v824
        %v830 = vrot.slane %v829, 4
        %v832 = vshll.u32 %v448, 16
        %v834 = vrot.slane %v832, 5
        %v835 = vsel %vm451, %v830, %v834
        %v836 = vunpack.c.l.b16 %v465
        %v837 = vunpack.c.l.b16 %v475
        %v838 = vunpack.c.l.b16 %v489
        %v839 = vunpack.c.l.b16 %v499
        %v840 = vunpack.c.l.b16 %v513
        %v841 = vunpack.c.l.b16 %v523
        %v842 = vunpack.c.l.b16 %v537
        %v843 = vunpack.c.l.b16 %v547
        %v844 = vunpack.c.l.b16 %v561
        %v845 = vunpack.c.l.b16 %v571
        %v846 = vunpack.c.l.b16 %v585
        %v847 = vunpack.c.l.b16 %v595
        %v848 = vunpack.c.l.b16 %v609
        %v849 = vunpack.c.l.b16 %v619
        %v850 = vunpack.c.l.b16 %v633
        %v851 = vunpack.c.l.b16 %v643
        %v852 = vunpack.c.l.b16 %v657
        %v853 = vunpack.c.l.b16 %v667
        %v854 = vunpack.c.l.b16 %v681
        %v855 = vunpack.c.l.b16 %v691
        %v856 = vunpack.c.l.b16 %v705
        %v857 = vunpack.c.l.b16 %v715
        %v858 = vunpack.c.l.b16 %v729
        %v859 = vunpack.c.l.b16 %v739
        %v860 = vunpack.c.l.b16 %v753
        %v861 = vunpack.c.l.b16 %v763
        %v862 = vunpack.c.l.b16 %v777
        %v863 = vunpack.c.l.b16 %v787
        %v864 = vunpack.c.l.b16 %v801
        %v865 = vunpack.c.l.b16 %v811
        %v866 = vunpack.c.l.b16 %v825
        %v867 = vunpack.c.l.b16 %v835
        %v868 = vpack.c.b16 %v837, %v836
        %v869 = vpack.c.b16 %v839, %v838
        %v870 = vpack.c.b16 %v841, %v840
        %v871 = vpack.c.b16 %v843, %v842
        %v872 = vpack.c.b16 %v845, %v844
        %v873 = vpack.c.b16 %v847, %v846
        %v874 = vpack.c.b16 %v849, %v848
        %v875 = vpack.c.b16 %v851, %v850
        %v876 = vpack.c.b16 %v853, %v852
        %v877 = vpack.c.b16 %v855, %v854
        %v878 = vpack.c.b16 %v857, %v856
        %v879 = vpack.c.b16 %v859, %v858
        %v880 = vpack.c.b16 %v861, %v860
        %v881 = vpack.c.b16 %v863, %v862
        %v882 = vpack.c.b16 %v865, %v864
        %v883 = vpack.c.b16 %v867, %v866
        %884 = vrot.lane.b32.xlu0 %v868, 4
        %v885 = vpop.permute.xlu0 %884
        %886 = vrot.lane.b32.xlu0 %v869, 4
        %v887 = vpop.permute.xlu0 %886
        %888 = vrot.lane.b32.xlu0 %v870, 4
        %v889 = vpop.permute.xlu0 %888
        %890 = vrot.lane.b32.xlu0 %v871, 4
        %v891 = vpop.permute.xlu0 %890
        %892 = vrot.lane.b32.xlu0 %v872, 4
        %v893 = vpop.permute.xlu0 %892
        %894 = vrot.lane.b32.xlu0 %v873, 4
        %v895 = vpop.permute.xlu0 %894
        %896 = vrot.lane.b32.xlu0 %v874, 4
        %v897 = vpop.permute.xlu0 %896
        %898 = vrot.lane.b32.xlu0 %v875, 4
        %v899 = vpop.permute.xlu0 %898
        %900 = vrot.lane.b32.xlu0 %v876, 4
        %v901 = vpop.permute.xlu0 %900
        %902 = vrot.lane.b32.xlu0 %v877, 4
        %v903 = vpop.permute.xlu0 %902
        %904 = vrot.lane.b32.xlu0 %v878, 4
        %v905 = vpop.permute.xlu0 %904
        %906 = vrot.lane.b32.xlu0 %v879, 4
        %v907 = vpop.permute.xlu0 %906
        %908 = vrot.lane.b32.xlu0 %v880, 4
        %v909 = vpop.permute.xlu0 %908
        %910 = vrot.lane.b32.xlu0 %v881, 4
        %v911 = vpop.permute.xlu0 %910
        %912 = vrot.lane.b32.xlu0 %v882, 4
        %v913 = vpop.permute.xlu0 %912
        %914 = vrot.lane.b32.xlu0 %v883, 4
        %v915 = vpop.permute.xlu0 %914
        %vm932 = vcmask 64544
        %933 = vst.msk [vmem:[#allocation2] sm:$0xff] %vm932, %v885
        %934 = vst.msk [vmem:[#allocation2 + $0x8] sm:$0xff] %vm932, %v887
        %935 = vst.msk [vmem:[#allocation2 + $0x10] sm:$0xff] %vm932, %v889
        %936 = vst.msk [vmem:[#allocation2 + $0x18] sm:$0xff] %vm932, %v891
        %937 = vst.msk [vmem:[#allocation2 + $0x20] sm:$0xff] %vm932, %v893
        %938 = vst.msk [vmem:[#allocation2 + $0x28] sm:$0xff] %vm932, %v895
        %939 = vst.msk [vmem:[#allocation2 + $0x30] sm:$0xff] %vm932, %v897
        %940 = vst.msk [vmem:[#allocation2 + $0x38] sm:$0xff] %vm932, %v899
        %941 = vst.msk [vmem:[#allocation2 + $0x40] sm:$0xff] %vm932, %v901
        %942 = vst.msk [vmem:[#allocation2 + $0x48] sm:$0xff] %vm932, %v903
        %943 = vst.msk [vmem:[#allocation2 + $0x50] sm:$0xff] %vm932, %v905
        %944 = vst.msk [vmem:[#allocation2 + $0x58] sm:$0xff] %vm932, %v907
        %945 = vst.msk [vmem:[#allocation2 + $0x60] sm:$0xff] %vm932, %v909
        %946 = vst.msk [vmem:[#allocation2 + $0x68] sm:$0xff] %vm932, %v911
        %947 = vst.msk [vmem:[#allocation2 + $0x70] sm:$0xff] %vm932, %v913
        %948 = vst.msk [vmem:[#allocation2 + $0x78] sm:$0xff] %vm932, %v915
        %v949 = vld [vmem:[%s244] sm:$0xe]
        %v950 = vld [vmem:[%s244 + $0x4] sm:$0xf]
        %v951 = vld [vmem:[%s244 + $0x8] sm:$0x1]
        %v952 = vld [vmem:[%s244 + $0xc] sm:$0xe]
        %v953 = vld [vmem:[%s244 + $0x10] sm:$0xf]
        %v954 = vld [vmem:[%s244 + $0x14] sm:$0x1]
        %v955 = vld [vmem:[%s244 + $0x18] sm:$0xe]
        %v956 = vld [vmem:[%s244 + $0x1c] sm:$0xf]
        %v957 = vld [vmem:[%s244 + $0x20] sm:$0x1]
        %v958 = vld [vmem:[%s244 + $0x24] sm:$0xe]
        %v959 = vld [vmem:[%s244 + $0x28] sm:$0xf]
        %v960 = vld [vmem:[%s244 + $0x2c] sm:$0x1]
        %v961 = vld [vmem:[%s244 + $0x30] sm:$0xe]
        %v962 = vld [vmem:[%s244 + $0x34] sm:$0xf]
        %v963 = vld [vmem:[%s244 + $0x38] sm:$0x1]
        %v964 = vld [vmem:[%s244 + $0x3c] sm:$0xe]
        %v965 = vld [vmem:[%s244 + $0x40] sm:$0xf]
        %v966 = vld [vmem:[%s244 + $0x44] sm:$0x1]
        %v967 = vld [vmem:[%s244 + $0x48] sm:$0xe]
        %v968 = vld [vmem:[%s244 + $0x4c] sm:$0xf]
        %v969 = vld [vmem:[%s244 + $0x50] sm:$0x1]
        %v970 = vld [vmem:[%s244 + $0x54] sm:$0xe]
        %v971 = vld [vmem:[%s244 + $0x58] sm:$0xf]
        %v972 = vld [vmem:[%s244 + $0x5c] sm:$0x1]
        %v973 = vld [vmem:[%s244 + $0x60] sm:$0xe]
        %v974 = vld [vmem:[%s244 + $0x64] sm:$0xf]
        %v975 = vld [vmem:[%s244 + $0x68] sm:$0x1]
        %v976 = vld [vmem:[%s244 + $0x6c] sm:$0xe]
        %v977 = vld [vmem:[%s244 + $0x70] sm:$0xf]
        %v978 = vld [vmem:[%s244 + $0x74] sm:$0x1]
        %v979 = vld [vmem:[%s244 + $0x78] sm:$0xe]
        %v980 = vld [vmem:[%s244 + $0x7c] sm:$0xf]
        %v981 = vld [vmem:[%s244 + $0x80] sm:$0x1]
        %v982 = vld [vmem:[%s244 + $0x84] sm:$0xe]
        %v983 = vld [vmem:[%s244 + $0x88] sm:$0xf]
        %v984 = vld [vmem:[%s244 + $0x8c] sm:$0x1]
        %v985 = vld [vmem:[%s244 + $0x90] sm:$0xe]
        %v986 = vld [vmem:[%s244 + $0x94] sm:$0xf]
        %v987 = vld [vmem:[%s244 + $0x98] sm:$0x1]
        %v988 = vld [vmem:[%s244 + $0x9c] sm:$0xe]
        %v989 = vld [vmem:[%s244 + $0xa0] sm:$0xf]
        %v990 = vld [vmem:[%s244 + $0xa4] sm:$0x1]
        %v991 = vld [vmem:[%s244 + $0xa8] sm:$0xe]
        %v992 = vld [vmem:[%s244 + $0xac] sm:$0xf]
        %v993 = vld [vmem:[%s244 + $0xb0] sm:$0x1]
        %v994 = vld [vmem:[%s244 + $0xb4] sm:$0xe]
        %v995 = vld [vmem:[%s244 + $0xb8] sm:$0xf]
        %v996 = vld [vmem:[%s244 + $0xbc] sm:$0x1]
        %vm1045 = vcmask 1042432
        %vm1046 = vcmask 1046532
        %vm1047 = vmor %vm1045, %vm1046
        %v1048 = vrot.slane %v949, 5
        %v1049 = vrot.slane %v1048, 4
        %v1050 = vrot.slane %v950, 5
        %v1051 = vsel %vm1047, %v1049, %v1050
        %v1052 = vrot.slane %v1050, 4
        %v1053 = vrot.slane %v951, 5
        %v1054 = vsel %vm1047, %v1052, %v1053
        %v1055 = vrot.slane %v952, 5
        %v1056 = vrot.slane %v1055, 4
        %v1057 = vrot.slane %v953, 5
        %v1058 = vsel %vm1047, %v1056, %v1057
        %v1059 = vrot.slane %v1057, 4
        %v1060 = vrot.slane %v954, 5
        %v1061 = vsel %vm1047, %v1059, %v1060
        %v1062 = vrot.slane %v955, 5
        %v1063 = vrot.slane %v1062, 4
        %v1064 = vrot.slane %v956, 5
        %v1065 = vsel %vm1047, %v1063, %v1064
        %v1066 = vrot.slane %v1064, 4
        %v1067 = vrot.slane %v957, 5
        %v1068 = vsel %vm1047, %v1066, %v1067
        %v1069 = vrot.slane %v958, 5
        %v1070 = vrot.slane %v1069, 4
        %v1071 = vrot.slane %v959, 5
        %v1072 = vsel %vm1047, %v1070, %v1071
        %v1073 = vrot.slane %v1071, 4
        %v1074 = vrot.slane %v960, 5
        %v1075 = vsel %vm1047, %v1073, %v1074
        %v1076 = vrot.slane %v961, 5
        %v1077 = vrot.slane %v1076, 4
        %v1078 = vrot.slane %v962, 5
        %v1079 = vsel %vm1047, %v1077, %v1078
        %v1080 = vrot.slane %v1078, 4
        %v1081 = vrot.slane %v963, 5
        %v1082 = vsel %vm1047, %v1080, %v1081
        %v1083 = vrot.slane %v964, 5
        %v1084 = vrot.slane %v1083, 4
        %v1085 = vrot.slane %v965, 5
        %v1086 = vsel %vm1047, %v1084, %v1085
        %v1087 = vrot.slane %v1085, 4
        %v1088 = vrot.slane %v966, 5
        %v1089 = vsel %vm1047, %v1087, %v1088
        %v1090 = vrot.slane %v967, 5
        %v1091 = vrot.slane %v1090, 4
        %v1092 = vrot.slane %v968, 5
        %v1093 = vsel %vm1047, %v1091, %v1092
        %v1094 = vrot.slane %v1092, 4
        %v1095 = vrot.slane %v969, 5
        %v1096 = vsel %vm1047, %v1094, %v1095
        %v1097 = vrot.slane %v970, 5
        %v1098 = vrot.slane %v1097, 4
        %v1099 = vrot.slane %v971, 5
        %v1100 = vsel %vm1047, %v1098, %v1099
        %v1101 = vrot.slane %v1099, 4
        %v1102 = vrot.slane %v972, 5
        %v1103 = vsel %vm1047, %v1101, %v1102
        %v1104 = vrot.slane %v973, 5
        %v1105 = vrot.slane %v1104, 4
        %v1106 = vrot.slane %v974, 5
        %v1107 = vsel %vm1047, %v1105, %v1106
        %v1108 = vrot.slane %v1106, 4
        %v1109 = vrot.slane %v975, 5
        %v1110 = vsel %vm1047, %v1108, %v1109
        %v1111 = vrot.slane %v976, 5
        %v1112 = vrot.slane %v1111, 4
        %v1113 = vrot.slane %v977, 5
        %v1114 = vsel %vm1047, %v1112, %v1113
        %v1115 = vrot.slane %v1113, 4
        %v1116 = vrot.slane %v978, 5
        %v1117 = vsel %vm1047, %v1115, %v1116
        %v1118 = vrot.slane %v979, 5
        %v1119 = vrot.slane %v1118, 4
        %v1120 = vrot.slane %v980, 5
        %v1121 = vsel %vm1047, %v1119, %v1120
        %v1122 = vrot.slane %v1120, 4
        %v1123 = vrot.slane %v981, 5
        %v1124 = vsel %vm1047, %v1122, %v1123
        %v1125 = vrot.slane %v982, 5
        %v1126 = vrot.slane %v1125, 4
        %v1127 = vrot.slane %v983, 5
        %v1128 = vsel %vm1047, %v1126, %v1127
        %v1129 = vrot.slane %v1127, 4
        %v1130 = vrot.slane %v984, 5
        %v1131 = vsel %vm1047, %v1129, %v1130
        %v1132 = vrot.slane %v985, 5
        %v1133 = vrot.slane %v1132, 4
        %v1134 = vrot.slane %v986, 5
        %v1135 = vsel %vm1047, %v1133, %v1134
        %v1136 = vrot.slane %v1134, 4
        %v1137 = vrot.slane %v987, 5
        %v1138 = vsel %vm1047, %v1136, %v1137
        %v1139 = vrot.slane %v988, 5
        %v1140 = vrot.slane %v1139, 4
        %v1141 = vrot.slane %v989, 5
        %v1142 = vsel %vm1047, %v1140, %v1141
        %v1143 = vrot.slane %v1141, 4
        %v1144 = vrot.slane %v990, 5
        %v1145 = vsel %vm1047, %v1143, %v1144
        %v1146 = vrot.slane %v991, 5
        %v1147 = vrot.slane %v1146, 4
        %v1148 = vrot.slane %v992, 5
        %v1149 = vsel %vm1047, %v1147, %v1148
        %v1150 = vrot.slane %v1148, 4
        %v1151 = vrot.slane %v993, 5
        %v1152 = vsel %vm1047, %v1150, %v1151
        %v1153 = vrot.slane %v994, 5
        %v1154 = vrot.slane %v1153, 4
        %v1155 = vrot.slane %v995, 5
        %v1156 = vsel %vm1047, %v1154, %v1155
        %v1157 = vrot.slane %v1155, 4
        %v1158 = vrot.slane %v996, 5
        %v1159 = vsel %vm1047, %v1157, %v1158
        %v1160 = vunpack.c.l.b16 %v1051
        %v1161 = vunpack.c.l.b16 %v1054
        %v1162 = vunpack.c.l.b16 %v1058
        %v1163 = vunpack.c.l.b16 %v1061
        %v1164 = vunpack.c.l.b16 %v1065
        %v1165 = vunpack.c.l.b16 %v1068
        %v1166 = vunpack.c.l.b16 %v1072
        %v1167 = vunpack.c.l.b16 %v1075
        %v1168 = vunpack.c.l.b16 %v1079
        %v1169 = vunpack.c.l.b16 %v1082
        %v1170 = vunpack.c.l.b16 %v1086
        %v1171 = vunpack.c.l.b16 %v1089
        %v1172 = vunpack.c.l.b16 %v1093
        %v1173 = vunpack.c.l.b16 %v1096
        %v1174 = vunpack.c.l.b16 %v1100
        %v1175 = vunpack.c.l.b16 %v1103
        %v1176 = vunpack.c.l.b16 %v1107
        %v1177 = vunpack.c.l.b16 %v1110
        %v1178 = vunpack.c.l.b16 %v1114
        %v1179 = vunpack.c.l.b16 %v1117
        %v1180 = vunpack.c.l.b16 %v1121
        %v1181 = vunpack.c.l.b16 %v1124
        %v1182 = vunpack.c.l.b16 %v1128
        %v1183 = vunpack.c.l.b16 %v1131
        %v1184 = vunpack.c.l.b16 %v1135
        %v1185 = vunpack.c.l.b16 %v1138
        %v1186 = vunpack.c.l.b16 %v1142
        %v1187 = vunpack.c.l.b16 %v1145
        %v1188 = vunpack.c.l.b16 %v1149
        %v1189 = vunpack.c.l.b16 %v1152
        %v1190 = vunpack.c.l.b16 %v1156
        %v1191 = vunpack.c.l.b16 %v1159
        %v1192 = vpack.c.b16 %v1161, %v1160
        %v1193 = vpack.c.b16 %v1163, %v1162
        %v1194 = vpack.c.b16 %v1165, %v1164
        %v1195 = vpack.c.b16 %v1167, %v1166
        %v1196 = vpack.c.b16 %v1169, %v1168
        %v1197 = vpack.c.b16 %v1171, %v1170
        %v1198 = vpack.c.b16 %v1173, %v1172
        %v1199 = vpack.c.b16 %v1175, %v1174
        %v1200 = vpack.c.b16 %v1177, %v1176
        %v1201 = vpack.c.b16 %v1179, %v1178
        %v1202 = vpack.c.b16 %v1181, %v1180
        %v1203 = vpack.c.b16 %v1183, %v1182
        %v1204 = vpack.c.b16 %v1185, %v1184
        %v1205 = vpack.c.b16 %v1187, %v1186
        %v1206 = vpack.c.b16 %v1189, %v1188
        %v1207 = vpack.c.b16 %v1191, %v1190
        %1208 = vrot.lane.b32.xlu0 %v1192, 8
        %v1209 = vpop.permute.xlu0 %1208
        %1210 = vrot.lane.b32.xlu0 %v1193, 8
        %v1211 = vpop.permute.xlu0 %1210
        %1212 = vrot.lane.b32.xlu0 %v1194, 8
        %v1213 = vpop.permute.xlu0 %1212
        %1214 = vrot.lane.b32.xlu0 %v1195, 8
        %v1215 = vpop.permute.xlu0 %1214
        %1216 = vrot.lane.b32.xlu0 %v1196, 8
        %v1217 = vpop.permute.xlu0 %1216
        %1218 = vrot.lane.b32.xlu0 %v1197, 8
        %v1219 = vpop.permute.xlu0 %1218
        %1220 = vrot.lane.b32.xlu0 %v1198, 8
        %v1221 = vpop.permute.xlu0 %1220
        %1222 = vrot.lane.b32.xlu0 %v1199, 8
        %v1223 = vpop.permute.xlu0 %1222
        %1224 = vrot.lane.b32.xlu0 %v1200, 8
        %v1225 = vpop.permute.xlu0 %1224
        %1226 = vrot.lane.b32.xlu0 %v1201, 8
        %v1227 = vpop.permute.xlu0 %1226
        %1228 = vrot.lane.b32.xlu0 %v1202, 8
        %v1229 = vpop.permute.xlu0 %1228
        %1230 = vrot.lane.b32.xlu0 %v1203, 8
        %v1231 = vpop.permute.xlu0 %1230
        %1232 = vrot.lane.b32.xlu0 %v1204, 8
        %v1233 = vpop.permute.xlu0 %1232
        %1234 = vrot.lane.b32.xlu0 %v1205, 8
        %v1235 = vpop.permute.xlu0 %1234
        %1236 = vrot.lane.b32.xlu0 %v1206, 8
        %v1237 = vpop.permute.xlu0 %1236
        %1238 = vrot.lane.b32.xlu0 %v1207, 8
        %v1239 = vpop.permute.xlu0 %1238
        %vm1256 = vcmask 97344
        %1257 = vst.msk [vmem:[#allocation2] sm:$0xff] %vm1256, %v1209
        %1258 = vst.msk [vmem:[#allocation2 + $0x8] sm:$0xff] %vm1256, %v1211
        %1259 = vst.msk [vmem:[#allocation2 + $0x10] sm:$0xff] %vm1256, %v1213
        %1260 = vst.msk [vmem:[#allocation2 + $0x18] sm:$0xff] %vm1256, %v1215
        %1261 = vst.msk [vmem:[#allocation2 + $0x20] sm:$0xff] %vm1256, %v1217
        %1262 = vst.msk [vmem:[#allocation2 + $0x28] sm:$0xff] %vm1256, %v1219
        %1263 = vst.msk [vmem:[#allocation2 + $0x30] sm:$0xff] %vm1256, %v1221
        %1264 = vst.msk [vmem:[#allocation2 + $0x38] sm:$0xff] %vm1256, %v1223
        %1265 = vst.msk [vmem:[#allocation2 + $0x40] sm:$0xff] %vm1256, %v1225
        %1266 = vst.msk [vmem:[#allocation2 + $0x48] sm:$0xff] %vm1256, %v1227
        %1267 = vst.msk [vmem:[#allocation2 + $0x50] sm:$0xff] %vm1256, %v1229
        %1268 = vst.msk [vmem:[#allocation2 + $0x58] sm:$0xff] %vm1256, %v1231
        %1269 = vst.msk [vmem:[#allocation2 + $0x60] sm:$0xff] %vm1256, %v1233
        %1270 = vst.msk [vmem:[#allocation2 + $0x68] sm:$0xff] %vm1256, %v1235
        %1271 = vst.msk [vmem:[#allocation2 + $0x70] sm:$0xff] %vm1256, %v1237
        %1272 = vst.msk [vmem:[#allocation2 + $0x78] sm:$0xff] %vm1256, %v1239
        %s1273 = scalar_lea.vmem %s244, 12
        %v1274 = vld [vmem:[%s1273] sm:$0xf]
        %v1275 = vld [vmem:[%s1273 + $0x4] sm:$0xf]
        %v1276 = vld [vmem:[%s1273 + $0xc] sm:$0xf]
        %v1277 = vld [vmem:[%s1273 + $0x10] sm:$0xf]
        %v1278 = vld [vmem:[%s1273 + $0x18] sm:$0xf]
        %v1279 = vld [vmem:[%s1273 + $0x1c] sm:$0xf]
        %v1280 = vld [vmem:[%s1273 + $0x24] sm:$0xf]
        %v1281 = vld [vmem:[%s1273 + $0x28] sm:$0xf]
        %v1282 = vld [vmem:[%s1273 + $0x30] sm:$0xf]
        %v1283 = vld [vmem:[%s1273 + $0x34] sm:$0xf]
        %v1284 = vld [vmem:[%s1273 + $0x3c] sm:$0xf]
        %v1285 = vld [vmem:[%s1273 + $0x40] sm:$0xf]
        %v1286 = vld [vmem:[%s1273 + $0x48] sm:$0xf]
        %v1287 = vld [vmem:[%s1273 + $0x4c] sm:$0xf]
        %v1288 = vld [vmem:[%s1273 + $0x54] sm:$0xf]
        %v1289 = vld [vmem:[%s1273 + $0x58] sm:$0xf]
        %v1290 = vld [vmem:[%s1273 + $0x60] sm:$0xf]
        %v1291 = vld [vmem:[%s1273 + $0x64] sm:$0xf]
        %v1292 = vld [vmem:[%s1273 + $0x6c] sm:$0xf]
        %v1293 = vld [vmem:[%s1273 + $0x70] sm:$0xf]
        %v1294 = vld [vmem:[%s1273 + $0x78] sm:$0xf]
        %v1295 = vld [vmem:[%s1273 + $0x7c] sm:$0xf]
        %v1296 = vld [vmem:[%s1273 + $0x84] sm:$0xf]
        %v1297 = vld [vmem:[%s1273 + $0x88] sm:$0xf]
        %v1298 = vld [vmem:[%s1273 + $0x90] sm:$0xf]
        %v1299 = vld [vmem:[%s1273 + $0x94] sm:$0xf]
        %v1300 = vld [vmem:[%s1273 + $0x9c] sm:$0xf]
        %v1301 = vld [vmem:[%s1273 + $0xa0] sm:$0xf]
        %v1302 = vld [vmem:[%s1273 + $0xa8] sm:$0xf]
        %v1303 = vld [vmem:[%s1273 + $0xac] sm:$0xf]
        %v1304 = vld [vmem:[%s1273 + $0xb4] sm:$0xf]
        %v1305 = vld [vmem:[%s1273 + $0xb8] sm:$0xf]
        %v1338 = vunpack.c.l.b16 %v1274
        %v1339 = vunpack.c.l.b16 %v1275
        %v1340 = vunpack.c.l.b16 %v1276
        %v1341 = vunpack.c.l.b16 %v1277
        %v1342 = vunpack.c.l.b16 %v1278
        %v1343 = vunpack.c.l.b16 %v1279
        %v1344 = vunpack.c.l.b16 %v1280
        %v1345 = vunpack.c.l.b16 %v1281
        %v1346 = vunpack.c.l.b16 %v1282
        %v1347 = vunpack.c.l.b16 %v1283
        %v1348 = vunpack.c.l.b16 %v1284
        %v1349 = vunpack.c.l.b16 %v1285
        %v1350 = vunpack.c.l.b16 %v1286
        %v1351 = vunpack.c.l.b16 %v1287
        %v1352 = vunpack.c.l.b16 %v1288
        %v1353 = vunpack.c.l.b16 %v1289
        %v1354 = vunpack.c.l.b16 %v1290
        %v1355 = vunpack.c.l.b16 %v1291
        %v1356 = vunpack.c.l.b16 %v1292
        %v1357 = vunpack.c.l.b16 %v1293
        %v1358 = vunpack.c.l.b16 %v1294
        %v1359 = vunpack.c.l.b16 %v1295
        %v1360 = vunpack.c.l.b16 %v1296
        %v1361 = vunpack.c.l.b16 %v1297
        %v1362 = vunpack.c.l.b16 %v1298
        %v1363 = vunpack.c.l.b16 %v1299
        %v1364 = vunpack.c.l.b16 %v1300
        %v1365 = vunpack.c.l.b16 %v1301
        %v1366 = vunpack.c.l.b16 %v1302
        %v1367 = vunpack.c.l.b16 %v1303
        %v1368 = vunpack.c.l.b16 %v1304
        %v1369 = vunpack.c.l.b16 %v1305
        %v1370 = vpack.c.b16 %v1339, %v1338
        %v1371 = vpack.c.b16 %v1341, %v1340
        %v1372 = vpack.c.b16 %v1343, %v1342
        %v1373 = vpack.c.b16 %v1345, %v1344
        %v1374 = vpack.c.b16 %v1347, %v1346
        %v1375 = vpack.c.b16 %v1349, %v1348
        %v1376 = vpack.c.b16 %v1351, %v1350
        %v1377 = vpack.c.b16 %v1353, %v1352
        %v1378 = vpack.c.b16 %v1355, %v1354
        %v1379 = vpack.c.b16 %v1357, %v1356
        %v1380 = vpack.c.b16 %v1359, %v1358
        %v1381 = vpack.c.b16 %v1361, %v1360
        %v1382 = vpack.c.b16 %v1363, %v1362
        %v1383 = vpack.c.b16 %v1365, %v1364
        %v1384 = vpack.c.b16 %v1367, %v1366
        %v1385 = vpack.c.b16 %v1369, %v1368
        %1386 = vrot.lane.b32.xlu0 %v1370, 12
        %v1387 = vpop.permute.xlu0 %1386
        %1388 = vrot.lane.b32.xlu0 %v1371, 12
        %v1389 = vpop.permute.xlu0 %1388
        %1390 = vrot.lane.b32.xlu0 %v1372, 12
        %v1391 = vpop.permute.xlu0 %1390
        %1392 = vrot.lane.b32.xlu0 %v1373, 12
        %v1393 = vpop.permute.xlu0 %1392
        %1394 = vrot.lane.b32.xlu0 %v1374, 12
        %v1395 = vpop.permute.xlu0 %1394
        %1396 = vrot.lane.b32.xlu0 %v1375, 12
        %v1397 = vpop.permute.xlu0 %1396
        %1398 = vrot.lane.b32.xlu0 %v1376, 12
        %v1399 = vpop.permute.xlu0 %1398
        %1400 = vrot.lane.b32.xlu0 %v1377, 12
        %v1401 = vpop.permute.xlu0 %1400
        %1402 = vrot.lane.b32.xlu0 %v1378, 12
        %v1403 = vpop.permute.xlu0 %1402
        %1404 = vrot.lane.b32.xlu0 %v1379, 12
        %v1405 = vpop.permute.xlu0 %1404
        %1406 = vrot.lane.b32.xlu0 %v1380, 12
        %v1407 = vpop.permute.xlu0 %1406
        %1408 = vrot.lane.b32.xlu0 %v1381, 12
        %v1409 = vpop.permute.xlu0 %1408
        %1410 = vrot.lane.b32.xlu0 %v1382, 12
        %v1411 = vpop.permute.xlu0 %1410
        %1412 = vrot.lane.b32.xlu0 %v1383, 12
        %v1413 = vpop.permute.xlu0 %1412
        %1414 = vrot.lane.b32.xlu0 %v1384, 12
        %v1415 = vpop.permute.xlu0 %1414
        %1416 = vrot.lane.b32.xlu0 %v1385, 12
        %v1417 = vpop.permute.xlu0 %1416
        %vm1434 = vcmask 130144
        %1435 = vst.msk [vmem:[#allocation2] sm:$0xff] %vm1434, %v1387
        %1436 = vst.msk [vmem:[#allocation2 + $0x8] sm:$0xff] %vm1434, %v1389
        %1437 = vst.msk [vmem:[#allocation2 + $0x10] sm:$0xff] %vm1434, %v1391
        %1438 = vst.msk [vmem:[#allocation2 + $0x18] sm:$0xff] %vm1434, %v1393
        %1439 = vst.msk [vmem:[#allocation2 + $0x20] sm:$0xff] %vm1434, %v1395
        %1440 = vst.msk [vmem:[#allocation2 + $0x28] sm:$0xff] %vm1434, %v1397
        %1441 = vst.msk [vmem:[#allocation2 + $0x30] sm:$0xff] %vm1434, %v1399
        %1442 = vst.msk [vmem:[#allocation2 + $0x38] sm:$0xff] %vm1434, %v1401
        %1443 = vst.msk [vmem:[#allocation2 + $0x40] sm:$0xff] %vm1434, %v1403
        %1444 = vst.msk [vmem:[#allocation2 + $0x48] sm:$0xff] %vm1434, %v1405
        %1445 = vst.msk [vmem:[#allocation2 + $0x50] sm:$0xff] %vm1434, %v1407
        %1446 = vst.msk [vmem:[#allocation2 + $0x58] sm:$0xff] %vm1434, %v1409
        %1447 = vst.msk [vmem:[#allocation2 + $0x60] sm:$0xff] %vm1434, %v1411
        %1448 = vst.msk [vmem:[#allocation2 + $0x68] sm:$0xff] %vm1434, %v1413
        %1449 = vst.msk [vmem:[#allocation2 + $0x70] sm:$0xff] %vm1434, %v1415
        %1450 = vst.msk [vmem:[#allocation2 + $0x78] sm:$0xff] %vm1434, %v1417
        %v1451 = vld [vmem:[%s1273] sm:$0xf]
        %v1452 = vld [vmem:[%s1273 + $0x4] sm:$0xf]
        %v1453 = vld [vmem:[%s1273 + $0x8] sm:$0x1]
        %v1454 = vld [vmem:[%s1273 + $0xc] sm:$0xf]
        %v1455 = vld [vmem:[%s1273 + $0x10] sm:$0xf]
        %v1456 = vld [vmem:[%s1273 + $0x14] sm:$0x1]
        %v1457 = vld [vmem:[%s1273 + $0x18] sm:$0xf]
        %v1458 = vld [vmem:[%s1273 + $0x1c] sm:$0xf]
        %v1459 = vld [vmem:[%s1273 + $0x20] sm:$0x1]
        %v1460 = vld [vmem:[%s1273 + $0x24] sm:$0xf]
        %v1461 = vld [vmem:[%s1273 + $0x28] sm:$0xf]
        %v1462 = vld [vmem:[%s1273 + $0x2c] sm:$0x1]
        %v1463 = vld [vmem:[%s1273 + $0x30] sm:$0xf]
        %v1464 = vld [vmem:[%s1273 + $0x34] sm:$0xf]
        %v1465 = vld [vmem:[%s1273 + $0x38] sm:$0x1]
        %v1466 = vld [vmem:[%s1273 + $0x3c] sm:$0xf]
        %v1467 = vld [vmem:[%s1273 + $0x40] sm:$0xf]
        %v1468 = vld [vmem:[%s1273 + $0x44] sm:$0x1]
        %v1469 = vld [vmem:[%s1273 + $0x48] sm:$0xf]
        %v1470 = vld [vmem:[%s1273 + $0x4c] sm:$0xf]
        %v1471 = vld [vmem:[%s1273 + $0x50] sm:$0x1]
        %v1472 = vld [vmem:[%s1273 + $0x54] sm:$0xf]
        %v1473 = vld [vmem:[%s1273 + $0x58] sm:$0xf]
        %v1474 = vld [vmem:[%s1273 + $0x5c] sm:$0x1]
        %v1475 = vld [vmem:[%s1273 + $0x60] sm:$0xf]
        %v1476 = vld [vmem:[%s1273 + $0x64] sm:$0xf]
        %v1477 = vld [vmem:[%s1273 + $0x68] sm:$0x1]
        %v1478 = vld [vmem:[%s1273 + $0x6c] sm:$0xf]
        %v1479 = vld [vmem:[%s1273 + $0x70] sm:$0xf]
        %v1480 = vld [vmem:[%s1273 + $0x74] sm:$0x1]
        %v1481 = vld [vmem:[%s1273 + $0x78] sm:$0xf]
        %v1482 = vld [vmem:[%s1273 + $0x7c] sm:$0xf]
        %v1483 = vld [vmem:[%s1273 + $0x80] sm:$0x1]
        %v1484 = vld [vmem:[%s1273 + $0x84] sm:$0xf]
        %v1485 = vld [vmem:[%s1273 + $0x88] sm:$0xf]
        %v1486 = vld [vmem:[%s1273 + $0x8c] sm:$0x1]
        %v1487 = vld [vmem:[%s1273 + $0x90] sm:$0xf]
        %v1488 = vld [vmem:[%s1273 + $0x94] sm:$0xf]
        %v1489 = vld [vmem:[%s1273 + $0x98] sm:$0x1]
        %v1490 = vld [vmem:[%s1273 + $0x9c] sm:$0xf]
        %v1491 = vld [vmem:[%s1273 + $0xa0] sm:$0xf]
        %v1492 = vld [vmem:[%s1273 + $0xa4] sm:$0x1]
        %v1493 = vld [vmem:[%s1273 + $0xa8] sm:$0xf]
        %v1494 = vld [vmem:[%s1273 + $0xac] sm:$0xf]
        %v1495 = vld [vmem:[%s1273 + $0xb0] sm:$0x1]
        %v1496 = vld [vmem:[%s1273 + $0xb4] sm:$0xf]
        %v1497 = vld [vmem:[%s1273 + $0xb8] sm:$0xf]
        %v1498 = vld [vmem:[%s1273 + $0xbc] sm:$0x1]
        %v1500 = vshrl.u32 %v1451, 16
        %v1502 = vrot.slane %v1500, 4
        %v1503 = vshll.u32 %v1451, 16
        %v1505 = vrot.slane %v1503, 5
        %v1506 = vor.u32 %v1502, %v1505
        %v1507 = vrot.slane %v1506, 4
        %v1509 = vshll.u32 %v1452, 16
        %v1511 = vrot.slane %v1509, 5
        %v1512 = vsel %vm451, %v1507, %v1511
        %v1513 = vshrl.u32 %v1452, 16
        %v1515 = vrot.slane %v1513, 4
        %v1516 = vor.u32 %v1515, %v1511
        %v1517 = vrot.slane %v1516, 4
        %v1519 = vshll.u32 %v1453, 16
        %v1521 = vrot.slane %v1519, 5
        %v1522 = vsel %vm451, %v1517, %v1521
        %v1524 = vshrl.u32 %v1454, 16
        %v1526 = vrot.slane %v1524, 4
        %v1527 = vshll.u32 %v1454, 16
        %v1529 = vrot.slane %v1527, 5
        %v1530 = vor.u32 %v1526, %v1529
        %v1531 = vrot.slane %v1530, 4
        %v1533 = vshll.u32 %v1455, 16
        %v1535 = vrot.slane %v1533, 5
        %v1536 = vsel %vm451, %v1531, %v1535
        %v1537 = vshrl.u32 %v1455, 16
        %v1539 = vrot.slane %v1537, 4
        %v1540 = vor.u32 %v1539, %v1535
        %v1541 = vrot.slane %v1540, 4
        %v1543 = vshll.u32 %v1456, 16
        %v1545 = vrot.slane %v1543, 5
        %v1546 = vsel %vm451, %v1541, %v1545
        %v1548 = vshrl.u32 %v1457, 16
        %v1550 = vrot.slane %v1548, 4
        %v1551 = vshll.u32 %v1457, 16
        %v1553 = vrot.slane %v1551, 5
        %v1554 = vor.u32 %v1550, %v1553
        %v1555 = vrot.slane %v1554, 4
        %v1557 = vshll.u32 %v1458, 16
        %v1559 = vrot.slane %v1557, 5
        %v1560 = vsel %vm451, %v1555, %v1559
        %v1561 = vshrl.u32 %v1458, 16
        %v1563 = vrot.slane %v1561, 4
        %v1564 = vor.u32 %v1563, %v1559
        %v1565 = vrot.slane %v1564, 4
        %v1567 = vshll.u32 %v1459, 16
        %v1569 = vrot.slane %v1567, 5
        %v1570 = vsel %vm451, %v1565, %v1569
        %v1572 = vshrl.u32 %v1460, 16
        %v1574 = vrot.slane %v1572, 4
        %v1575 = vshll.u32 %v1460, 16
        %v1577 = vrot.slane %v1575, 5
        %v1578 = vor.u32 %v1574, %v1577
        %v1579 = vrot.slane %v1578, 4
        %v1581 = vshll.u32 %v1461, 16
        %v1583 = vrot.slane %v1581, 5
        %v1584 = vsel %vm451, %v1579, %v1583
        %v1585 = vshrl.u32 %v1461, 16
        %v1587 = vrot.slane %v1585, 4
        %v1588 = vor.u32 %v1587, %v1583
        %v1589 = vrot.slane %v1588, 4
        %v1591 = vshll.u32 %v1462, 16
        %v1593 = vrot.slane %v1591, 5
        %v1594 = vsel %vm451, %v1589, %v1593
        %v1596 = vshrl.u32 %v1463, 16
        %v1598 = vrot.slane %v1596, 4
        %v1599 = vshll.u32 %v1463, 16
        %v1601 = vrot.slane %v1599, 5
        %v1602 = vor.u32 %v1598, %v1601
        %v1603 = vrot.slane %v1602, 4
        %v1605 = vshll.u32 %v1464, 16
        %v1607 = vrot.slane %v1605, 5
        %v1608 = vsel %vm451, %v1603, %v1607
        %v1609 = vshrl.u32 %v1464, 16
        %v1611 = vrot.slane %v1609, 4
        %v1612 = vor.u32 %v1611, %v1607
        %v1613 = vrot.slane %v1612, 4
        %v1615 = vshll.u32 %v1465, 16
        %v1617 = vrot.slane %v1615, 5
        %v1618 = vsel %vm451, %v1613, %v1617
        %v1620 = vshrl.u32 %v1466, 16
        %v1622 = vrot.slane %v1620, 4
        %v1623 = vshll.u32 %v1466, 16
        %v1625 = vrot.slane %v1623, 5
        %v1626 = vor.u32 %v1622, %v1625
        %v1627 = vrot.slane %v1626, 4
        %v1629 = vshll.u32 %v1467, 16
        %v1631 = vrot.slane %v1629, 5
        %v1632 = vsel %vm451, %v1627, %v1631
        %v1633 = vshrl.u32 %v1467, 16
        %v1635 = vrot.slane %v1633, 4
        %v1636 = vor.u32 %v1635, %v1631
        %v1637 = vrot.slane %v1636, 4
        %v1639 = vshll.u32 %v1468, 16
        %v1641 = vrot.slane %v1639, 5
        %v1642 = vsel %vm451, %v1637, %v1641
        %v1644 = vshrl.u32 %v1469, 16
        %v1646 = vrot.slane %v1644, 4
        %v1647 = vshll.u32 %v1469, 16
        %v1649 = vrot.slane %v1647, 5
        %v1650 = vor.u32 %v1646, %v1649
        %v1651 = vrot.slane %v1650, 4
        %v1653 = vshll.u32 %v1470, 16
        %v1655 = vrot.slane %v1653, 5
        %v1656 = vsel %vm451, %v1651, %v1655
        %v1657 = vshrl.u32 %v1470, 16
        %v1659 = vrot.slane %v1657, 4
        %v1660 = vor.u32 %v1659, %v1655
        %v1661 = vrot.slane %v1660, 4
        %v1663 = vshll.u32 %v1471, 16
        %v1665 = vrot.slane %v1663, 5
        %v1666 = vsel %vm451, %v1661, %v1665
        %v1668 = vshrl.u32 %v1472, 16
        %v1670 = vrot.slane %v1668, 4
        %v1671 = vshll.u32 %v1472, 16
        %v1673 = vrot.slane %v1671, 5
        %v1674 = vor.u32 %v1670, %v1673
        %v1675 = vrot.slane %v1674, 4
        %v1677 = vshll.u32 %v1473, 16
        %v1679 = vrot.slane %v1677, 5
        %v1680 = vsel %vm451, %v1675, %v1679
        %v1681 = vshrl.u32 %v1473, 16
        %v1683 = vrot.slane %v1681, 4
        %v1684 = vor.u32 %v1683, %v1679
        %v1685 = vrot.slane %v1684, 4
        %v1687 = vshll.u32 %v1474, 16
        %v1689 = vrot.slane %v1687, 5
        %v1690 = vsel %vm451, %v1685, %v1689
        %v1692 = vshrl.u32 %v1475, 16
        %v1694 = vrot.slane %v1692, 4
        %v1695 = vshll.u32 %v1475, 16
        %v1697 = vrot.slane %v1695, 5
        %v1698 = vor.u32 %v1694, %v1697
        %v1699 = vrot.slane %v1698, 4
        %v1701 = vshll.u32 %v1476, 16
        %v1703 = vrot.slane %v1701, 5
        %v1704 = vsel %vm451, %v1699, %v1703
        %v1705 = vshrl.u32 %v1476, 16
        %v1707 = vrot.slane %v1705, 4
        %v1708 = vor.u32 %v1707, %v1703
        %v1709 = vrot.slane %v1708, 4
        %v1711 = vshll.u32 %v1477, 16
        %v1713 = vrot.slane %v1711, 5
        %v1714 = vsel %vm451, %v1709, %v1713
        %v1716 = vshrl.u32 %v1478, 16
        %v1718 = vrot.slane %v1716, 4
        %v1719 = vshll.u32 %v1478, 16
        %v1721 = vrot.slane %v1719, 5
        %v1722 = vor.u32 %v1718, %v1721
        %v1723 = vrot.slane %v1722, 4
        %v1725 = vshll.u32 %v1479, 16
        %v1727 = vrot.slane %v1725, 5
        %v1728 = vsel %vm451, %v1723, %v1727
        %v1729 = vshrl.u32 %v1479, 16
        %v1731 = vrot.slane %v1729, 4
        %v1732 = vor.u32 %v1731, %v1727
        %v1733 = vrot.slane %v1732, 4
        %v1735 = vshll.u32 %v1480, 16
        %v1737 = vrot.slane %v1735, 5
        %v1738 = vsel %vm451, %v1733, %v1737
        %v1740 = vshrl.u32 %v1481, 16
        %v1742 = vrot.slane %v1740, 4
        %v1743 = vshll.u32 %v1481, 16
        %v1745 = vrot.slane %v1743, 5
        %v1746 = vor.u32 %v1742, %v1745
        %v1747 = vrot.slane %v1746, 4
        %v1749 = vshll.u32 %v1482, 16
        %v1751 = vrot.slane %v1749, 5
        %v1752 = vsel %vm451, %v1747, %v1751
        %v1753 = vshrl.u32 %v1482, 16
        %v1755 = vrot.slane %v1753, 4
        %v1756 = vor.u32 %v1755, %v1751
        %v1757 = vrot.slane %v1756, 4
        %v1759 = vshll.u32 %v1483, 16
        %v1761 = vrot.slane %v1759, 5
        %v1762 = vsel %vm451, %v1757, %v1761
        %v1764 = vshrl.u32 %v1484, 16
        %v1766 = vrot.slane %v1764, 4
        %v1767 = vshll.u32 %v1484, 16
        %v1769 = vrot.slane %v1767, 5
        %v1770 = vor.u32 %v1766, %v1769
        %v1771 = vrot.slane %v1770, 4
        %v1773 = vshll.u32 %v1485, 16
        %v1775 = vrot.slane %v1773, 5
        %v1776 = vsel %vm451, %v1771, %v1775
        %v1777 = vshrl.u32 %v1485, 16
        %v1779 = vrot.slane %v1777, 4
        %v1780 = vor.u32 %v1779, %v1775
        %v1781 = vrot.slane %v1780, 4
        %v1783 = vshll.u32 %v1486, 16
        %v1785 = vrot.slane %v1783, 5
        %v1786 = vsel %vm451, %v1781, %v1785
        %v1788 = vshrl.u32 %v1487, 16
        %v1790 = vrot.slane %v1788, 4
        %v1791 = vshll.u32 %v1487, 16
        %v1793 = vrot.slane %v1791, 5
        %v1794 = vor.u32 %v1790, %v1793
        %v1795 = vrot.slane %v1794, 4
        %v1797 = vshll.u32 %v1488, 16
        %v1799 = vrot.slane %v1797, 5
        %v1800 = vsel %vm451, %v1795, %v1799
        %v1801 = vshrl.u32 %v1488, 16
        %v1803 = vrot.slane %v1801, 4
        %v1804 = vor.u32 %v1803, %v1799
        %v1805 = vrot.slane %v1804, 4
        %v1807 = vshll.u32 %v1489, 16
        %v1809 = vrot.slane %v1807, 5
        %v1810 = vsel %vm451, %v1805, %v1809
        %v1812 = vshrl.u32 %v1490, 16
        %v1814 = vrot.slane %v1812, 4
        %v1815 = vshll.u32 %v1490, 16
        %v1817 = vrot.slane %v1815, 5
        %v1818 = vor.u32 %v1814, %v1817
        %v1819 = vrot.slane %v1818, 4
        %v1821 = vshll.u32 %v1491, 16
        %v1823 = vrot.slane %v1821, 5
        %v1824 = vsel %vm451, %v1819, %v1823
        %v1825 = vshrl.u32 %v1491, 16
        %v1827 = vrot.slane %v1825, 4
        %v1828 = vor.u32 %v1827, %v1823
        %v1829 = vrot.slane %v1828, 4
        %v1831 = vshll.u32 %v1492, 16
        %v1833 = vrot.slane %v1831, 5
        %v1834 = vsel %vm451, %v1829, %v1833
        %v1836 = vshrl.u32 %v1493, 16
        %v1838 = vrot.slane %v1836, 4
        %v1839 = vshll.u32 %v1493, 16
        %v1841 = vrot.slane %v1839, 5
        %v1842 = vor.u32 %v1838, %v1841
        %v1843 = vrot.slane %v1842, 4
        %v1845 = vshll.u32 %v1494, 16
        %v1847 = vrot.slane %v1845, 5
        %v1848 = vsel %vm451, %v1843, %v1847
        %v1849 = vshrl.u32 %v1494, 16
        %v1851 = vrot.slane %v1849, 4
        %v1852 = vor.u32 %v1851, %v1847
        %v1853 = vrot.slane %v1852, 4
        %v1855 = vshll.u32 %v1495, 16
        %v1857 = vrot.slane %v1855, 5
        %v1858 = vsel %vm451, %v1853, %v1857
        %v1860 = vshrl.u32 %v1496, 16
        %v1862 = vrot.slane %v1860, 4
        %v1863 = vshll.u32 %v1496, 16
        %v1865 = vrot.slane %v1863, 5
        %v1866 = vor.u32 %v1862, %v1865
        %v1867 = vrot.slane %v1866, 4
        %v1869 = vshll.u32 %v1497, 16
        %v1871 = vrot.slane %v1869, 5
        %v1872 = vsel %vm451, %v1867, %v1871
        %v1873 = vshrl.u32 %v1497, 16
        %v1875 = vrot.slane %v1873, 4
        %v1876 = vor.u32 %v1875, %v1871
        %v1877 = vrot.slane %v1876, 4
        %v1879 = vshll.u32 %v1498, 16
        %v1881 = vrot.slane %v1879, 5
        %v1882 = vsel %vm451, %v1877, %v1881
        %v1883 = vunpack.c.l.b16 %v1512
        %v1884 = vunpack.c.l.b16 %v1522
        %v1885 = vunpack.c.l.b16 %v1536
        %v1886 = vunpack.c.l.b16 %v1546
        %v1887 = vunpack.c.l.b16 %v1560
        %v1888 = vunpack.c.l.b16 %v1570
        %v1889 = vunpack.c.l.b16 %v1584
        %v1890 = vunpack.c.l.b16 %v1594
        %v1891 = vunpack.c.l.b16 %v1608
        %v1892 = vunpack.c.l.b16 %v1618
        %v1893 = vunpack.c.l.b16 %v1632
        %v1894 = vunpack.c.l.b16 %v1642
        %v1895 = vunpack.c.l.b16 %v1656
        %v1896 = vunpack.c.l.b16 %v1666
        %v1897 = vunpack.c.l.b16 %v1680
        %v1898 = vunpack.c.l.b16 %v1690
        %v1899 = vunpack.c.l.b16 %v1704
        %v1900 = vunpack.c.l.b16 %v1714
        %v1901 = vunpack.c.l.b16 %v1728
        %v1902 = vunpack.c.l.b16 %v1738
        %v1903 = vunpack.c.l.b16 %v1752
        %v1904 = vunpack.c.l.b16 %v1762
        %v1905 = vunpack.c.l.b16 %v1776
        %v1906 = vunpack.c.l.b16 %v1786
        %v1907 = vunpack.c.l.b16 %v1800
        %v1908 = vunpack.c.l.b16 %v1810
        %v1909 = vunpack.c.l.b16 %v1824
        %v1910 = vunpack.c.l.b16 %v1834
        %v1911 = vunpack.c.l.b16 %v1848
        %v1912 = vunpack.c.l.b16 %v1858
        %v1913 = vunpack.c.l.b16 %v1872
        %v1914 = vunpack.c.l.b16 %v1882
        %v1915 = vpack.c.b16 %v1884, %v1883
        %v1916 = vpack.c.b16 %v1886, %v1885
        %v1917 = vpack.c.b16 %v1888, %v1887
        %v1918 = vpack.c.b16 %v1890, %v1889
        %v1919 = vpack.c.b16 %v1892, %v1891
        %v1920 = vpack.c.b16 %v1894, %v1893
        %v1921 = vpack.c.b16 %v1896, %v1895
        %v1922 = vpack.c.b16 %v1898, %v1897
        %v1923 = vpack.c.b16 %v1900, %v1899
        %v1924 = vpack.c.b16 %v1902, %v1901
        %v1925 = vpack.c.b16 %v1904, %v1903
        %v1926 = vpack.c.b16 %v1906, %v1905
        %v1927 = vpack.c.b16 %v1908, %v1907
        %v1928 = vpack.c.b16 %v1910, %v1909
        %v1929 = vpack.c.b16 %v1912, %v1911
        %v1930 = vpack.c.b16 %v1914, %v1913
        %1931 = vrot.lane.b32.xlu0 %v1915, 16
        %v1932 = vpop.permute.xlu0 %1931
        %1933 = vrot.lane.b32.xlu0 %v1916, 16
        %v1934 = vpop.permute.xlu0 %1933
        %1935 = vrot.lane.b32.xlu0 %v1917, 16
        %v1936 = vpop.permute.xlu0 %1935
        %1937 = vrot.lane.b32.xlu0 %v1918, 16
        %v1938 = vpop.permute.xlu0 %1937
        %1939 = vrot.lane.b32.xlu0 %v1919, 16
        %v1940 = vpop.permute.xlu0 %1939
        %1941 = vrot.lane.b32.xlu0 %v1920, 16
        %v1942 = vpop.permute.xlu0 %1941
        %1943 = vrot.lane.b32.xlu0 %v1921, 16
        %v1944 = vpop.permute.xlu0 %1943
        %1945 = vrot.lane.b32.xlu0 %v1922, 16
        %v1946 = vpop.permute.xlu0 %1945
        %1947 = vrot.lane.b32.xlu0 %v1923, 16
        %v1948 = vpop.permute.xlu0 %1947
        %1949 = vrot.lane.b32.xlu0 %v1924, 16
        %v1950 = vpop.permute.xlu0 %1949
        %1951 = vrot.lane.b32.xlu0 %v1925, 16
        %v1952 = vpop.permute.xlu0 %1951
        %1953 = vrot.lane.b32.xlu0 %v1926, 16
        %v1954 = vpop.permute.xlu0 %1953
        %1955 = vrot.lane.b32.xlu0 %v1927, 16
        %v1956 = vpop.permute.xlu0 %1955
        %1957 = vrot.lane.b32.xlu0 %v1928, 16
        %v1958 = vpop.permute.xlu0 %1957
        %1959 = vrot.lane.b32.xlu0 %v1929, 16
        %v1960 = vpop.permute.xlu0 %1959
        %1961 = vrot.lane.b32.xlu0 %v1930, 16
        %v1962 = vpop.permute.xlu0 %1961
        %vm1979 = vcmask 162944
        %1980 = vst.msk [vmem:[#allocation2] sm:$0xff] %vm1979, %v1932
        %1981 = vst.msk [vmem:[#allocation2 + $0x8] sm:$0xff] %vm1979, %v1934
        %1982 = vst.msk [vmem:[#allocation2 + $0x10] sm:$0xff] %vm1979, %v1936
        %1983 = vst.msk [vmem:[#allocation2 + $0x18] sm:$0xff] %vm1979, %v1938
        %1984 = vst.msk [vmem:[#allocation2 + $0x20] sm:$0xff] %vm1979, %v1940
        %1985 = vst.msk [vmem:[#allocation2 + $0x28] sm:$0xff] %vm1979, %v1942
        %1986 = vst.msk [vmem:[#allocation2 + $0x30] sm:$0xff] %vm1979, %v1944
        %1987 = vst.msk [vmem:[#allocation2 + $0x38] sm:$0xff] %vm1979, %v1946
        %1988 = vst.msk [vmem:[#allocation2 + $0x40] sm:$0xff] %vm1979, %v1948
        %1989 = vst.msk [vmem:[#allocation2 + $0x48] sm:$0xff] %vm1979, %v1950
        %1990 = vst.msk [vmem:[#allocation2 + $0x50] sm:$0xff] %vm1979, %v1952
        %1991 = vst.msk [vmem:[#allocation2 + $0x58] sm:$0xff] %vm1979, %v1954
        %1992 = vst.msk [vmem:[#allocation2 + $0x60] sm:$0xff] %vm1979, %v1956
        %1993 = vst.msk [vmem:[#allocation2 + $0x68] sm:$0xff] %vm1979, %v1958
        %1994 = vst.msk [vmem:[#allocation2 + $0x70] sm:$0xff] %vm1979, %v1960
        %1995 = vst.msk [vmem:[#allocation2 + $0x78] sm:$0xff] %vm1979, %v1962
        %v1996 = vld [vmem:[%s1273] sm:$0xe]
        %v1997 = vld [vmem:[%s1273 + $0x4] sm:$0xf]
        %v1998 = vld [vmem:[%s1273 + $0x8] sm:$0x1]
        %v1999 = vld [vmem:[%s1273 + $0xc] sm:$0xe]
        %v2000 = vld [vmem:[%s1273 + $0x10] sm:$0xf]
        %v2001 = vld [vmem:[%s1273 + $0x14] sm:$0x1]
        %v2002 = vld [vmem:[%s1273 + $0x18] sm:$0xe]
        %v2003 = vld [vmem:[%s1273 + $0x1c] sm:$0xf]
        %v2004 = vld [vmem:[%s1273 + $0x20] sm:$0x1]
        %v2005 = vld [vmem:[%s1273 + $0x24] sm:$0xe]
        %v2006 = vld [vmem:[%s1273 + $0x28] sm:$0xf]
        %v2007 = vld [vmem:[%s1273 + $0x2c] sm:$0x1]
        %v2008 = vld [vmem:[%s1273 + $0x30] sm:$0xe]
        %v2009 = vld [vmem:[%s1273 + $0x34] sm:$0xf]
        %v2010 = vld [vmem:[%s1273 + $0x38] sm:$0x1]
        %v2011 = vld [vmem:[%s1273 + $0x3c] sm:$0xe]
        %v2012 = vld [vmem:[%s1273 + $0x40] sm:$0xf]
        %v2013 = vld [vmem:[%s1273 + $0x44] sm:$0x1]
        %v2014 = vld [vmem:[%s1273 + $0x48] sm:$0xe]
        %v2015 = vld [vmem:[%s1273 + $0x4c] sm:$0xf]
        %v2016 = vld [vmem:[%s1273 + $0x50] sm:$0x1]
        %v2017 = vld [vmem:[%s1273 + $0x54] sm:$0xe]
        %v2018 = vld [vmem:[%s1273 + $0x58] sm:$0xf]
        %v2019 = vld [vmem:[%s1273 + $0x5c] sm:$0x1]
        %v2020 = vld [vmem:[%s1273 + $0x60] sm:$0xe]
        %v2021 = vld [vmem:[%s1273 + $0x64] sm:$0xf]
        %v2022 = vld [vmem:[%s1273 + $0x68] sm:$0x1]
        %v2023 = vld [vmem:[%s1273 + $0x6c] sm:$0xe]
        %v2024 = vld [vmem:[%s1273 + $0x70] sm:$0xf]
        %v2025 = vld [vmem:[%s1273 + $0x74] sm:$0x1]
        %v2026 = vld [vmem:[%s1273 + $0x78] sm:$0xe]
        %v2027 = vld [vmem:[%s1273 + $0x7c] sm:$0xf]
        %v2028 = vld [vmem:[%s1273 + $0x80] sm:$0x1]
        %v2029 = vld [vmem:[%s1273 + $0x84] sm:$0xe]
        %v2030 = vld [vmem:[%s1273 + $0x88] sm:$0xf]
        %v2031 = vld [vmem:[%s1273 + $0x8c] sm:$0x1]
        %v2032 = vld [vmem:[%s1273 + $0x90] sm:$0xe]
        %v2033 = vld [vmem:[%s1273 + $0x94] sm:$0xf]
        %v2034 = vld [vmem:[%s1273 + $0x98] sm:$0x1]
        %v2035 = vld [vmem:[%s1273 + $0x9c] sm:$0xe]
        %v2036 = vld [vmem:[%s1273 + $0xa0] sm:$0xf]
        %v2037 = vld [vmem:[%s1273 + $0xa4] sm:$0x1]
        %v2038 = vld [vmem:[%s1273 + $0xa8] sm:$0xe]
        %v2039 = vld [vmem:[%s1273 + $0xac] sm:$0xf]
        %v2040 = vld [vmem:[%s1273 + $0xb0] sm:$0x1]
        %v2041 = vld [vmem:[%s1273 + $0xb4] sm:$0xe]
        %v2042 = vld [vmem:[%s1273 + $0xb8] sm:$0xf]
        %v2043 = vld [vmem:[%s1273 + $0xbc] sm:$0x1]
        %v2092 = vrot.slane %v1996, 5
        %v2093 = vrot.slane %v2092, 4
        %v2094 = vrot.slane %v1997, 5
        %v2095 = vsel %vm1047, %v2093, %v2094
        %v2096 = vrot.slane %v2094, 4
        %v2097 = vrot.slane %v1998, 5
        %v2098 = vsel %vm1047, %v2096, %v2097
        %v2099 = vrot.slane %v1999, 5
        %v2100 = vrot.slane %v2099, 4
        %v2101 = vrot.slane %v2000, 5
        %v2102 = vsel %vm1047, %v2100, %v2101
        %v2103 = vrot.slane %v2101, 4
        %v2104 = vrot.slane %v2001, 5
        %v2105 = vsel %vm1047, %v2103, %v2104
        %v2106 = vrot.slane %v2002, 5
        %v2107 = vrot.slane %v2106, 4
        %v2108 = vrot.slane %v2003, 5
        %v2109 = vsel %vm1047, %v2107, %v2108
        %v2110 = vrot.slane %v2108, 4
        %v2111 = vrot.slane %v2004, 5
        %v2112 = vsel %vm1047, %v2110, %v2111
        %v2113 = vrot.slane %v2005, 5
        %v2114 = vrot.slane %v2113, 4
        %v2115 = vrot.slane %v2006, 5
        %v2116 = vsel %vm1047, %v2114, %v2115
        %v2117 = vrot.slane %v2115, 4
        %v2118 = vrot.slane %v2007, 5
        %v2119 = vsel %vm1047, %v2117, %v2118
        %v2120 = vrot.slane %v2008, 5
        %v2121 = vrot.slane %v2120, 4
        %v2122 = vrot.slane %v2009, 5
        %v2123 = vsel %vm1047, %v2121, %v2122
        %v2124 = vrot.slane %v2122, 4
        %v2125 = vrot.slane %v2010, 5
        %v2126 = vsel %vm1047, %v2124, %v2125
        %v2127 = vrot.slane %v2011, 5
        %v2128 = vrot.slane %v2127, 4
        %v2129 = vrot.slane %v2012, 5
        %v2130 = vsel %vm1047, %v2128, %v2129
        %v2131 = vrot.slane %v2129, 4
        %v2132 = vrot.slane %v2013, 5
        %v2133 = vsel %vm1047, %v2131, %v2132
        %v2134 = vrot.slane %v2014, 5
        %v2135 = vrot.slane %v2134, 4
        %v2136 = vrot.slane %v2015, 5
        %v2137 = vsel %vm1047, %v2135, %v2136
        %v2138 = vrot.slane %v2136, 4
        %v2139 = vrot.slane %v2016, 5
        %v2140 = vsel %vm1047, %v2138, %v2139
        %v2141 = vrot.slane %v2017, 5
        %v2142 = vrot.slane %v2141, 4
        %v2143 = vrot.slane %v2018, 5
        %v2144 = vsel %vm1047, %v2142, %v2143
        %v2145 = vrot.slane %v2143, 4
        %v2146 = vrot.slane %v2019, 5
        %v2147 = vsel %vm1047, %v2145, %v2146
        %v2148 = vrot.slane %v2020, 5
        %v2149 = vrot.slane %v2148, 4
        %v2150 = vrot.slane %v2021, 5
        %v2151 = vsel %vm1047, %v2149, %v2150
        %v2152 = vrot.slane %v2150, 4
        %v2153 = vrot.slane %v2022, 5
        %v2154 = vsel %vm1047, %v2152, %v2153
        %v2155 = vrot.slane %v2023, 5
        %v2156 = vrot.slane %v2155, 4
        %v2157 = vrot.slane %v2024, 5
        %v2158 = vsel %vm1047, %v2156, %v2157
        %v2159 = vrot.slane %v2157, 4
        %v2160 = vrot.slane %v2025, 5
        %v2161 = vsel %vm1047, %v2159, %v2160
        %v2162 = vrot.slane %v2026, 5
        %v2163 = vrot.slane %v2162, 4
        %v2164 = vrot.slane %v2027, 5
        %v2165 = vsel %vm1047, %v2163, %v2164
        %v2166 = vrot.slane %v2164, 4
        %v2167 = vrot.slane %v2028, 5
        %v2168 = vsel %vm1047, %v2166, %v2167
        %v2169 = vrot.slane %v2029, 5
        %v2170 = vrot.slane %v2169, 4
        %v2171 = vrot.slane %v2030, 5
        %v2172 = vsel %vm1047, %v2170, %v2171
        %v2173 = vrot.slane %v2171, 4
        %v2174 = vrot.slane %v2031, 5
        %v2175 = vsel %vm1047, %v2173, %v2174
        %v2176 = vrot.slane %v2032, 5
        %v2177 = vrot.slane %v2176, 4
        %v2178 = vrot.slane %v2033, 5
        %v2179 = vsel %vm1047, %v2177, %v2178
        %v2180 = vrot.slane %v2178, 4
        %v2181 = vrot.slane %v2034, 5
        %v2182 = vsel %vm1047, %v2180, %v2181
        %v2183 = vrot.slane %v2035, 5
        %v2184 = vrot.slane %v2183, 4
        %v2185 = vrot.slane %v2036, 5
        %v2186 = vsel %vm1047, %v2184, %v2185
        %v2187 = vrot.slane %v2185, 4
        %v2188 = vrot.slane %v2037, 5
        %v2189 = vsel %vm1047, %v2187, %v2188
        %v2190 = vrot.slane %v2038, 5
        %v2191 = vrot.slane %v2190, 4
        %v2192 = vrot.slane %v2039, 5
        %v2193 = vsel %vm1047, %v2191, %v2192
        %v2194 = vrot.slane %v2192, 4
        %v2195 = vrot.slane %v2040, 5
        %v2196 = vsel %vm1047, %v2194, %v2195
        %v2197 = vrot.slane %v2041, 5
        %v2198 = vrot.slane %v2197, 4
        %v2199 = vrot.slane %v2042, 5
        %v2200 = vsel %vm1047, %v2198, %v2199
        %v2201 = vrot.slane %v2199, 4
        %v2202 = vrot.slane %v2043, 5
        %v2203 = vsel %vm1047, %v2201, %v2202
        %v2204 = vunpack.c.l.b16 %v2095
        %v2205 = vunpack.c.l.b16 %v2098
        %v2206 = vunpack.c.l.b16 %v2102
        %v2207 = vunpack.c.l.b16 %v2105
        %v2208 = vunpack.c.l.b16 %v2109
        %v2209 = vunpack.c.l.b16 %v2112
        %v2210 = vunpack.c.l.b16 %v2116
        %v2211 = vunpack.c.l.b16 %v2119
        %v2212 = vunpack.c.l.b16 %v2123
        %v2213 = vunpack.c.l.b16 %v2126
        %v2214 = vunpack.c.l.b16 %v2130
        %v2215 = vunpack.c.l.b16 %v2133
        %v2216 = vunpack.c.l.b16 %v2137
        %v2217 = vunpack.c.l.b16 %v2140
        %v2218 = vunpack.c.l.b16 %v2144
        %v2219 = vunpack.c.l.b16 %v2147
        %v2220 = vunpack.c.l.b16 %v2151
        %v2221 = vunpack.c.l.b16 %v2154
        %v2222 = vunpack.c.l.b16 %v2158
        %v2223 = vunpack.c.l.b16 %v2161
        %v2224 = vunpack.c.l.b16 %v2165
        %v2225 = vunpack.c.l.b16 %v2168
        %v2226 = vunpack.c.l.b16 %v2172
        %v2227 = vunpack.c.l.b16 %v2175
        %v2228 = vunpack.c.l.b16 %v2179
        %v2229 = vunpack.c.l.b16 %v2182
        %v2230 = vunpack.c.l.b16 %v2186
        %v2231 = vunpack.c.l.b16 %v2189
        %v2232 = vunpack.c.l.b16 %v2193
        %v2233 = vunpack.c.l.b16 %v2196
        %v2234 = vunpack.c.l.b16 %v2200
        %v2235 = vunpack.c.l.b16 %v2203
        %v2236 = vpack.c.b16 %v2205, %v2204
        %v2237 = vpack.c.b16 %v2207, %v2206
        %v2238 = vpack.c.b16 %v2209, %v2208
        %v2239 = vpack.c.b16 %v2211, %v2210
        %v2240 = vpack.c.b16 %v2213, %v2212
        %v2241 = vpack.c.b16 %v2215, %v2214
        %v2242 = vpack.c.b16 %v2217, %v2216
        %v2243 = vpack.c.b16 %v2219, %v2218
        %v2244 = vpack.c.b16 %v2221, %v2220
        %v2245 = vpack.c.b16 %v2223, %v2222
        %v2246 = vpack.c.b16 %v2225, %v2224
        %v2247 = vpack.c.b16 %v2227, %v2226
        %v2248 = vpack.c.b16 %v2229, %v2228
        %v2249 = vpack.c.b16 %v2231, %v2230
        %v2250 = vpack.c.b16 %v2233, %v2232
        %v2251 = vpack.c.b16 %v2235, %v2234
        %2252 = vrot.lane.b32.xlu0 %v2236, 20
        %v2253 = vpop.permute.xlu0 %2252
        %2254 = vrot.lane.b32.xlu0 %v2237, 20
        %v2255 = vpop.permute.xlu0 %2254
        %2256 = vrot.lane.b32.xlu0 %v2238, 20
        %v2257 = vpop.permute.xlu0 %2256
        %2258 = vrot.lane.b32.xlu0 %v2239, 20
        %v2259 = vpop.permute.xlu0 %2258
        %2260 = vrot.lane.b32.xlu0 %v2240, 20
        %v2261 = vpop.permute.xlu0 %2260
        %2262 = vrot.lane.b32.xlu0 %v2241, 20
        %v2263 = vpop.permute.xlu0 %2262
        %2264 = vrot.lane.b32.xlu0 %v2242, 20
        %v2265 = vpop.permute.xlu0 %2264
        %2266 = vrot.lane.b32.xlu0 %v2243, 20
        %v2267 = vpop.permute.xlu0 %2266
        %2268 = vrot.lane.b32.xlu0 %v2244, 20
        %v2269 = vpop.permute.xlu0 %2268
        %2270 = vrot.lane.b32.xlu0 %v2245, 20
        %v2271 = vpop.permute.xlu0 %2270
        %2272 = vrot.lane.b32.xlu0 %v2246, 20
        %v2273 = vpop.permute.xlu0 %2272
        %2274 = vrot.lane.b32.xlu0 %v2247, 20
        %v2275 = vpop.permute.xlu0 %2274
        %2276 = vrot.lane.b32.xlu0 %v2248, 20
        %v2277 = vpop.permute.xlu0 %2276
        %2278 = vrot.lane.b32.xlu0 %v2249, 20
        %v2279 = vpop.permute.xlu0 %2278
        %2280 = vrot.lane.b32.xlu0 %v2250, 20
        %v2281 = vpop.permute.xlu0 %2280
        %2282 = vrot.lane.b32.xlu0 %v2251, 20
        %v2283 = vpop.permute.xlu0 %2282
        %vm2300 = vcmask 195744
        %2301 = vst.msk [vmem:[#allocation2] sm:$0xff] %vm2300, %v2253
        %2302 = vst.msk [vmem:[#allocation2 + $0x8] sm:$0xff] %vm2300, %v2255
        %2303 = vst.msk [vmem:[#allocation2 + $0x10] sm:$0xff] %vm2300, %v2257
        %2304 = vst.msk [vmem:[#allocation2 + $0x18] sm:$0xff] %vm2300, %v2259
        %2305 = vst.msk [vmem:[#allocation2 + $0x20] sm:$0xff] %vm2300, %v2261
        %2306 = vst.msk [vmem:[#allocation2 + $0x28] sm:$0xff] %vm2300, %v2263
        %2307 = vst.msk [vmem:[#allocation2 + $0x30] sm:$0xff] %vm2300, %v2265
        %2308 = vst.msk [vmem:[#allocation2 + $0x38] sm:$0xff] %vm2300, %v2267
        %2309 = vst.msk [vmem:[#allocation2 + $0x40] sm:$0xff] %vm2300, %v2269
        %2310 = vst.msk [vmem:[#allocation2 + $0x48] sm:$0xff] %vm2300, %v2271
        %2311 = vst.msk [vmem:[#allocation2 + $0x50] sm:$0xff] %vm2300, %v2273
        %2312 = vst.msk [vmem:[#allocation2 + $0x58] sm:$0xff] %vm2300, %v2275
        %2313 = vst.msk [vmem:[#allocation2 + $0x60] sm:$0xff] %vm2300, %v2277
        %2314 = vst.msk [vmem:[#allocation2 + $0x68] sm:$0xff] %vm2300, %v2279
        %2315 = vst.msk [vmem:[#allocation2 + $0x70] sm:$0xff] %vm2300, %v2281
        %2316 = vst.msk [vmem:[#allocation2 + $0x78] sm:$0xff] %vm2300, %v2283
        %s2317 = scalar_lea.vmem %s244, 24
        %v2318 = vld [vmem:[%s2317] sm:$0xf]
        %v2319 = vld [vmem:[%s2317 + $0x4] sm:$0xf]
        %v2320 = vld [vmem:[%s2317 + $0xc] sm:$0xf]
        %v2321 = vld [vmem:[%s2317 + $0x10] sm:$0xf]
        %v2322 = vld [vmem:[%s2317 + $0x18] sm:$0xf]
        %v2323 = vld [vmem:[%s2317 + $0x1c] sm:$0xf]
        %v2324 = vld [vmem:[%s2317 + $0x24] sm:$0xf]
        %v2325 = vld [vmem:[%s2317 + $0x28] sm:$0xf]
        %v2326 = vld [vmem:[%s2317 + $0x30] sm:$0xf]
        %v2327 = vld [vmem:[%s2317 + $0x34] sm:$0xf]
        %v2328 = vld [vmem:[%s2317 + $0x3c] sm:$0xf]
        %v2329 = vld [vmem:[%s2317 + $0x40] sm:$0xf]
        %v2330 = vld [vmem:[%s2317 + $0x48] sm:$0xf]
        %v2331 = vld [vmem:[%s2317 + $0x4c] sm:$0xf]
        %v2332 = vld [vmem:[%s2317 + $0x54] sm:$0xf]
        %v2333 = vld [vmem:[%s2317 + $0x58] sm:$0xf]
        %v2334 = vld [vmem:[%s2317 + $0x60] sm:$0xf]
        %v2335 = vld [vmem:[%s2317 + $0x64] sm:$0xf]
        %v2336 = vld [vmem:[%s2317 + $0x6c] sm:$0xf]
        %v2337 = vld [vmem:[%s2317 + $0x70] sm:$0xf]
        %v2338 = vld [vmem:[%s2317 + $0x78] sm:$0xf]
        %v2339 = vld [vmem:[%s2317 + $0x7c] sm:$0xf]
        %v2340 = vld [vmem:[%s2317 + $0x84] sm:$0xf]
        %v2341 = vld [vmem:[%s2317 + $0x88] sm:$0xf]
        %v2342 = vld [vmem:[%s2317 + $0x90] sm:$0xf]
        %v2343 = vld [vmem:[%s2317 + $0x94] sm:$0xf]
        %v2344 = vld [vmem:[%s2317 + $0x9c] sm:$0xf]
        %v2345 = vld [vmem:[%s2317 + $0xa0] sm:$0xf]
        %v2346 = vld [vmem:[%s2317 + $0xa8] sm:$0xf]
        %v2347 = vld [vmem:[%s2317 + $0xac] sm:$0xf]
        %v2348 = vld [vmem:[%s2317 + $0xb4] sm:$0xf]
        %v2349 = vld [vmem:[%s2317 + $0xb8] sm:$0xf]
        %v2382 = vunpack.c.l.b16 %v2318
        %v2383 = vunpack.c.l.b16 %v2319
        %v2384 = vunpack.c.l.b16 %v2320
        %v2385 = vunpack.c.l.b16 %v2321
        %v2386 = vunpack.c.l.b16 %v2322
        %v2387 = vunpack.c.l.b16 %v2323
        %v2388 = vunpack.c.l.b16 %v2324
        %v2389 = vunpack.c.l.b16 %v2325
        %v2390 = vunpack.c.l.b16 %v2326
        %v2391 = vunpack.c.l.b16 %v2327
        %v2392 = vunpack.c.l.b16 %v2328
        %v2393 = vunpack.c.l.b16 %v2329
        %v2394 = vunpack.c.l.b16 %v2330
        %v2395 = vunpack.c.l.b16 %v2331
        %v2396 = vunpack.c.l.b16 %v2332
        %v2397 = vunpack.c.l.b16 %v2333
        %v2398 = vunpack.c.l.b16 %v2334
        %v2399 = vunpack.c.l.b16 %v2335
        %v2400 = vunpack.c.l.b16 %v2336
        %v2401 = vunpack.c.l.b16 %v2337
        %v2402 = vunpack.c.l.b16 %v2338
        %v2403 = vunpack.c.l.b16 %v2339
        %v2404 = vunpack.c.l.b16 %v2340
        %v2405 = vunpack.c.l.b16 %v2341
        %v2406 = vunpack.c.l.b16 %v2342
        %v2407 = vunpack.c.l.b16 %v2343
        %v2408 = vunpack.c.l.b16 %v2344
        %v2409 = vunpack.c.l.b16 %v2345
        %v2410 = vunpack.c.l.b16 %v2346
        %v2411 = vunpack.c.l.b16 %v2347
        %v2412 = vunpack.c.l.b16 %v2348
        %v2413 = vunpack.c.l.b16 %v2349
        %v2414 = vpack.c.b16 %v2383, %v2382
        %v2415 = vpack.c.b16 %v2385, %v2384
        %v2416 = vpack.c.b16 %v2387, %v2386
        %v2417 = vpack.c.b16 %v2389, %v2388
        %v2418 = vpack.c.b16 %v2391, %v2390
        %v2419 = vpack.c.b16 %v2393, %v2392
        %v2420 = vpack.c.b16 %v2395, %v2394
        %v2421 = vpack.c.b16 %v2397, %v2396
        %v2422 = vpack.c.b16 %v2399, %v2398
        %v2423 = vpack.c.b16 %v2401, %v2400
        %v2424 = vpack.c.b16 %v2403, %v2402
        %v2425 = vpack.c.b16 %v2405, %v2404
        %v2426 = vpack.c.b16 %v2407, %v2406
        %v2427 = vpack.c.b16 %v2409, %v2408
        %v2428 = vpack.c.b16 %v2411, %v2410
        %v2429 = vpack.c.b16 %v2413, %v2412
        %2430 = vrot.lane.b32.xlu0 %v2414, 24
        %v2431 = vpop.permute.xlu0 %2430
        %2432 = vrot.lane.b32.xlu0 %v2415, 24
        %v2433 = vpop.permute.xlu0 %2432
        %2434 = vrot.lane.b32.xlu0 %v2416, 24
        %v2435 = vpop.permute.xlu0 %2434
        %2436 = vrot.lane.b32.xlu0 %v2417, 24
        %v2437 = vpop.permute.xlu0 %2436
        %2438 = vrot.lane.b32.xlu0 %v2418, 24
        %v2439 = vpop.permute.xlu0 %2438
        %2440 = vrot.lane.b32.xlu0 %v2419, 24
        %v2441 = vpop.permute.xlu0 %2440
        %2442 = vrot.lane.b32.xlu0 %v2420, 24
        %v2443 = vpop.permute.xlu0 %2442
        %2444 = vrot.lane.b32.xlu0 %v2421, 24
        %v2445 = vpop.permute.xlu0 %2444
        %2446 = vrot.lane.b32.xlu0 %v2422, 24
        %v2447 = vpop.permute.xlu0 %2446
        %2448 = vrot.lane.b32.xlu0 %v2423, 24
        %v2449 = vpop.permute.xlu0 %2448
        %2450 = vrot.lane.b32.xlu0 %v2424, 24
        %v2451 = vpop.permute.xlu0 %2450
        %2452 = vrot.lane.b32.xlu0 %v2425, 24
        %v2453 = vpop.permute.xlu0 %2452
        %2454 = vrot.lane.b32.xlu0 %v2426, 24
        %v2455 = vpop.permute.xlu0 %2454
        %2456 = vrot.lane.b32.xlu0 %v2427, 24
        %v2457 = vpop.permute.xlu0 %2456
        %2458 = vrot.lane.b32.xlu0 %v2428, 24
        %v2459 = vpop.permute.xlu0 %2458
        %2460 = vrot.lane.b32.xlu0 %v2429, 24
        %v2461 = vpop.permute.xlu0 %2460
        %vm2478 = vcmask 228544
        %2479 = vst.msk [vmem:[#allocation2] sm:$0xff] %vm2478, %v2431
        %2480 = vst.msk [vmem:[#allocation2 + $0x8] sm:$0xff] %vm2478, %v2433
        %2481 = vst.msk [vmem:[#allocation2 + $0x10] sm:$0xff] %vm2478, %v2435
        %2482 = vst.msk [vmem:[#allocation2 + $0x18] sm:$0xff] %vm2478, %v2437
        %2483 = vst.msk [vmem:[#allocation2 + $0x20] sm:$0xff] %vm2478, %v2439
        %2484 = vst.msk [vmem:[#allocation2 + $0x28] sm:$0xff] %vm2478, %v2441
        %2485 = vst.msk [vmem:[#allocation2 + $0x30] sm:$0xff] %vm2478, %v2443
        %2486 = vst.msk [vmem:[#allocation2 + $0x38] sm:$0xff] %vm2478, %v2445
        %2487 = vst.msk [vmem:[#allocation2 + $0x40] sm:$0xff] %vm2478, %v2447
        %2488 = vst.msk [vmem:[#allocation2 + $0x48] sm:$0xff] %vm2478, %v2449
        %2489 = vst.msk [vmem:[#allocation2 + $0x50] sm:$0xff] %vm2478, %v2451
        %2490 = vst.msk [vmem:[#allocation2 + $0x58] sm:$0xff] %vm2478, %v2453
        %2491 = vst.msk [vmem:[#allocation2 + $0x60] sm:$0xff] %vm2478, %v2455
        %2492 = vst.msk [vmem:[#allocation2 + $0x68] sm:$0xff] %vm2478, %v2457
        %2493 = vst.msk [vmem:[#allocation2 + $0x70] sm:$0xff] %vm2478, %v2459
        %2494 = vst.msk [vmem:[#allocation2 + $0x78] sm:$0xff] %vm2478, %v2461
        %v2495 = vld [vmem:[%s2317] sm:$0xf]
        %v2496 = vld [vmem:[%s2317 + $0x4] sm:$0xf]
        %v2497 = vld [vmem:[%s2317 + $0x8] sm:$0x1]
        %v2498 = vld [vmem:[%s2317 + $0xc] sm:$0xf]
        %v2499 = vld [vmem:[%s2317 + $0x10] sm:$0xf]
        %v2500 = vld [vmem:[%s2317 + $0x14] sm:$0x1]
        %v2501 = vld [vmem:[%s2317 + $0x18] sm:$0xf]
        %v2502 = vld [vmem:[%s2317 + $0x1c] sm:$0xf]
        %v2503 = vld [vmem:[%s2317 + $0x20] sm:$0x1]
        %v2504 = vld [vmem:[%s2317 + $0x24] sm:$0xf]
        %v2505 = vld [vmem:[%s2317 + $0x28] sm:$0xf]
        %v2506 = vld [vmem:[%s2317 + $0x2c] sm:$0x1]
        %v2507 = vld [vmem:[%s2317 + $0x30] sm:$0xf]
        %v2508 = vld [vmem:[%s2317 + $0x34] sm:$0xf]
        %v2509 = vld [vmem:[%s2317 + $0x38] sm:$0x1]
        %v2510 = vld [vmem:[%s2317 + $0x3c] sm:$0xf]
        %v2511 = vld [vmem:[%s2317 + $0x40] sm:$0xf]
        %v2512 = vld [vmem:[%s2317 + $0x44] sm:$0x1]
        %v2513 = vld [vmem:[%s2317 + $0x48] sm:$0xf]
        %v2514 = vld [vmem:[%s2317 + $0x4c] sm:$0xf]
        %v2515 = vld [vmem:[%s2317 + $0x50] sm:$0x1]
        %v2516 = vld [vmem:[%s2317 + $0x54] sm:$0xf]
        %v2517 = vld [vmem:[%s2317 + $0x58] sm:$0xf]
        %v2518 = vld [vmem:[%s2317 + $0x5c] sm:$0x1]
        %v2519 = vld [vmem:[%s2317 + $0x60] sm:$0xf]
        %v2520 = vld [vmem:[%s2317 + $0x64] sm:$0xf]
        %v2521 = vld [vmem:[%s2317 + $0x68] sm:$0x1]
        %v2522 = vld [vmem:[%s2317 + $0x6c] sm:$0xf]
        %v2523 = vld [vmem:[%s2317 + $0x70] sm:$0xf]
        %v2524 = vld [vmem:[%s2317 + $0x74] sm:$0x1]
        %v2525 = vld [vmem:[%s2317 + $0x78] sm:$0xf]
        %v2526 = vld [vmem:[%s2317 + $0x7c] sm:$0xf]
        %v2527 = vld [vmem:[%s2317 + $0x80] sm:$0x1]
        %v2528 = vld [vmem:[%s2317 + $0x84] sm:$0xf]
        %v2529 = vld [vmem:[%s2317 + $0x88] sm:$0xf]
        %v2530 = vld [vmem:[%s2317 + $0x8c] sm:$0x1]
        %v2531 = vld [vmem:[%s2317 + $0x90] sm:$0xf]
        %v2532 = vld [vmem:[%s2317 + $0x94] sm:$0xf]
        %v2533 = vld [vmem:[%s2317 + $0x98] sm:$0x1]
        %v2534 = vld [vmem:[%s2317 + $0x9c] sm:$0xf]
        %v2535 = vld [vmem:[%s2317 + $0xa0] sm:$0xf]
        %v2536 = vld [vmem:[%s2317 + $0xa4] sm:$0x1]
        %v2537 = vld [vmem:[%s2317 + $0xa8] sm:$0xf]
        %v2538 = vld [vmem:[%s2317 + $0xac] sm:$0xf]
        %v2539 = vld [vmem:[%s2317 + $0xb0] sm:$0x1]
        %v2540 = vld [vmem:[%s2317 + $0xb4] sm:$0xf]
        %v2541 = vld [vmem:[%s2317 + $0xb8] sm:$0xf]
        %v2542 = vld [vmem:[%s2317 + $0xbc] sm:$0x1]
        %v2544 = vshrl.u32 %v2495, 16
        %v2546 = vrot.slane %v2544, 4
        %v2547 = vshll.u32 %v2495, 16
        %v2549 = vrot.slane %v2547, 5
        %v2550 = vor.u32 %v2546, %v2549
        %v2551 = vrot.slane %v2550, 4
        %v2553 = vshll.u32 %v2496, 16
        %v2555 = vrot.slane %v2553, 5
        %v2556 = vsel %vm451, %v2551, %v2555
        %v2557 = vshrl.u32 %v2496, 16
        %v2559 = vrot.slane %v2557, 4
        %v2560 = vor.u32 %v2559, %v2555
        %v2561 = vrot.slane %v2560, 4
        %v2563 = vshll.u32 %v2497, 16
        %v2565 = vrot.slane %v2563, 5
        %v2566 = vsel %vm451, %v2561, %v2565
        %v2568 = vshrl.u32 %v2498, 16
        %v2570 = vrot.slane %v2568, 4
        %v2571 = vshll.u32 %v2498, 16
        %v2573 = vrot.slane %v2571, 5
        %v2574 = vor.u32 %v2570, %v2573
        %v2575 = vrot.slane %v2574, 4
        %v2577 = vshll.u32 %v2499, 16
        %v2579 = vrot.slane %v2577, 5
        %v2580 = vsel %vm451, %v2575, %v2579
        %v2581 = vshrl.u32 %v2499, 16
        %v2583 = vrot.slane %v2581, 4
        %v2584 = vor.u32 %v2583, %v2579
        %v2585 = vrot.slane %v2584, 4
        %v2587 = vshll.u32 %v2500, 16
        %v2589 = vrot.slane %v2587, 5
        %v2590 = vsel %vm451, %v2585, %v2589
        %v2592 = vshrl.u32 %v2501, 16
        %v2594 = vrot.slane %v2592, 4
        %v2595 = vshll.u32 %v2501, 16
        %v2597 = vrot.slane %v2595, 5
        %v2598 = vor.u32 %v2594, %v2597
        %v2599 = vrot.slane %v2598, 4
        %v2601 = vshll.u32 %v2502, 16
        %v2603 = vrot.slane %v2601, 5
        %v2604 = vsel %vm451, %v2599, %v2603
        %v2605 = vshrl.u32 %v2502, 16
        %v2607 = vrot.slane %v2605, 4
        %v2608 = vor.u32 %v2607, %v2603
        %v2609 = vrot.slane %v2608, 4
        %v2611 = vshll.u32 %v2503, 16
        %v2613 = vrot.slane %v2611, 5
        %v2614 = vsel %vm451, %v2609, %v2613
        %v2616 = vshrl.u32 %v2504, 16
        %v2618 = vrot.slane %v2616, 4
        %v2619 = vshll.u32 %v2504, 16
        %v2621 = vrot.slane %v2619, 5
        %v2622 = vor.u32 %v2618, %v2621
        %v2623 = vrot.slane %v2622, 4
        %v2625 = vshll.u32 %v2505, 16
        %v2627 = vrot.slane %v2625, 5
        %v2628 = vsel %vm451, %v2623, %v2627
        %v2629 = vshrl.u32 %v2505, 16
        %v2631 = vrot.slane %v2629, 4
        %v2632 = vor.u32 %v2631, %v2627
        %v2633 = vrot.slane %v2632, 4
        %v2635 = vshll.u32 %v2506, 16
        %v2637 = vrot.slane %v2635, 5
        %v2638 = vsel %vm451, %v2633, %v2637
        %v2640 = vshrl.u32 %v2507, 16
        %v2642 = vrot.slane %v2640, 4
        %v2643 = vshll.u32 %v2507, 16
        %v2645 = vrot.slane %v2643, 5
        %v2646 = vor.u32 %v2642, %v2645
        %v2647 = vrot.slane %v2646, 4
        %v2649 = vshll.u32 %v2508, 16
        %v2651 = vrot.slane %v2649, 5
        %v2652 = vsel %vm451, %v2647, %v2651
        %v2653 = vshrl.u32 %v2508, 16
        %v2655 = vrot.slane %v2653, 4
        %v2656 = vor.u32 %v2655, %v2651
        %v2657 = vrot.slane %v2656, 4
        %v2659 = vshll.u32 %v2509, 16
        %v2661 = vrot.slane %v2659, 5
        %v2662 = vsel %vm451, %v2657, %v2661
        %v2664 = vshrl.u32 %v2510, 16
        %v2666 = vrot.slane %v2664, 4
        %v2667 = vshll.u32 %v2510, 16
        %v2669 = vrot.slane %v2667, 5
        %v2670 = vor.u32 %v2666, %v2669
        %v2671 = vrot.slane %v2670, 4
        %v2673 = vshll.u32 %v2511, 16
        %v2675 = vrot.slane %v2673, 5
        %v2676 = vsel %vm451, %v2671, %v2675
        %v2677 = vshrl.u32 %v2511, 16
        %v2679 = vrot.slane %v2677, 4
        %v2680 = vor.u32 %v2679, %v2675
        %v2681 = vrot.slane %v2680, 4
        %v2683 = vshll.u32 %v2512, 16
        %v2685 = vrot.slane %v2683, 5
        %v2686 = vsel %vm451, %v2681, %v2685
        %v2688 = vshrl.u32 %v2513, 16
        %v2690 = vrot.slane %v2688, 4
        %v2691 = vshll.u32 %v2513, 16
        %v2693 = vrot.slane %v2691, 5
        %v2694 = vor.u32 %v2690, %v2693
        %v2695 = vrot.slane %v2694, 4
        %v2697 = vshll.u32 %v2514, 16
        %v2699 = vrot.slane %v2697, 5
        %v2700 = vsel %vm451, %v2695, %v2699
        %v2701 = vshrl.u32 %v2514, 16
        %v2703 = vrot.slane %v2701, 4
        %v2704 = vor.u32 %v2703, %v2699
        %v2705 = vrot.slane %v2704, 4
        %v2707 = vshll.u32 %v2515, 16
        %v2709 = vrot.slane %v2707, 5
        %v2710 = vsel %vm451, %v2705, %v2709
        %v2712 = vshrl.u32 %v2516, 16
        %v2714 = vrot.slane %v2712, 4
        %v2715 = vshll.u32 %v2516, 16
        %v2717 = vrot.slane %v2715, 5
        %v2718 = vor.u32 %v2714, %v2717
        %v2719 = vrot.slane %v2718, 4
        %v2721 = vshll.u32 %v2517, 16
        %v2723 = vrot.slane %v2721, 5
        %v2724 = vsel %vm451, %v2719, %v2723
        %v2725 = vshrl.u32 %v2517, 16
        %v2727 = vrot.slane %v2725, 4
        %v2728 = vor.u32 %v2727, %v2723
        %v2729 = vrot.slane %v2728, 4
        %v2731 = vshll.u32 %v2518, 16
        %v2733 = vrot.slane %v2731, 5
        %v2734 = vsel %vm451, %v2729, %v2733
        %v2736 = vshrl.u32 %v2519, 16
        %v2738 = vrot.slane %v2736, 4
        %v2739 = vshll.u32 %v2519, 16
        %v2741 = vrot.slane %v2739, 5
        %v2742 = vor.u32 %v2738, %v2741
        %v2743 = vrot.slane %v2742, 4
        %v2745 = vshll.u32 %v2520, 16
        %v2747 = vrot.slane %v2745, 5
        %v2748 = vsel %vm451, %v2743, %v2747
        %v2749 = vshrl.u32 %v2520, 16
        %v2751 = vrot.slane %v2749, 4
        %v2752 = vor.u32 %v2751, %v2747
        %v2753 = vrot.slane %v2752, 4
        %v2755 = vshll.u32 %v2521, 16
        %v2757 = vrot.slane %v2755, 5
        %v2758 = vsel %vm451, %v2753, %v2757
        %v2760 = vshrl.u32 %v2522, 16
        %v2762 = vrot.slane %v2760, 4
        %v2763 = vshll.u32 %v2522, 16
        %v2765 = vrot.slane %v2763, 5
        %v2766 = vor.u32 %v2762, %v2765
        %v2767 = vrot.slane %v2766, 4
        %v2769 = vshll.u32 %v2523, 16
        %v2771 = vrot.slane %v2769, 5
        %v2772 = vsel %vm451, %v2767, %v2771
        %v2773 = vshrl.u32 %v2523, 16
        %v2775 = vrot.slane %v2773, 4
        %v2776 = vor.u32 %v2775, %v2771
        %v2777 = vrot.slane %v2776, 4
        %v2779 = vshll.u32 %v2524, 16
        %v2781 = vrot.slane %v2779, 5
        %v2782 = vsel %vm451, %v2777, %v2781
        %v2784 = vshrl.u32 %v2525, 16
        %v2786 = vrot.slane %v2784, 4
        %v2787 = vshll.u32 %v2525, 16
        %v2789 = vrot.slane %v2787, 5
        %v2790 = vor.u32 %v2786, %v2789
        %v2791 = vrot.slane %v2790, 4
        %v2793 = vshll.u32 %v2526, 16
        %v2795 = vrot.slane %v2793, 5
        %v2796 = vsel %vm451, %v2791, %v2795
        %v2797 = vshrl.u32 %v2526, 16
        %v2799 = vrot.slane %v2797, 4
        %v2800 = vor.u32 %v2799, %v2795
        %v2801 = vrot.slane %v2800, 4
        %v2803 = vshll.u32 %v2527, 16
        %v2805 = vrot.slane %v2803, 5
        %v2806 = vsel %vm451, %v2801, %v2805
        %v2808 = vshrl.u32 %v2528, 16
        %v2810 = vrot.slane %v2808, 4
        %v2811 = vshll.u32 %v2528, 16
        %v2813 = vrot.slane %v2811, 5
        %v2814 = vor.u32 %v2810, %v2813
        %v2815 = vrot.slane %v2814, 4
        %v2817 = vshll.u32 %v2529, 16
        %v2819 = vrot.slane %v2817, 5
        %v2820 = vsel %vm451, %v2815, %v2819
        %v2821 = vshrl.u32 %v2529, 16
        %v2823 = vrot.slane %v2821, 4
        %v2824 = vor.u32 %v2823, %v2819
        %v2825 = vrot.slane %v2824, 4
        %v2827 = vshll.u32 %v2530, 16
        %v2829 = vrot.slane %v2827, 5
        %v2830 = vsel %vm451, %v2825, %v2829
        %v2832 = vshrl.u32 %v2531, 16
        %v2834 = vrot.slane %v2832, 4
        %v2835 = vshll.u32 %v2531, 16
        %v2837 = vrot.slane %v2835, 5
        %v2838 = vor.u32 %v2834, %v2837
        %v2839 = vrot.slane %v2838, 4
        %v2841 = vshll.u32 %v2532, 16
        %v2843 = vrot.slane %v2841, 5
        %v2844 = vsel %vm451, %v2839, %v2843
        %v2845 = vshrl.u32 %v2532, 16
        %v2847 = vrot.slane %v2845, 4
        %v2848 = vor.u32 %v2847, %v2843
        %v2849 = vrot.slane %v2848, 4
        %v2851 = vshll.u32 %v2533, 16
        %v2853 = vrot.slane %v2851, 5
        %v2854 = vsel %vm451, %v2849, %v2853
        %v2856 = vshrl.u32 %v2534, 16
        %v2858 = vrot.slane %v2856, 4
        %v2859 = vshll.u32 %v2534, 16
        %v2861 = vrot.slane %v2859, 5
        %v2862 = vor.u32 %v2858, %v2861
        %v2863 = vrot.slane %v2862, 4
        %v2865 = vshll.u32 %v2535, 16
        %v2867 = vrot.slane %v2865, 5
        %v2868 = vsel %vm451, %v2863, %v2867
        %v2869 = vshrl.u32 %v2535, 16
        %v2871 = vrot.slane %v2869, 4
        %v2872 = vor.u32 %v2871, %v2867
        %v2873 = vrot.slane %v2872, 4
        %v2875 = vshll.u32 %v2536, 16
        %v2877 = vrot.slane %v2875, 5
        %v2878 = vsel %vm451, %v2873, %v2877
        %v2880 = vshrl.u32 %v2537, 16
        %v2882 = vrot.slane %v2880, 4
        %v2883 = vshll.u32 %v2537, 16
        %v2885 = vrot.slane %v2883, 5
        %v2886 = vor.u32 %v2882, %v2885
        %v2887 = vrot.slane %v2886, 4
        %v2889 = vshll.u32 %v2538, 16
        %v2891 = vrot.slane %v2889, 5
        %v2892 = vsel %vm451, %v2887, %v2891
        %v2893 = vshrl.u32 %v2538, 16
        %v2895 = vrot.slane %v2893, 4
        %v2896 = vor.u32 %v2895, %v2891
        %v2897 = vrot.slane %v2896, 4
        %v2899 = vshll.u32 %v2539, 16
        %v2901 = vrot.slane %v2899, 5
        %v2902 = vsel %vm451, %v2897, %v2901
        %v2904 = vshrl.u32 %v2540, 16
        %v2906 = vrot.slane %v2904, 4
        %v2907 = vshll.u32 %v2540, 16
        %v2909 = vrot.slane %v2907, 5
        %v2910 = vor.u32 %v2906, %v2909
        %v2911 = vrot.slane %v2910, 4
        %v2913 = vshll.u32 %v2541, 16
        %v2915 = vrot.slane %v2913, 5
        %v2916 = vsel %vm451, %v2911, %v2915
        %v2917 = vshrl.u32 %v2541, 16
        %v2919 = vrot.slane %v2917, 4
        %v2920 = vor.u32 %v2919, %v2915
        %v2921 = vrot.slane %v2920, 4
        %v2923 = vshll.u32 %v2542, 16
        %v2925 = vrot.slane %v2923, 5
        %v2926 = vsel %vm451, %v2921, %v2925
        %v2927 = vunpack.c.l.b16 %v2556
        %v2928 = vunpack.c.l.b16 %v2566
        %v2929 = vunpack.c.l.b16 %v2580
        %v2930 = vunpack.c.l.b16 %v2590
        %v2931 = vunpack.c.l.b16 %v2604
        %v2932 = vunpack.c.l.b16 %v2614
        %v2933 = vunpack.c.l.b16 %v2628
        %v2934 = vunpack.c.l.b16 %v2638
        %v2935 = vunpack.c.l.b16 %v2652
        %v2936 = vunpack.c.l.b16 %v2662
        %v2937 = vunpack.c.l.b16 %v2676
        %v2938 = vunpack.c.l.b16 %v2686
        %v2939 = vunpack.c.l.b16 %v2700
        %v2940 = vunpack.c.l.b16 %v2710
        %v2941 = vunpack.c.l.b16 %v2724
        %v2942 = vunpack.c.l.b16 %v2734
        %v2943 = vunpack.c.l.b16 %v2748
        %v2944 = vunpack.c.l.b16 %v2758
        %v2945 = vunpack.c.l.b16 %v2772
        %v2946 = vunpack.c.l.b16 %v2782
        %v2947 = vunpack.c.l.b16 %v2796
        %v2948 = vunpack.c.l.b16 %v2806
        %v2949 = vunpack.c.l.b16 %v2820
        %v2950 = vunpack.c.l.b16 %v2830
        %v2951 = vunpack.c.l.b16 %v2844
        %v2952 = vunpack.c.l.b16 %v2854
        %v2953 = vunpack.c.l.b16 %v2868
        %v2954 = vunpack.c.l.b16 %v2878
        %v2955 = vunpack.c.l.b16 %v2892
        %v2956 = vunpack.c.l.b16 %v2902
        %v2957 = vunpack.c.l.b16 %v2916
        %v2958 = vunpack.c.l.b16 %v2926
        %v2959 = vpack.c.b16 %v2928, %v2927
        %v2960 = vpack.c.b16 %v2930, %v2929
        %v2961 = vpack.c.b16 %v2932, %v2931
        %v2962 = vpack.c.b16 %v2934, %v2933
        %v2963 = vpack.c.b16 %v2936, %v2935
        %v2964 = vpack.c.b16 %v2938, %v2937
        %v2965 = vpack.c.b16 %v2940, %v2939
        %v2966 = vpack.c.b16 %v2942, %v2941
        %v2967 = vpack.c.b16 %v2944, %v2943
        %v2968 = vpack.c.b16 %v2946, %v2945
        %v2969 = vpack.c.b16 %v2948, %v2947
        %v2970 = vpack.c.b16 %v2950, %v2949
        %v2971 = vpack.c.b16 %v2952, %v2951
        %v2972 = vpack.c.b16 %v2954, %v2953
        %v2973 = vpack.c.b16 %v2956, %v2955
        %v2974 = vpack.c.b16 %v2958, %v2957
        %2975 = vrot.lane.b32.xlu0 %v2959, 28
        %v2976 = vpop.permute.xlu0 %2975
        %2977 = vrot.lane.b32.xlu0 %v2960, 28
        %v2978 = vpop.permute.xlu0 %2977
        %2979 = vrot.lane.b32.xlu0 %v2961, 28
        %v2980 = vpop.permute.xlu0 %2979
        %2981 = vrot.lane.b32.xlu0 %v2962, 28
        %v2982 = vpop.permute.xlu0 %2981
        %2983 = vrot.lane.b32.xlu0 %v2963, 28
        %v2984 = vpop.permute.xlu0 %2983
        %2985 = vrot.lane.b32.xlu0 %v2964, 28
        %v2986 = vpop.permute.xlu0 %2985
        %2987 = vrot.lane.b32.xlu0 %v2965, 28
        %v2988 = vpop.permute.xlu0 %2987
        %2989 = vrot.lane.b32.xlu0 %v2966, 28
        %v2990 = vpop.permute.xlu0 %2989
        %2991 = vrot.lane.b32.xlu0 %v2967, 28
        %v2992 = vpop.permute.xlu0 %2991
        %2993 = vrot.lane.b32.xlu0 %v2968, 28
        %v2994 = vpop.permute.xlu0 %2993
        %2995 = vrot.lane.b32.xlu0 %v2969, 28
        %v2996 = vpop.permute.xlu0 %2995
        %2997 = vrot.lane.b32.xlu0 %v2970, 28
        %v2998 = vpop.permute.xlu0 %2997
        %2999 = vrot.lane.b32.xlu0 %v2971, 28
        %v3000 = vpop.permute.xlu0 %2999
        %3001 = vrot.lane.b32.xlu0 %v2972, 28
        %v3002 = vpop.permute.xlu0 %3001
        %3003 = vrot.lane.b32.xlu0 %v2973, 28
        %v3004 = vpop.permute.xlu0 %3003
        %3005 = vrot.lane.b32.xlu0 %v2974, 28
        %v3006 = vpop.permute.xlu0 %3005
        %vm3023 = vcmask 261344
        %3024 = vst.msk [vmem:[#allocation2] sm:$0xff] %vm3023, %v2976
        %3025 = vst.msk [vmem:[#allocation2 + $0x8] sm:$0xff] %vm3023, %v2978
        %3026 = vst.msk [vmem:[#allocation2 + $0x10] sm:$0xff] %vm3023, %v2980
        %3027 = vst.msk [vmem:[#allocation2 + $0x18] sm:$0xff] %vm3023, %v2982
        %3028 = vst.msk [vmem:[#allocation2 + $0x20] sm:$0xff] %vm3023, %v2984
        %3029 = vst.msk [vmem:[#allocation2 + $0x28] sm:$0xff] %vm3023, %v2986
        %3030 = vst.msk [vmem:[#allocation2 + $0x30] sm:$0xff] %vm3023, %v2988
        %3031 = vst.msk [vmem:[#allocation2 + $0x38] sm:$0xff] %vm3023, %v2990
        %3032 = vst.msk [vmem:[#allocation2 + $0x40] sm:$0xff] %vm3023, %v2992
        %3033 = vst.msk [vmem:[#allocation2 + $0x48] sm:$0xff] %vm3023, %v2994
        %3034 = vst.msk [vmem:[#allocation2 + $0x50] sm:$0xff] %vm3023, %v2996
        %3035 = vst.msk [vmem:[#allocation2 + $0x58] sm:$0xff] %vm3023, %v2998
        %3036 = vst.msk [vmem:[#allocation2 + $0x60] sm:$0xff] %vm3023, %v3000
        %3037 = vst.msk [vmem:[#allocation2 + $0x68] sm:$0xff] %vm3023, %v3002
        %3038 = vst.msk [vmem:[#allocation2 + $0x70] sm:$0xff] %vm3023, %v3004
        %3039 = vst.msk [vmem:[#allocation2 + $0x78] sm:$0xff] %vm3023, %v3006
        %v3040 = vld [vmem:[%s2317] sm:$0xe]
        %v3041 = vld [vmem:[%s2317 + $0x4] sm:$0xf]
        %v3042 = vld [vmem:[%s2317 + $0x8] sm:$0x1]
        %v3043 = vld [vmem:[%s2317 + $0xc] sm:$0xe]
        %v3044 = vld [vmem:[%s2317 + $0x10] sm:$0xf]
        %v3045 = vld [vmem:[%s2317 + $0x14] sm:$0x1]
        %v3046 = vld [vmem:[%s2317 + $0x18] sm:$0xe]
        %v3047 = vld [vmem:[%s2317 + $0x1c] sm:$0xf]
        %v3048 = vld [vmem:[%s2317 + $0x20] sm:$0x1]
        %v3049 = vld [vmem:[%s2317 + $0x24] sm:$0xe]
        %v3050 = vld [vmem:[%s2317 + $0x28] sm:$0xf]
        %v3051 = vld [vmem:[%s2317 + $0x2c] sm:$0x1]
        %v3052 = vld [vmem:[%s2317 + $0x30] sm:$0xe]
        %v3053 = vld [vmem:[%s2317 + $0x34] sm:$0xf]
        %v3054 = vld [vmem:[%s2317 + $0x38] sm:$0x1]
        %v3055 = vld [vmem:[%s2317 + $0x3c] sm:$0xe]
        %v3056 = vld [vmem:[%s2317 + $0x40] sm:$0xf]
        %v3057 = vld [vmem:[%s2317 + $0x44] sm:$0x1]
        %v3058 = vld [vmem:[%s2317 + $0x48] sm:$0xe]
        %v3059 = vld [vmem:[%s2317 + $0x4c] sm:$0xf]
        %v3060 = vld [vmem:[%s2317 + $0x50] sm:$0x1]
        %v3061 = vld [vmem:[%s2317 + $0x54] sm:$0xe]
        %v3062 = vld [vmem:[%s2317 + $0x58] sm:$0xf]
        %v3063 = vld [vmem:[%s2317 + $0x5c] sm:$0x1]
        %v3064 = vld [vmem:[%s2317 + $0x60] sm:$0xe]
        %v3065 = vld [vmem:[%s2317 + $0x64] sm:$0xf]
        %v3066 = vld [vmem:[%s2317 + $0x68] sm:$0x1]
        %v3067 = vld [vmem:[%s2317 + $0x6c] sm:$0xe]
        %v3068 = vld [vmem:[%s2317 + $0x70] sm:$0xf]
        %v3069 = vld [vmem:[%s2317 + $0x74] sm:$0x1]
        %v3070 = vld [vmem:[%s2317 + $0x78] sm:$0xe]
        %v3071 = vld [vmem:[%s2317 + $0x7c] sm:$0xf]
        %v3072 = vld [vmem:[%s2317 + $0x80] sm:$0x1]
        %v3073 = vld [vmem:[%s2317 + $0x84] sm:$0xe]
        %v3074 = vld [vmem:[%s2317 + $0x88] sm:$0xf]
        %v3075 = vld [vmem:[%s2317 + $0x8c] sm:$0x1]
        %v3076 = vld [vmem:[%s2317 + $0x90] sm:$0xe]
        %v3077 = vld [vmem:[%s2317 + $0x94] sm:$0xf]
        %v3078 = vld [vmem:[%s2317 + $0x98] sm:$0x1]
        %v3079 = vld [vmem:[%s2317 + $0x9c] sm:$0xe]
        %v3080 = vld [vmem:[%s2317 + $0xa0] sm:$0xf]
        %v3081 = vld [vmem:[%s2317 + $0xa4] sm:$0x1]
        %v3082 = vld [vmem:[%s2317 + $0xa8] sm:$0xe]
        %v3083 = vld [vmem:[%s2317 + $0xac] sm:$0xf]
        %v3084 = vld [vmem:[%s2317 + $0xb0] sm:$0x1]
        %v3085 = vld [vmem:[%s2317 + $0xb4] sm:$0xe]
        %v3086 = vld [vmem:[%s2317 + $0xb8] sm:$0xf]
        %v3087 = vld [vmem:[%s2317 + $0xbc] sm:$0x1]
        %v3136 = vrot.slane %v3040, 5
        %v3137 = vrot.slane %v3136, 4
        %v3138 = vrot.slane %v3041, 5
        %v3139 = vsel %vm1047, %v3137, %v3138
        %v3140 = vrot.slane %v3138, 4
        %v3141 = vrot.slane %v3042, 5
        %v3142 = vsel %vm1047, %v3140, %v3141
        %v3143 = vrot.slane %v3043, 5
        %v3144 = vrot.slane %v3143, 4
        %v3145 = vrot.slane %v3044, 5
        %v3146 = vsel %vm1047, %v3144, %v3145
        %v3147 = vrot.slane %v3145, 4
        %v3148 = vrot.slane %v3045, 5
        %v3149 = vsel %vm1047, %v3147, %v3148
        %v3150 = vrot.slane %v3046, 5
        %v3151 = vrot.slane %v3150, 4
        %v3152 = vrot.slane %v3047, 5
        %v3153 = vsel %vm1047, %v3151, %v3152
        %v3154 = vrot.slane %v3152, 4
        %v3155 = vrot.slane %v3048, 5
        %v3156 = vsel %vm1047, %v3154, %v3155
        %v3157 = vrot.slane %v3049, 5
        %v3158 = vrot.slane %v3157, 4
        %v3159 = vrot.slane %v3050, 5
        %v3160 = vsel %vm1047, %v3158, %v3159
        %v3161 = vrot.slane %v3159, 4
        %v3162 = vrot.slane %v3051, 5
        %v3163 = vsel %vm1047, %v3161, %v3162
        %v3164 = vrot.slane %v3052, 5
        %v3165 = vrot.slane %v3164, 4
        %v3166 = vrot.slane %v3053, 5
        %v3167 = vsel %vm1047, %v3165, %v3166
        %v3168 = vrot.slane %v3166, 4
        %v3169 = vrot.slane %v3054, 5
        %v3170 = vsel %vm1047, %v3168, %v3169
        %v3171 = vrot.slane %v3055, 5
        %v3172 = vrot.slane %v3171, 4
        %v3173 = vrot.slane %v3056, 5
        %v3174 = vsel %vm1047, %v3172, %v3173
        %v3175 = vrot.slane %v3173, 4
        %v3176 = vrot.slane %v3057, 5
        %v3177 = vsel %vm1047, %v3175, %v3176
        %v3178 = vrot.slane %v3058, 5
        %v3179 = vrot.slane %v3178, 4
        %v3180 = vrot.slane %v3059, 5
        %v3181 = vsel %vm1047, %v3179, %v3180
        %v3182 = vrot.slane %v3180, 4
        %v3183 = vrot.slane %v3060, 5
        %v3184 = vsel %vm1047, %v3182, %v3183
        %v3185 = vrot.slane %v3061, 5
        %v3186 = vrot.slane %v3185, 4
        %v3187 = vrot.slane %v3062, 5
        %v3188 = vsel %vm1047, %v3186, %v3187
        %v3189 = vrot.slane %v3187, 4
        %v3190 = vrot.slane %v3063, 5
        %v3191 = vsel %vm1047, %v3189, %v3190
        %v3192 = vrot.slane %v3064, 5
        %v3193 = vrot.slane %v3192, 4
        %v3194 = vrot.slane %v3065, 5
        %v3195 = vsel %vm1047, %v3193, %v3194
        %v3196 = vrot.slane %v3194, 4
        %v3197 = vrot.slane %v3066, 5
        %v3198 = vsel %vm1047, %v3196, %v3197
        %v3199 = vrot.slane %v3067, 5
        %v3200 = vrot.slane %v3199, 4
        %v3201 = vrot.slane %v3068, 5
        %v3202 = vsel %vm1047, %v3200, %v3201
        %v3203 = vrot.slane %v3201, 4
        %v3204 = vrot.slane %v3069, 5
        %v3205 = vsel %vm1047, %v3203, %v3204
        %v3206 = vrot.slane %v3070, 5
        %v3207 = vrot.slane %v3206, 4
        %v3208 = vrot.slane %v3071, 5
        %v3209 = vsel %vm1047, %v3207, %v3208
        %v3210 = vrot.slane %v3208, 4
        %v3211 = vrot.slane %v3072, 5
        %v3212 = vsel %vm1047, %v3210, %v3211
        %v3213 = vrot.slane %v3073, 5
        %v3214 = vrot.slane %v3213, 4
        %v3215 = vrot.slane %v3074, 5
        %v3216 = vsel %vm1047, %v3214, %v3215
        %v3217 = vrot.slane %v3215, 4
        %v3218 = vrot.slane %v3075, 5
        %v3219 = vsel %vm1047, %v3217, %v3218
        %v3220 = vrot.slane %v3076, 5
        %v3221 = vrot.slane %v3220, 4
        %v3222 = vrot.slane %v3077, 5
        %v3223 = vsel %vm1047, %v3221, %v3222
        %v3224 = vrot.slane %v3222, 4
        %v3225 = vrot.slane %v3078, 5
        %v3226 = vsel %vm1047, %v3224, %v3225
        %v3227 = vrot.slane %v3079, 5
        %v3228 = vrot.slane %v3227, 4
        %v3229 = vrot.slane %v3080, 5
        %v3230 = vsel %vm1047, %v3228, %v3229
        %v3231 = vrot.slane %v3229, 4
        %v3232 = vrot.slane %v3081, 5
        %v3233 = vsel %vm1047, %v3231, %v3232
        %v3234 = vrot.slane %v3082, 5
        %v3235 = vrot.slane %v3234, 4
        %v3236 = vrot.slane %v3083, 5
        %v3237 = vsel %vm1047, %v3235, %v3236
        %v3238 = vrot.slane %v3236, 4
        %v3239 = vrot.slane %v3084, 5
        %v3240 = vsel %vm1047, %v3238, %v3239
        %v3241 = vrot.slane %v3085, 5
        %v3242 = vrot.slane %v3241, 4
        %v3243 = vrot.slane %v3086, 5
        %v3244 = vsel %vm1047, %v3242, %v3243
        %v3245 = vrot.slane %v3243, 4
        %v3246 = vrot.slane %v3087, 5
        %v3247 = vsel %vm1047, %v3245, %v3246
        %v3248 = vunpack.c.l.b16 %v3139
        %v3249 = vunpack.c.l.b16 %v3142
        %v3250 = vunpack.c.l.b16 %v3146
        %v3251 = vunpack.c.l.b16 %v3149
        %v3252 = vunpack.c.l.b16 %v3153
        %v3253 = vunpack.c.l.b16 %v3156
        %v3254 = vunpack.c.l.b16 %v3160
        %v3255 = vunpack.c.l.b16 %v3163
        %v3256 = vunpack.c.l.b16 %v3167
        %v3257 = vunpack.c.l.b16 %v3170
        %v3258 = vunpack.c.l.b16 %v3174
        %v3259 = vunpack.c.l.b16 %v3177
        %v3260 = vunpack.c.l.b16 %v3181
        %v3261 = vunpack.c.l.b16 %v3184
        %v3262 = vunpack.c.l.b16 %v3188
        %v3263 = vunpack.c.l.b16 %v3191
        %v3264 = vunpack.c.l.b16 %v3195
        %v3265 = vunpack.c.l.b16 %v3198
        %v3266 = vunpack.c.l.b16 %v3202
        %v3267 = vunpack.c.l.b16 %v3205
        %v3268 = vunpack.c.l.b16 %v3209
        %v3269 = vunpack.c.l.b16 %v3212
        %v3270 = vunpack.c.l.b16 %v3216
        %v3271 = vunpack.c.l.b16 %v3219
        %v3272 = vunpack.c.l.b16 %v3223
        %v3273 = vunpack.c.l.b16 %v3226
        %v3274 = vunpack.c.l.b16 %v3230
        %v3275 = vunpack.c.l.b16 %v3233
        %v3276 = vunpack.c.l.b16 %v3237
        %v3277 = vunpack.c.l.b16 %v3240
        %v3278 = vunpack.c.l.b16 %v3244
        %v3279 = vunpack.c.l.b16 %v3247
        %v3280 = vpack.c.b16 %v3249, %v3248
        %v3281 = vpack.c.b16 %v3251, %v3250
        %v3282 = vpack.c.b16 %v3253, %v3252
        %v3283 = vpack.c.b16 %v3255, %v3254
        %v3284 = vpack.c.b16 %v3257, %v3256
        %v3285 = vpack.c.b16 %v3259, %v3258
        %v3286 = vpack.c.b16 %v3261, %v3260
        %v3287 = vpack.c.b16 %v3263, %v3262
        %v3288 = vpack.c.b16 %v3265, %v3264
        %v3289 = vpack.c.b16 %v3267, %v3266
        %v3290 = vpack.c.b16 %v3269, %v3268
        %v3291 = vpack.c.b16 %v3271, %v3270
        %v3292 = vpack.c.b16 %v3273, %v3272
        %v3293 = vpack.c.b16 %v3275, %v3274
        %v3294 = vpack.c.b16 %v3277, %v3276
        %v3295 = vpack.c.b16 %v3279, %v3278
        %3296 = vrot.lane.b32.xlu0 %v3280, 32
        %v3297 = vpop.permute.xlu0 %3296
        %3298 = vrot.lane.b32.xlu0 %v3281, 32
        %v3299 = vpop.permute.xlu0 %3298
        %3300 = vrot.lane.b32.xlu0 %v3282, 32
        %v3301 = vpop.permute.xlu0 %3300
        %3302 = vrot.lane.b32.xlu0 %v3283, 32
        %v3303 = vpop.permute.xlu0 %3302
        %3304 = vrot.lane.b32.xlu0 %v3284, 32
        %v3305 = vpop.permute.xlu0 %3304
        %3306 = vrot.lane.b32.xlu0 %v3285, 32
        %v3307 = vpop.permute.xlu0 %3306
        %3308 = vrot.lane.b32.xlu0 %v3286, 32
        %v3309 = vpop.permute.xlu0 %3308
        %3310 = vrot.lane.b32.xlu0 %v3287, 32
        %v3311 = vpop.permute.xlu0 %3310
        %3312 = vrot.lane.b32.xlu0 %v3288, 32
        %v3313 = vpop.permute.xlu0 %3312
        %3314 = vrot.lane.b32.xlu0 %v3289, 32
        %v3315 = vpop.permute.xlu0 %3314
        %3316 = vrot.lane.b32.xlu0 %v3290, 32
        %v3317 = vpop.permute.xlu0 %3316
        %3318 = vrot.lane.b32.xlu0 %v3291, 32
        %v3319 = vpop.permute.xlu0 %3318
        %3320 = vrot.lane.b32.xlu0 %v3292, 32
        %v3321 = vpop.permute.xlu0 %3320
        %3322 = vrot.lane.b32.xlu0 %v3293, 32
        %v3323 = vpop.permute.xlu0 %3322
        %3324 = vrot.lane.b32.xlu0 %v3294, 32
        %v3325 = vpop.permute.xlu0 %3324
        %3326 = vrot.lane.b32.xlu0 %v3295, 32
        %v3327 = vpop.permute.xlu0 %3326
        %vm3344 = vcmask 294144
        %3345 = vst.msk [vmem:[#allocation2] sm:$0xff] %vm3344, %v3297
        %3346 = vst.msk [vmem:[#allocation2 + $0x8] sm:$0xff] %vm3344, %v3299
        %3347 = vst.msk [vmem:[#allocation2 + $0x10] sm:$0xff] %vm3344, %v3301
        %3348 = vst.msk [vmem:[#allocation2 + $0x18] sm:$0xff] %vm3344, %v3303
        %3349 = vst.msk [vmem:[#allocation2 + $0x20] sm:$0xff] %vm3344, %v3305
        %3350 = vst.msk [vmem:[#allocation2 + $0x28] sm:$0xff] %vm3344, %v3307
        %3351 = vst.msk [vmem:[#allocation2 + $0x30] sm:$0xff] %vm3344, %v3309
        %3352 = vst.msk [vmem:[#allocation2 + $0x38] sm:$0xff] %vm3344, %v3311
        %3353 = vst.msk [vmem:[#allocation2 + $0x40] sm:$0xff] %vm3344, %v3313
        %3354 = vst.msk [vmem:[#allocation2 + $0x48] sm:$0xff] %vm3344, %v3315
        %3355 = vst.msk [vmem:[#allocation2 + $0x50] sm:$0xff] %vm3344, %v3317
        %3356 = vst.msk [vmem:[#allocation2 + $0x58] sm:$0xff] %vm3344, %v3319
        %3357 = vst.msk [vmem:[#allocation2 + $0x60] sm:$0xff] %vm3344, %v3321
        %3358 = vst.msk [vmem:[#allocation2 + $0x68] sm:$0xff] %vm3344, %v3323
        %3359 = vst.msk [vmem:[#allocation2 + $0x70] sm:$0xff] %vm3344, %v3325
        %3360 = vst.msk [vmem:[#allocation2 + $0x78] sm:$0xff] %vm3344, %v3327
        %v3361 = vld [vmem:[#allocation2] sm:$0xff]
        %v3362 = vld [vmem:[#allocation2 + $0x8] sm:$0xff]
        %v3363 = vld [vmem:[#allocation2 + $0x10] sm:$0xff]
        %v3364 = vld [vmem:[#allocation2 + $0x18] sm:$0xff]
        %v3365 = vld [vmem:[#allocation2 + $0x20] sm:$0xff]
        %v3366 = vld [vmem:[#allocation2 + $0x28] sm:$0xff]
        %v3367 = vld [vmem:[#allocation2 + $0x30] sm:$0xff]
        %v3368 = vld [vmem:[#allocation2 + $0x38] sm:$0xff]
        %v3369 = vld [vmem:[#allocation2 + $0x40] sm:$0xff]
        %v3370 = vld [vmem:[#allocation2 + $0x48] sm:$0xff]
        %v3371 = vld [vmem:[#allocation2 + $0x50] sm:$0xff]
        %v3372 = vld [vmem:[#allocation2 + $0x58] sm:$0xff]
        %v3373 = vld [vmem:[#allocation2 + $0x60] sm:$0xff]
        %v3374 = vld [vmem:[#allocation2 + $0x68] sm:$0xff]
        %v3375 = vld [vmem:[#allocation2 + $0x70] sm:$0xff]
        %v3376 = vld [vmem:[#allocation2 + $0x78] sm:$0xff]
        %v3377 = vld [vmem:[%s248] sm:$0xf]
        %v3378 = vld [vmem:[%s248 + $0x4] sm:$0xf]
        %v3379 = vld [vmem:[%s248 + $0x8] sm:$0xf]
        %v3380 = vld [vmem:[%s248 + $0xc] sm:$0xf]
        %v3381 = vld [vmem:[%s248 + $0x10] sm:$0x3]
        %v3387 = vunpack.c.l.b16 %v3377
        %v3388 = vunpack.c.l.b16 %v3378
        %v3389 = vunpack.c.l.b16 %v3379
        %v3390 = vunpack.c.l.b16 %v3380
        %v3391 = vunpack.c.l.b16 %v3381
        %v3392 = vpack.c.b16 %v3388, %v3387
        %v3393 = vpack.c.b16 %v3390, %v3389
        %v3394 = vpack.c.b16 %v3391, %v3391
        %vm3397 = vcmask 293888
        %v3399 = vsel %vm3397, %v3361, 0
        %v3402 = vsel %vm3397, %v3362, 0
        %v3405 = vsel %vm3397, %v3363, 0
        %v3408 = vsel %vm3397, %v3364, 0
        %v3411 = vsel %vm3397, %v3365, 0
        %v3414 = vsel %vm3397, %v3366, 0
        %v3417 = vsel %vm3397, %v3367, 0
        %v3420 = vsel %vm3397, %v3368, 0
        %v3423 = vsel %vm3397, %v3369, 0
        %v3426 = vsel %vm3397, %v3370, 0
        %v3429 = vsel %vm3397, %v3371, 0
        %v3432 = vsel %vm3397, %v3372, 0
        %v3435 = vsel %vm3397, %v3373, 0
        %v3438 = vsel %vm3397, %v3374, 0
        %v3441 = vsel %vm3397, %v3375, 0
        %v3444 = vsel %vm3397, %v3376, 0
        %vm3446 = vcmask 1041408
        %v3448 = vsel %vm3446, %v3394, 0
        %3450 = vmatprep.subr.bf16.mxu0 0
        %3451 = vmatpush1.bf16.msra.mxu0 %v3392
        %3452 = vmatprep.subr.bf16.mxu0 0
        %3453 = vmatpush1.bf16.msra.mxu0 %v3393
        %3454 = vmatprep.subr.bf16.mxu0 0
        %3455 = vmatpush1.bf16.msra.mxu0 %v3448
        %3456 = vmatprep.subr.bf16.mxu0 0
        %3457 = vmatpush1.bf16.msra.mxu0 0
        %3458 = vmatprep.subr.bf16.mxu0 0
        %3459 = vmatpush1.bf16.msra.mxu0 0
        %3460 = vmatprep.subr.bf16.mxu0 0
        %3461 = vmatpush1.bf16.msra.mxu0 0
        %3462 = vmatprep.subr.bf16.mxu0 0
        %3463 = vmatpush1.bf16.msra.mxu0 0
        %3464 = vmatprep.subr.bf16.mxu0 0
        %3465 = vmatpush1.bf16.msra.mxu0 0
        %3466 = vmatprep.subr.bf16.mxu0 0
        %3467 = vmatpush1.bf16.msra.mxu0 0
        %3468 = vmatprep.subr.bf16.mxu0 0
        %3469 = vmatpush1.bf16.msra.mxu0 0
        %3470 = vmatprep.subr.bf16.mxu0 0
        %3471 = vmatpush1.bf16.msra.mxu0 0
        %3472 = vmatprep.subr.bf16.mxu0 0
        %3473 = vmatpush1.bf16.msra.mxu0 0
        %3474 = vmatprep.subr.bf16.mxu0 0
        %3475 = vmatpush1.bf16.msra.mxu0 0
        %3476 = vmatprep.subr.bf16.mxu0 0
        %3477 = vmatpush1.bf16.msra.mxu0 0
        %3478 = vmatprep.subr.bf16.mxu0 0
        %3479 = vmatpush1.bf16.msra.mxu0 0
        %3480 = vmatprep.subr.bf16.mxu0 0
        %3481 = vmatpush1.bf16.msra.mxu0 0
        %3482 = vmatprep.mubr.bf16.mxu0 0
        %3483 = vmatmul.mubr.bf16.gmra.mrb[0].mxu0 %v3399
        %v3484 = vpop.f32.mrb[0].mxu0
        %v3485 = vadd.f32 0.0, %v3484
        %v3486 = vpop.f32.mrb[0].mxu0
        %v3487 = vpop.f32.mrb[0].mxu0
        %v3488 = vadd.f32 0.0, %v3487
        %v3489 = vpop.f32.mrb[0].mxu0
        %3490 = vmatprep.mubr.bf16.mxu0 0
        %3491 = vmatmul.mubr.bf16.gmra.mrb[0].mxu0 %v3402
        %v3492 = vpop.f32.mrb[0].mxu0
        %v3493 = vadd.f32 0.0, %v3492
        %v3494 = vpop.f32.mrb[0].mxu0
        %v3495 = vpop.f32.mrb[0].mxu0
        %v3496 = vadd.f32 0.0, %v3495
        %v3497 = vpop.f32.mrb[0].mxu0
        %3498 = vmatprep.mubr.bf16.mxu0 0
        %3499 = vmatmul.mubr.bf16.gmra.mrb[0].mxu0 %v3405
        %v3500 = vpop.f32.mrb[0].mxu0
        %v3501 = vadd.f32 0.0, %v3500
        %v3502 = vpop.f32.mrb[0].mxu0
        %v3503 = vpop.f32.mrb[0].mxu0
        %v3504 = vadd.f32 0.0, %v3503
        %v3505 = vpop.f32.mrb[0].mxu0
        %3506 = vmatprep.mubr.bf16.mxu0 0
        %3507 = vmatmul.mubr.bf16.gmra.mrb[0].mxu0 %v3408
        %v3508 = vpop.f32.mrb[0].mxu0
        %v3509 = vadd.f32 0.0, %v3508
        %v3510 = vpop.f32.mrb[0].mxu0
        %v3511 = vpop.f32.mrb[0].mxu0
        %v3512 = vadd.f32 0.0, %v3511
        %v3513 = vpop.f32.mrb[0].mxu0
        %3514 = vmatprep.mubr.bf16.mxu0 0
        %3515 = vmatmul.mubr.bf16.gmra.mrb[0].mxu0 %v3411
        %v3516 = vpop.f32.mrb[0].mxu0
        %v3517 = vadd.f32 0.0, %v3516
        %v3518 = vpop.f32.mrb[0].mxu0
        %v3519 = vpop.f32.mrb[0].mxu0
        %v3520 = vadd.f32 0.0, %v3519
        %v3521 = vpop.f32.mrb[0].mxu0
        %3522 = vmatprep.mubr.bf16.mxu0 0
        %3523 = vmatmul.mubr.bf16.gmra.mrb[0].mxu0 %v3414
        %v3524 = vpop.f32.mrb[0].mxu0
        %v3525 = vadd.f32 0.0, %v3524
        %v3526 = vpop.f32.mrb[0].mxu0
        %v3527 = vpop.f32.mrb[0].mxu0
        %v3528 = vadd.f32 0.0, %v3527
        %v3529 = vpop.f32.mrb[0].mxu0
        %3530 = vmatprep.mubr.bf16.mxu0 0
        %3531 = vmatmul.mubr.bf16.gmra.mrb[0].mxu0 %v3417
        %v3532 = vpop.f32.mrb[0].mxu0
        %v3533 = vadd.f32 0.0, %v3532
        %v3534 = vpop.f32.mrb[0].mxu0
        %v3535 = vpop.f32.mrb[0].mxu0
        %v3536 = vadd.f32 0.0, %v3535
        %v3537 = vpop.f32.mrb[0].mxu0
        %3538 = vmatprep.mubr.bf16.mxu0 0
        %3539 = vmatmul.mubr.bf16.gmra.mrb[0].mxu0 %v3420
        %v3540 = vpop.f32.mrb[0].mxu0
        %v3541 = vadd.f32 0.0, %v3540
        %v3542 = vpop.f32.mrb[0].mxu0
        %v3543 = vpop.f32.mrb[0].mxu0
        %v3544 = vadd.f32 0.0, %v3543
        %v3545 = vpop.f32.mrb[0].mxu0
        %3546 = vmatprep.mubr.bf16.mxu0 0
        %3547 = vmatmul.mubr.bf16.gmra.mrb[0].mxu0 %v3423
        %v3548 = vpop.f32.mrb[0].mxu0
        %v3549 = vadd.f32 0.0, %v3548
        %v3550 = vpop.f32.mrb[0].mxu0
        %v3551 = vpop.f32.mrb[0].mxu0
        %v3552 = vadd.f32 0.0, %v3551
        %v3553 = vpop.f32.mrb[0].mxu0
        %3554 = vmatprep.mubr.bf16.mxu0 0
        %3555 = vmatmul.mubr.bf16.gmra.mrb[0].mxu0 %v3426
        %v3556 = vpop.f32.mrb[0].mxu0
        %v3557 = vadd.f32 0.0, %v3556
        %v3558 = vpop.f32.mrb[0].mxu0
        %v3559 = vpop.f32.mrb[0].mxu0
        %v3560 = vadd.f32 0.0, %v3559
        %v3561 = vpop.f32.mrb[0].mxu0
        %3562 = vmatprep.mubr.bf16.mxu0 0
        %3563 = vmatmul.mubr.bf16.gmra.mrb[0].mxu0 %v3429
        %v3564 = vpop.f32.mrb[0].mxu0
        %v3565 = vadd.f32 0.0, %v3564
        %v3566 = vpop.f32.mrb[0].mxu0
        %v3567 = vpop.f32.mrb[0].mxu0
        %v3568 = vadd.f32 0.0, %v3567
        %v3569 = vpop.f32.mrb[0].mxu0
        %3570 = vmatprep.mubr.bf16.mxu0 0
        %3571 = vmatmul.mubr.bf16.gmra.mrb[0].mxu0 %v3432
        %v3572 = vpop.f32.mrb[0].mxu0
        %v3573 = vadd.f32 0.0, %v3572
        %v3574 = vpop.f32.mrb[0].mxu0
        %v3575 = vpop.f32.mrb[0].mxu0
        %v3576 = vadd.f32 0.0, %v3575
        %v3577 = vpop.f32.mrb[0].mxu0
        %3578 = vmatprep.mubr.bf16.mxu0 0
        %3579 = vmatmul.mubr.bf16.gmra.mrb[0].mxu0 %v3435
        %v3580 = vpop.f32.mrb[0].mxu0
        %v3581 = vadd.f32 0.0, %v3580
        %v3582 = vpop.f32.mrb[0].mxu0
        %v3583 = vpop.f32.mrb[0].mxu0
        %v3584 = vadd.f32 0.0, %v3583
        %v3585 = vpop.f32.mrb[0].mxu0
        %3586 = vmatprep.mubr.bf16.mxu0 0
        %3587 = vmatmul.mubr.bf16.gmra.mrb[0].mxu0 %v3438
        %v3588 = vpop.f32.mrb[0].mxu0
        %v3589 = vadd.f32 0.0, %v3588
        %v3590 = vpop.f32.mrb[0].mxu0
        %v3591 = vpop.f32.mrb[0].mxu0
        %v3592 = vadd.f32 0.0, %v3591
        %v3593 = vpop.f32.mrb[0].mxu0
        %3594 = vmatprep.mubr.bf16.mxu0 0
        %3595 = vmatmul.mubr.bf16.gmra.mrb[0].mxu0 %v3441
        %v3596 = vpop.f32.mrb[0].mxu0
        %v3597 = vadd.f32 0.0, %v3596
        %v3598 = vpop.f32.mrb[0].mxu0
        %v3599 = vpop.f32.mrb[0].mxu0
        %v3600 = vadd.f32 0.0, %v3599
        %v3601 = vpop.f32.mrb[0].mxu0
        %3602 = vmatprep.mubr.bf16.mxu0 0
        %3603 = vmatmul.mubr.bf16.gmra.mrb[0].mxu0 %v3444
        %v3604 = vpop.f32.mrb[0].mxu0
        %v3605 = vadd.f32 0.0, %v3604
        %v3606 = vpop.f32.mrb[0].mxu0
        %v3607 = vpop.f32.mrb[0].mxu0
        %v3608 = vadd.f32 0.0, %v3607
        %v3609 = vpop.f32.mrb[0].mxu0
        %3610 = vdwg.mxu0
        %v3611 = vld [vmem:[%s251] sm:$0x1]
        %v3613 = vlaneseq
        %v3614 = vshrl.u32 %v3613, 7
        %v3615 = vsub.s32 0, %v3614
        %v3616 = vrot.slane %v3611, %v3615
        %v3618 = vmul.f32 %v3485, %v3616
        %v3619 = vmul.f32 %v3488, %v3616
        %v3620 = vmul.f32 %v3493, %v3616
        %v3621 = vmul.f32 %v3496, %v3616
        %v3622 = vmul.f32 %v3501, %v3616
        %v3623 = vmul.f32 %v3504, %v3616
        %v3624 = vmul.f32 %v3509, %v3616
        %v3625 = vmul.f32 %v3512, %v3616
        %v3626 = vmul.f32 %v3517, %v3616
        %v3627 = vmul.f32 %v3520, %v3616
        %v3628 = vmul.f32 %v3525, %v3616
        %v3629 = vmul.f32 %v3528, %v3616
        %v3630 = vmul.f32 %v3533, %v3616
        %v3631 = vmul.f32 %v3536, %v3616
        %v3632 = vmul.f32 %v3541, %v3616
        %v3633 = vmul.f32 %v3544, %v3616
        %v3634 = vmul.f32 %v3549, %v3616
        %v3635 = vmul.f32 %v3552, %v3616
        %v3636 = vmul.f32 %v3557, %v3616
        %v3637 = vmul.f32 %v3560, %v3616
        %v3638 = vmul.f32 %v3565, %v3616
        %v3639 = vmul.f32 %v3568, %v3616
        %v3640 = vmul.f32 %v3573, %v3616
        %v3641 = vmul.f32 %v3576, %v3616
        %v3642 = vmul.f32 %v3581, %v3616
        %v3643 = vmul.f32 %v3584, %v3616
        %v3644 = vmul.f32 %v3589, %v3616
        %v3645 = vmul.f32 %v3592, %v3616
        %v3646 = vmul.f32 %v3597, %v3616
        %v3647 = vmul.f32 %v3600, %v3616
        %v3648 = vmul.f32 %v3605, %v3616
        %v3649 = vmul.f32 %v3608, %v3616
        %v3650 = vld [vmem:[%s254] sm:$0x1]
        %v3652 = vlaneseq
        %v3653 = vshrl.u32 %v3652, 7
        %v3654 = vsub.s32 0, %v3653
        %v3655 = vrot.slane %v3650, %v3654
        %v3657 = vadd.f32 %v3618, %v3655
        %v3658 = vadd.f32 %v3619, %v3655
        %v3659 = vadd.f32 %v3620, %v3655
        %v3660 = vadd.f32 %v3621, %v3655
        %v3661 = vadd.f32 %v3622, %v3655
        %v3662 = vadd.f32 %v3623, %v3655
        %v3663 = vadd.f32 %v3624, %v3655
        %v3664 = vadd.f32 %v3625, %v3655
        %v3665 = vadd.f32 %v3626, %v3655
        %v3666 = vadd.f32 %v3627, %v3655
        %v3667 = vadd.f32 %v3628, %v3655
        %v3668 = vadd.f32 %v3629, %v3655
        %v3669 = vadd.f32 %v3630, %v3655
        %v3670 = vadd.f32 %v3631, %v3655
        %v3671 = vadd.f32 %v3632, %v3655
        %v3672 = vadd.f32 %v3633, %v3655
        %v3673 = vadd.f32 %v3634, %v3655
        %v3674 = vadd.f32 %v3635, %v3655
        %v3675 = vadd.f32 %v3636, %v3655
        %v3676 = vadd.f32 %v3637, %v3655
        %v3677 = vadd.f32 %v3638, %v3655
        %v3678 = vadd.f32 %v3639, %v3655
        %v3679 = vadd.f32 %v3640, %v3655
        %v3680 = vadd.f32 %v3641, %v3655
        %v3681 = vadd.f32 %v3642, %v3655
        %v3682 = vadd.f32 %v3643, %v3655
        %v3683 = vadd.f32 %v3644, %v3655
        %v3684 = vadd.f32 %v3645, %v3655
        %v3685 = vadd.f32 %v3646, %v3655
        %v3686 = vadd.f32 %v3647, %v3655
        %v3687 = vadd.f32 %v3648, %v3655
        %v3688 = vadd.f32 %v3649, %v3655
        %v3689 = vmax.f32 %v3657, 0.0
        %v3690 = vmax.f32 %v3658, 0.0
        %v3691 = vmax.f32 %v3659, 0.0
        %v3692 = vmax.f32 %v3660, 0.0
        %v3693 = vmax.f32 %v3661, 0.0
        %v3694 = vmax.f32 %v3662, 0.0
        %v3695 = vmax.f32 %v3663, 0.0
        %v3696 = vmax.f32 %v3664, 0.0
        %v3697 = vmax.f32 %v3665, 0.0
        %v3698 = vmax.f32 %v3666, 0.0
        %v3699 = vmax.f32 %v3667, 0.0
        %v3700 = vmax.f32 %v3668, 0.0
        %v3701 = vmax.f32 %v3669, 0.0
        %v3702 = vmax.f32 %v3670, 0.0
        %v3703 = vmax.f32 %v3671, 0.0
        %v3704 = vmax.f32 %v3672, 0.0
        %v3705 = vmax.f32 %v3673, 0.0
        %v3706 = vmax.f32 %v3674, 0.0
        %v3707 = vmax.f32 %v3675, 0.0
        %v3708 = vmax.f32 %v3676, 0.0
        %v3709 = vmax.f32 %v3677, 0.0
        %v3710 = vmax.f32 %v3678, 0.0
        %v3711 = vmax.f32 %v3679, 0.0
        %v3712 = vmax.f32 %v3680, 0.0
        %v3713 = vmax.f32 %v3681, 0.0
        %v3714 = vmax.f32 %v3682, 0.0
        %v3715 = vmax.f32 %v3683, 0.0
        %v3716 = vmax.f32 %v3684, 0.0
        %v3717 = vmax.f32 %v3685, 0.0
        %v3718 = vmax.f32 %v3686, 0.0
        %v3719 = vmax.f32 %v3687, 0.0
        %v3720 = vmax.f32 %v3688, 0.0
        %v3721 = vpack.c.bf16 %v3690, %v3689
        %v3722 = vpack.c.bf16 %v3692, %v3691
        %v3723 = vpack.c.bf16 %v3694, %v3693
        %v3724 = vpack.c.bf16 %v3696, %v3695
        %v3725 = vpack.c.bf16 %v3698, %v3697
        %v3726 = vpack.c.bf16 %v3700, %v3699
        %v3727 = vpack.c.bf16 %v3702, %v3701
        %v3728 = vpack.c.bf16 %v3704, %v3703
        %v3729 = vpack.c.bf16 %v3706, %v3705
        %v3730 = vpack.c.bf16 %v3708, %v3707
        %v3731 = vpack.c.bf16 %v3710, %v3709
        %v3732 = vpack.c.bf16 %v3712, %v3711
        %v3733 = vpack.c.bf16 %v3714, %v3713
        %v3734 = vpack.c.bf16 %v3716, %v3715
        %v3735 = vpack.c.bf16 %v3718, %v3717
        %v3736 = vpack.c.bf16 %v3720, %v3719
        %v3753 = vunpack.c.l.b16 %v3721
        %v3754 = vunpack.c.h.b16 %v3721
        %v3755 = vunpack.c.l.b16 %v3722
        %v3756 = vunpack.c.h.b16 %v3722
        %v3757 = vunpack.c.l.b16 %v3723
        %v3758 = vunpack.c.h.b16 %v3723
        %v3759 = vunpack.c.l.b16 %v3724
        %v3760 = vunpack.c.h.b16 %v3724
        %v3761 = vunpack.c.l.b16 %v3725
        %v3762 = vunpack.c.h.b16 %v3725
        %v3763 = vunpack.c.l.b16 %v3726
        %v3764 = vunpack.c.h.b16 %v3726
        %v3765 = vunpack.c.l.b16 %v3727
        %v3766 = vunpack.c.h.b16 %v3727
        %v3767 = vunpack.c.l.b16 %v3728
        %v3768 = vunpack.c.h.b16 %v3728
        %v3769 = vunpack.c.l.b16 %v3729
        %v3770 = vunpack.c.h.b16 %v3729
        %v3771 = vunpack.c.l.b16 %v3730
        %v3772 = vunpack.c.h.b16 %v3730
        %v3773 = vunpack.c.l.b16 %v3731
        %v3774 = vunpack.c.h.b16 %v3731
        %v3775 = vunpack.c.l.b16 %v3732
        %v3776 = vunpack.c.h.b16 %v3732
        %v3777 = vunpack.c.l.b16 %v3733
        %v3778 = vunpack.c.h.b16 %v3733
        %v3779 = vunpack.c.l.b16 %v3734
        %v3780 = vunpack.c.h.b16 %v3734
        %v3781 = vunpack.c.l.b16 %v3735
        %v3782 = vunpack.c.h.b16 %v3735
        %v3783 = vunpack.c.l.b16 %v3736
        %v3784 = vunpack.c.h.b16 %v3736
        %v3785 = vpack.c.b16 %v3753, %v3753
        %v3786 = vpack.c.b16 %v3754, %v3754
        %v3787 = vpack.c.b16 %v3755, %v3755
        %v3788 = vpack.c.b16 %v3756, %v3756
        %v3789 = vpack.c.b16 %v3757, %v3757
        %v3790 = vpack.c.b16 %v3758, %v3758
        %v3791 = vpack.c.b16 %v3759, %v3759
        %v3792 = vpack.c.b16 %v3760, %v3760
        %v3793 = vpack.c.b16 %v3761, %v3761
        %v3794 = vpack.c.b16 %v3762, %v3762
        %v3795 = vpack.c.b16 %v3763, %v3763
        %v3796 = vpack.c.b16 %v3764, %v3764
        %v3797 = vpack.c.b16 %v3765, %v3765
        %v3798 = vpack.c.b16 %v3766, %v3766
        %v3799 = vpack.c.b16 %v3767, %v3767
        %v3800 = vpack.c.b16 %v3768, %v3768
        %v3801 = vpack.c.b16 %v3769, %v3769
        %v3802 = vpack.c.b16 %v3770, %v3770
        %v3803 = vpack.c.b16 %v3771, %v3771
        %v3804 = vpack.c.b16 %v3772, %v3772
        %v3805 = vpack.c.b16 %v3773, %v3773
        %v3806 = vpack.c.b16 %v3774, %v3774
        %v3807 = vpack.c.b16 %v3775, %v3775
        %v3808 = vpack.c.b16 %v3776, %v3776
        %v3809 = vpack.c.b16 %v3777, %v3777
        %v3810 = vpack.c.b16 %v3778, %v3778
        %v3811 = vpack.c.b16 %v3779, %v3779
        %v3812 = vpack.c.b16 %v3780, %v3780
        %v3813 = vpack.c.b16 %v3781, %v3781
        %v3814 = vpack.c.b16 %v3782, %v3782
        %v3815 = vpack.c.b16 %v3783, %v3783
        %v3816 = vpack.c.b16 %v3784, %v3784
        %3849 = vst [vmem:[%s239] sm:$0xf] %v3785
        %3850 = vst [vmem:[%s239 + $0x4] sm:$0xf] %v3786
        %3851 = vst [vmem:[%s239 + $0x8] sm:$0xf] %v3787
        %3852 = vst [vmem:[%s239 + $0xc] sm:$0xf] %v3788
        %3853 = vst [vmem:[%s239 + $0x10] sm:$0xf] %v3789
        %3854 = vst [vmem:[%s239 + $0x14] sm:$0xf] %v3790
        %3855 = vst [vmem:[%s239 + $0x18] sm:$0xf] %v3791
        %3856 = vst [vmem:[%s239 + $0x1c] sm:$0xf] %v3792
        %3857 = vst [vmem:[%s239 + $0x20] sm:$0xf] %v3793
        %3858 = vst [vmem:[%s239 + $0x24] sm:$0xf] %v3794
        %3859 = vst [vmem:[%s239 + $0x28] sm:$0xf] %v3795
        %3860 = vst [vmem:[%s239 + $0x2c] sm:$0xf] %v3796
        %3861 = vst [vmem:[%s239 + $0x30] sm:$0xf] %v3797
        %3862 = vst [vmem:[%s239 + $0x34] sm:$0xf] %v3798
        %3863 = vst [vmem:[%s239 + $0x38] sm:$0xf] %v3799
        %3864 = vst [vmem:[%s239 + $0x3c] sm:$0xf] %v3800
        %3865 = vst [vmem:[%s239 + $0x40] sm:$0xf] %v3801
        %3866 = vst [vmem:[%s239 + $0x44] sm:$0xf] %v3802
        %3867 = vst [vmem:[%s239 + $0x48] sm:$0xf] %v3803
        %3868 = vst [vmem:[%s239 + $0x4c] sm:$0xf] %v3804
        %3869 = vst [vmem:[%s239 + $0x50] sm:$0xf] %v3805
        %3870 = vst [vmem:[%s239 + $0x54] sm:$0xf] %v3806
        %3871 = vst [vmem:[%s239 + $0x58] sm:$0xf] %v3807
        %3872 = vst [vmem:[%s239 + $0x5c] sm:$0xf] %v3808
        %3873 = vst [vmem:[%s239 + $0x60] sm:$0xf] %v3809
        %3874 = vst [vmem:[%s239 + $0x64] sm:$0xf] %v3810
        %3875 = vst [vmem:[%s239 + $0x68] sm:$0xf] %v3811
        %3876 = vst [vmem:[%s239 + $0x6c] sm:$0xf] %v3812
        %3877 = vst [vmem:[%s239 + $0x70] sm:$0xf] %v3813
        %3878 = vst [vmem:[%s239 + $0x74] sm:$0xf] %v3814
        %3879 = vst [vmem:[%s239 + $0x78] sm:$0xf] %v3815
        %3880 = vst [vmem:[%s239 + $0x7c] sm:$0xf] %v3816
        %s3881 = sand.u32 %s144, 1
        %s3882 = scalar_lea.sflag [#allocation4], %s3881
        %s3883 = sand.u32 %s144, 1
        %s3884 = smul.addr %s3883, 128
        %s3885 = scalar_lea.vmem [#allocation3], %s3884
        // Predicated region
        $region37: #{tpu_custom_call.1} parent=35 // pred_check
          %p3886 = pneg %p154
        $region38: #{tpu_custom_call.1} parent=35 // pred_check_branch
          %3888 = sbr.rel (%p3886) target = $region40
        $region39: #{tpu_custom_call.1} parent=35 // pred_region
          %s3890 = ssub.s32 2048, 2048
          %3891 = vsyncadd %s3882, %s3890
          %s3892 = smul.addr %s23, 32
          %s3893 = sadd.s32 %s22, %s3892
          %s3894 = smul.addr %s3893, 64
          %s3895 = scalar_lea.hbm %s4, %s3894
          %s3896 = sshll.u32 %s3885, 4
          %s3897 = int_to_ptr.vmem [resolvable:$true] %s3896
          %3902 = dma.vmem_to_hbm [thread:$0]  %s3897, 2048, %s3895, %s3882, 64, 64, 4
        $region40: #{tpu_custom_call.1} parent=35 // pred_fallthru
          _
      $region36: #{tpu_custom_call.1} parent=5 // pred_fallthru
        _
      %p3903 = scmp.le.s32.totalorder 2, %s13
      // Predicated region
      $region41: #{tpu_custom_call.1} parent=5 // pred_check
        %p3904 = pneg %p3903
      $region42: #{tpu_custom_call.1} parent=5 // pred_check_branch
        %3906 = sbr.rel (%p3904) target = $region44
      $region43: #{tpu_custom_call.1} parent=5 // pred_region
        %s3907 = ssub.s32 %s13, 2
        // Predicated region
        $region45: #{tpu_custom_call.1} parent=43 // pred_check
          %p3908 = pneg %p160
        $region46: #{tpu_custom_call.1} parent=43 // pred_check_branch
          %3910 = sbr.rel (%p3908) target = $region48
        $region47: #{tpu_custom_call.1} parent=43 // pred_region
          %s3911 = sand.u32 %s145, 1
          %s3912 = scalar_lea.sflag [#allocation4], %s3911
          %s3913 = sand.u32 %s145, 1
          %s3914 = smul.addr %s3913, 128
          %s3915 = scalar_lea.vmem [#allocation3], %s3914
          %3916 = dma.done %s3912, 2048
        $region48: #{tpu_custom_call.1} parent=43 // pred_fallthru
          _
      $region44: #{tpu_custom_call.1} parent=5 // pred_fallthru
        _
    $region6: #{tpu_custom_call.1} parent=1 // loop_footer
      %s17 = sadd.s32 1, %s13
    $region7: #{tpu_custom_call.1} parent=1 // loop_footer_branch
      %12 = sbr.rel target = $region3
    $region8: #{tpu_custom_call.1} parent=1 // loop_exit
      _
    %3917 = vsyncpa [#allocation4], 1
    %s3918 = scalar_lea.sflag [#allocation4], 1
    %3919 = vsyncpa %s3918, 1

</llo_original>
